<compile_context>
chip_gen: v7x
topology: tpu7x:2x2x1
jax: 0.10.0
libtpu: 0.0.40
codegen_flags: <defaults>
</compile_context>

<pallas_src>
import functools

import jax
import jax.numpy as jnp
from jax import lax
from jax.experimental import pallas as pl
from jax.experimental.pallas import tpu as pltpu

_LANE = 128
_SUBLANE = 8


# ---------------------------------------------------------------------------
# Fused Pallas kernel (all layers + FC head)
# ---------------------------------------------------------------------------
def _make_fused_lstm_kernel(num_layers, T, Bt, D, Hp, t_chunk, compute_dtype):
    """kernel(x, (wih, whh, b) * num_layers, wfc, bfc, out, seq_scratch)

    x:           (T, Bt, D)     time-major input block (batch padded to sublane multiple)
    wih:         (Din, 4Hp)     W_ih^T, gates (i, f, o, g), hidden padded to lane multiple
    whh:         (Hp, 4Hp)      W_hh^T, same layout
    b:           (1, 4Hp)       b_ih + b_hh (f32)
    wfc:         (1, Hp)        fc weight row (f32, zero-padded)
    bfc:         (1, 1)         fc bias (f32)
    out:         (Bt, 1)
    seq_scratch: (T, Bt, Hp)    VMEM scratch carrying the inter-layer sequence
    """

    def kernel(*refs):
        x_ref = refs[0]
        layer_refs = [refs[1 + 3 * l: 1 + 3 * (l + 1)] for l in range(num_layers)]
        wfc_ref = refs[1 + 3 * num_layers]
        bfc_ref = refs[2 + 3 * num_layers]
        out_ref = refs[3 + 3 * num_layers]
        seq_scratch = refs[4 + 3 * num_layers]

        h = jnp.zeros((Bt, Hp), jnp.float32)
        for l in range(num_layers):
            wih_ref, whh_ref, b_ref = layer_refs[l]
            wih = wih_ref[...]                     # (Din, 4Hp) load once per layer
            whh = whh_ref[...]                     # (Hp, 4Hp)
            bias = b_ref[...]                      # (1, 4Hp) f32
            din = wih.shape[0]

            h = jnp.zeros((Bt, Hp), jnp.float32)   # recurrent state lives in vregs (f32)
            c = jnp.zeros((Bt, Hp), jnp.float32)

            # T-chunked hoisted input projection: one big MXU matmul per chunk, bounding the
            # VMEM footprint of gx while keeping the recurrent chain to h @ W_hh^T per step.
            for t0 in range(0, T, t_chunk):
                tc = min(t_chunk, T - t0)
                if l == 0:
                    seq_blk = x_ref[pl.ds(t0, tc)]          # (tc, Bt, D)
                else:
                    seq_blk = seq_scratch[pl.ds(t0, tc)]    # (tc, Bt, Hp)
                seq_2d = seq_blk.reshape(tc * Bt, din).astype(compute_dtype)
                gx = jnp.dot(seq_2d, wih, preferred_element_type=jnp.float32) + bias
                gx = gx.reshape(tc, Bt, 4 * Hp)             # leading-axis per-step index

                for tt in range(tc):
                    gates = gx[tt] + jnp.dot(
                        h.astype(compute_dtype), whh,
                        preferred_element_type=jnp.float32)             # (Bt, 4Hp) f32
                    # Gate order (i, f, o, g); every slice is lane-tile aligned (Hp % 128 == 0).
                    sig = jax.nn.sigmoid(gates[:, : 3 * Hp])            # i, f, o in one pass
                    g_g = jnp.tanh(gates[:, 3 * Hp:])                   # g
                    i_g = sig[:, :Hp]
                    f_g = sig[:, Hp: 2 * Hp]
                    o_g = sig[:, 2 * Hp:]
                    c = f_g * c + i_g * g_g
                    h = o_g * jnp.tanh(c)
                    if l < num_layers - 1:
                        # One store per step; inter-layer sequence never leaves VMEM.
                        seq_scratch[t0 + tt] = h.astype(compute_dtype)

        # Linear(hidden -> 1) on the last layer's final hidden state: VPU multiply +
        # lane reduce (no 1-column MXU matmul at the kernel tail).
        out_ref[...] = jnp.sum(h * wfc_ref[...], axis=-1, keepdims=True) + bfc_ref[...]

    return kernel


# ---------------------------------------------------------------------------
# One-time parameter preprocessing (outside the forward path)
# ---------------------------------------------------------------------------
def prepare_params(lstm_params, w_fc, b_fc, *, compute_dtype=jnp.float32):
    """Transpose, fuse biases, reorder gates (i,f,g,o)->(i,f,o,g), and zero-pad the hidden
    dimension of every gate to a multiple of 128 lanes so in-kernel gate slices are free."""
    H = lstm_params[0][1].shape[1]
    Hp = ((H + _LANE - 1) // _LANE) * _LANE

    def reorder_pad_gates(w):
        wi, wf, wg, wo = jnp.split(w, 4, axis=0)
        pad = [(0, Hp - H)] + [(0, 0)] * (w.ndim - 1)
        return jnp.concatenate([jnp.pad(g, pad) for g in (wi, wf, wo, wg)], axis=0)

    prepped = []
    for l, (w_ih, w_hh, b_ih, b_hh) in enumerate(lstm_params):
        w_ih_r = reorder_pad_gates(w_ih)                     # (4Hp, Din)
        if l > 0:  # input of layers >=1 is the Hp-padded hidden state
            w_ih_r = jnp.pad(w_ih_r, ((0, 0), (0, Hp - H)))  # (4Hp, Hp)
        w_hh_r = jnp.pad(reorder_pad_gates(w_hh), ((0, 0), (0, Hp - H)))   # (4Hp, Hp)
        b_r = reorder_pad_gates(b_ih + b_hh)                 # (4Hp,)
        prepped.append((
            jnp.transpose(w_ih_r).astype(compute_dtype),     # (Din, 4Hp)
            jnp.transpose(w_hh_r).astype(compute_dtype),     # (Hp, 4Hp)
            b_r[None, :].astype(jnp.float32),                # (1, 4Hp)
        ))

    wfc_row = jnp.pad(w_fc, ((0, 0), (0, Hp - H))).astype(jnp.float32)     # (1, Hp)
    bfc = b_fc.reshape(1, 1).astype(jnp.float32)                            # (1, 1)
    return prepped, wfc_row, bfc


# ---------------------------------------------------------------------------
# Forward wrapper
# ---------------------------------------------------------------------------
def lstm_forward(x, prepped_lstm, wfc_row, bfc, *, t_chunk=32):
    """x: (B, T, D) batch_first, same semantics as the PyTorch module. Returns (B, 1)."""
    B, T, D = x.shape
    Hp = prepped_lstm[0][1].shape[0]
    num_layers = len(prepped_lstm)
    compute_dtype = prepped_lstm[0][0].dtype

    # Pad batch to a sublane multiple; time-major layout (cheap XLA transpose outside kernel).
    Bp = ((B + _SUBLANE - 1) // _SUBLANE) * _SUBLANE
    if Bp != B:
        x = jnp.pad(x, ((0, Bp - B), (0, 0), (0, 0)))
    x_tm = jnp.transpose(x, (1, 0, 2)).astype(compute_dtype)   # (T, Bp, D)

    # Parallel batch grid axis (fills v7x's 2nd TensorCore when the padded batch splits).
    nb = 2 if (Bp >= 2 * _SUBLANE and (Bp // 2) % _SUBLANE == 0) else 1
    Bt = Bp // nb
    tc = max(1, min(t_chunk, T))

    flat_w = []
    for (wih, whh, b) in prepped_lstm:
        flat_w += [wih, whh, b]

    def _full(arr):  # full-array block, same tile for every grid point
        return pl.BlockSpec(arr.shape, lambda bb, _nd=arr.ndim: (0,) * _nd)

    in_specs = [pl.BlockSpec((T, Bt, D), lambda bb: (0, bb, 0))]
    for w in flat_w:
        in_specs.append(_full(w))
    in_specs += [_full(wfc_row), _full(bfc)]
    out_specs = pl.BlockSpec((Bt, 1), lambda bb: (bb, 0))

    # Explicit VMEM budget (default scoped limit is 16 MiB on v5e / 32 MiB on v6e-v7x).
    isz = jnp.dtype(compute_dtype).itemsize
    est = (T * Bt * D * isz                                   # x block
           + T * Bt * Hp * isz                                # inter-layer scratch
           + 2 * tc * Bt * 4 * Hp * 4                         # gx chunk + f32 temporaries
           + sum(w.size * w.dtype.itemsize for w in flat_w)
           + Hp * 4 + 4)
    vmem_limit = int(min(128 * 1024 * 1024, max(32 * 1024 * 1024, 2 * est)))

    kernel = _make_fused_lstm_kernel(num_layers, T, Bt, D, Hp, tc, compute_dtype)
    out = pl.pallas_call(
        kernel,
        out_shape=jax.ShapeDtypeStruct((Bp, 1), jnp.float32),
        grid_spec=pltpu.PrefetchScalarGridSpec(
            num_scalar_prefetch=0,
            grid=(nb,),
            in_specs=in_specs,
            out_specs=out_specs,
            scratch_shapes=[pltpu.VMEM((T, Bt, Hp), compute_dtype)],
        ),
        compiler_params=pltpu.CompilerParams(
            dimension_semantics=("parallel",),
            vmem_limit_bytes=vmem_limit),
    )(x_tm, *flat_w, wfc_row, bfc)
    return out[:B]


# ---------------------------------------------------------------------------
# Pure-JAX reference (uses the raw PyTorch-layout weights)
# ---------------------------------------------------------------------------
def lstm_forward_ref(x, lstm_params, w_fc, b_fc):
    B = x.shape[0]
    seq = jnp.transpose(x, (1, 0, 2))   # (T, B, D)
    h_last = None
    for (w_ih, w_hh, b_ih, b_hh) in lstm_params:
        H = w_hh.shape[1]

        def step(carry, x_t, w_ih=w_ih, w_hh=w_hh, b=b_ih + b_hh):
            h, c = carry
            gates = x_t @ w_ih.T + h @ w_hh.T + b
            i, f, g, o = jnp.split(gates, 4, axis=-1)
            c = jax.nn.sigmoid(f) * c + jax.nn.sigmoid(i) * jnp.tanh(g)
            h = jax.nn.sigmoid(o) * jnp.tanh(c)
            return (h, c), h

        (h_last, _), seq = lax.scan(
            step, (jnp.zeros((B, H)), jnp.zeros((B, H))), seq)
    return h_last @ w_fc.T + b_fc


# ---------------------------------------------------------------------------
# Main
# ---------------------------------------------------------------------------
if __name__ == "__main__":
    B, T, INPUT_SIZE, HIDDEN_SIZE, NUM_LAYERS = 4, 8, 16, 32, 2

    key = jax.random.PRNGKey(0)
    keys = jax.random.split(key, 1 + 4 * NUM_LAYERS + 2)

    x = jax.random.normal(keys[0], (B, T, INPUT_SIZE), dtype=jnp.float32)

    # PyTorch nn.LSTM / nn.Linear default init: U(-1/sqrt(H), 1/sqrt(H)).
    bound = 1.0 / float(jnp.sqrt(HIDDEN_SIZE))
    lstm_params = []
    idx = 1
    for layer in range(NUM_LAYERS):
        in_dim = INPUT_SIZE if layer == 0 else HIDDEN_SIZE
        w_ih = jax.random.uniform(keys[idx], (4 * HIDDEN_SIZE, in_dim),
                                  minval=-bound, maxval=bound, dtype=jnp.float32); idx += 1
        w_hh = jax.random.uniform(keys[idx], (4 * HIDDEN_SIZE, HIDDEN_SIZE),
                                  minval=-bound, maxval=bound, dtype=jnp.float32); idx += 1
        b_ih = jax.random.uniform(keys[idx], (4 * HIDDEN_SIZE,),
                                  minval=-bound, maxval=bound, dtype=jnp.float32); idx += 1
        b_hh = jax.random.uniform(keys[idx], (4 * HIDDEN_SIZE,),
                                  minval=-bound, maxval=bound, dtype=jnp.float32); idx += 1
        lstm_params.append((w_ih, w_hh, b_ih, b_hh))

    w_fc = jax.random.uniform(keys[idx], (1, HIDDEN_SIZE),
                              minval=-bound, maxval=bound, dtype=jnp.float32); idx += 1
    b_fc = jax.random.uniform(keys[idx], (1,),
                              minval=-bound, maxval=bound, dtype=jnp.float32)

    ref = lstm_forward_ref(x, lstm_params, w_fc, b_fc)
    fwd = jax.jit(lstm_forward)

    # f32 storage path (bit-for-bit comparable to the reference).
    prepped32, wfc32, bfc32 = prepare_params(lstm_params, w_fc, b_fc,
                                             compute_dtype=jnp.float32)
    out32 = jax.block_until_ready(fwd(x, prepped32, wfc32, bfc32))
    assert out32.shape == (B, 1), out32.shape
    assert jnp.allclose(out32, ref, atol=1e-4, rtol=1e-4), (out32, ref)

    # bf16 storage path (MXU-native on v6e/v7x; f32 accumulation, c and nonlinearities in f32).
    prepped16, wfc16, bfc16 = prepare_params(lstm_params, w_fc, b_fc,
                                             compute_dtype=jnp.bfloat16)
    out16 = jax.block_until_ready(fwd(x, prepped16, wfc16, bfc16))
    assert out16.shape == (B, 1), out16.shape
    assert jnp.allclose(out16, ref, atol=5e-2, rtol=5e-2), (out16, ref)

    print("KERNEL_OK")
</pallas_src>

<mosaic_0001>
module attributes {stable_mosaic.version = 11 : i64} {
  func.func @kernel(%arg0: i32, %arg1: memref<8x8x16xf32, #tpu.memory_space<vmem>>, %arg2: memref<16x512xf32, #tpu.memory_space<vmem>>, %arg3: memref<128x512xf32, #tpu.memory_space<vmem>>, %arg4: memref<1x512xf32, #tpu.memory_space<vmem>>, %arg5: memref<128x512xf32, #tpu.memory_space<vmem>>, %arg6: memref<128x512xf32, #tpu.memory_space<vmem>>, %arg7: memref<1x512xf32, #tpu.memory_space<vmem>>, %arg8: memref<1x128xf32, #tpu.memory_space<vmem>>, %arg9: memref<1x1xf32, #tpu.memory_space<vmem>>, %arg10: memref<8x1xf32, #tpu.memory_space<vmem>>, %arg11: memref<8x8x128xf32, #tpu.memory_space<vmem>>) attributes {dimension_semantics = [#tpu.dimension_semantics<parallel>], iteration_bounds = array<i64: 1>, scalar_prefetch = 0 : i64, scratch_operands = 1 : i64, tpu.core_type = #tpu.core_type<tc>, window_params = [{transform_indices = @transform_0, window_bounds = array<i64: 8, 8, 16>}, {pipeline_mode = #tpu.pipeline_mode<synchronous>, transform_indices = @transform_1, window_bounds = array<i64: 16, 512>}, {pipeline_mode = #tpu.pipeline_mode<synchronous>, transform_indices = @transform_2, window_bounds = array<i64: 128, 512>}, {pipeline_mode = #tpu.pipeline_mode<synchronous>, transform_indices = @transform_3, window_bounds = array<i64: 1, 512>}, {pipeline_mode = #tpu.pipeline_mode<synchronous>, transform_indices = @transform_4, window_bounds = array<i64: 128, 512>}, {pipeline_mode = #tpu.pipeline_mode<synchronous>, transform_indices = @transform_5, window_bounds = array<i64: 128, 512>}, {pipeline_mode = #tpu.pipeline_mode<synchronous>, transform_indices = @transform_6, window_bounds = array<i64: 1, 512>}, {pipeline_mode = #tpu.pipeline_mode<synchronous>, transform_indices = @transform_7, window_bounds = array<i64: 1, 128>}, {pipeline_mode = #tpu.pipeline_mode<synchronous>, transform_indices = @transform_8, window_bounds = array<i64: 1, 1>}, {transform_indices = @transform_9, window_bounds = array<i64: 8, 1>}]} {
    %c0 = arith.constant 0 : index
    %c0_0 = arith.constant 0 : index
    %0 = vector.load %arg2[%c0, %c0_0] : memref<16x512xf32, #tpu.memory_space<vmem>>, vector<16x512xf32>
    %c0_1 = arith.constant 0 : index
    %c0_2 = arith.constant 0 : index
    %1 = vector.load %arg3[%c0_1, %c0_2] : memref<128x512xf32, #tpu.memory_space<vmem>>, vector<128x512xf32>
    %c0_3 = arith.constant 0 : index
    %c0_4 = arith.constant 0 : index
    %2 = vector.load %arg4[%c0_3, %c0_4] : memref<1x512xf32, #tpu.memory_space<vmem>>, vector<1x512xf32>
    %cst = arith.constant 0.000000e+00 : f32
    %3 = vector.broadcast %cst : f32 to vector<8x128xf32>
    %cst_5 = arith.constant 0.000000e+00 : f32
    %4 = vector.broadcast %cst_5 : f32 to vector<8x128xf32>
    %c0_6 = arith.constant 0 : index
    %c0_7 = arith.constant 0 : index
    %c0_8 = arith.constant 0 : index
    %5 = vector.load %arg1[%c0_6, %c0_7, %c0_8] : memref<8x8x16xf32, #tpu.memory_space<vmem>>, vector<8x8x16xf32>
    %6 = vector.shape_cast %5 : vector<8x8x16xf32> to vector<64x16xf32>
    %cst_9 = arith.constant dense<0.000000e+00> : vector<64x512xf32>
    %7 = tpu.matmul %6, %0, %cst_9 {dimension_numbers = #tpu.dot_dimension_numbers<[1], [0], [0], [1], [0, 0, 1, 1], [], []>} : vector<64x16xf32>, vector<16x512xf32>, vector<64x512xf32> -> vector<64x512xf32>
    %8 = vector.broadcast %2 : vector<1x512xf32> to vector<64x512xf32>
    %9 = arith.addf %7, %8 : vector<64x512xf32>
    %10 = vector.shape_cast %9 : vector<64x512xf32> to vector<8x8x512xf32>
    %11 = vector.extract_strided_slice %10 {offsets = [0, 0, 0], sizes = [1, 8, 512], strides = [1, 1, 1]} : vector<8x8x512xf32> to vector<1x8x512xf32>
    %12 = vector.shape_cast %11 : vector<1x8x512xf32> to vector<8x512xf32>
    %cst_10 = arith.constant dense<0.000000e+00> : vector<8x512xf32>
    %13 = tpu.matmul %3, %1, %cst_10 {dimension_numbers = #tpu.dot_dimension_numbers<[1], [0], [0], [1], [0, 0, 1, 1], [], []>} : vector<8x128xf32>, vector<128x512xf32>, vector<8x512xf32> -> vector<8x512xf32>
    %14 = arith.addf %12, %13 : vector<8x512xf32>
    %15 = vector.extract_strided_slice %14 {offsets = [0, 0], sizes = [8, 384], strides = [1, 1]} : vector<8x512xf32> to vector<8x384xf32>
    %16 = arith.negf %15 : vector<8x384xf32>
    %17 = math.exp %16 : vector<8x384xf32>
    %cst_11 = arith.constant 1.000000e+00 : f32
    %18 = vector.broadcast %cst_11 : f32 to vector<8x384xf32>
    %19 = arith.addf %18, %17 : vector<8x384xf32>
    %20 = arith.divf %18, %19 : vector<8x384xf32>
    %21 = vector.extract_strided_slice %14 {offsets = [0, 384], sizes = [8, 128], strides = [1, 1]} : vector<8x512xf32> to vector<8x128xf32>
    %22 = math.tanh %21 : vector<8x128xf32>
    %23 = vector.extract_strided_slice %20 {offsets = [0, 0], sizes = [8, 128], strides = [1, 1]} : vector<8x384xf32> to vector<8x128xf32>
    %24 = vector.extract_strided_slice %20 {offsets = [0, 128], sizes = [8, 128], strides = [1, 1]} : vector<8x384xf32> to vector<8x128xf32>
    %25 = vector.extract_strided_slice %20 {offsets = [0, 256], sizes = [8, 128], strides = [1, 1]} : vector<8x384xf32> to vector<8x128xf32>
    %26 = arith.mulf %24, %4 : vector<8x128xf32>
    %27 = arith.mulf %23, %22 : vector<8x128xf32>
    %28 = arith.addf %26, %27 : vector<8x128xf32>
    %29 = math.tanh %28 : vector<8x128xf32>
    %30 = arith.mulf %25, %29 : vector<8x128xf32>
    %c0_12 = arith.constant 0 : index
    %c0_13 = arith.constant 0 : index
    %c0_14 = arith.constant 0 : index
    %31 = vector.load %arg11[%c0_12, %c0_13, %c0_14] : memref<8x8x128xf32, #tpu.memory_space<vmem>>, vector<1x8x128xf32>
    %32 = vector.shape_cast %31 : vector<1x8x128xf32> to vector<8x128xf32>
    %33 = vector.shape_cast %30 : vector<8x128xf32> to vector<1x8x128xf32>
    tpu.vector_store %arg11[%c0_12, %c0_13, %c0_14], %33 {strides = array<i32>} : memref<8x8x128xf32, #tpu.memory_space<vmem>>, vector<1x8x128xf32>,
    %34 = vector.extract_strided_slice %10 {offsets = [1, 0, 0], sizes = [1, 8, 512], strides = [1, 1, 1]} : vector<8x8x512xf32> to vector<1x8x512xf32>
    %35 = vector.shape_cast %34 : vector<1x8x512xf32> to vector<8x512xf32>
    %cst_15 = arith.constant dense<0.000000e+00> : vector<8x512xf32>
    %36 = tpu.matmul %30, %1, %cst_15 {dimension_numbers = #tpu.dot_dimension_numbers<[1], [0], [0], [1], [0, 0, 1, 1], [], []>} : vector<8x128xf32>, vector<128x512xf32>, vector<8x512xf32> -> vector<8x512xf32>
    %37 = arith.addf %35, %36 : vector<8x512xf32>
    %38 = vector.extract_strided_slice %37 {offsets = [0, 0], sizes = [8, 384], strides = [1, 1]} : vector<8x512xf32> to vector<8x384xf32>
    %39 = arith.negf %38 : vector<8x384xf32>
    %40 = math.exp %39 : vector<8x384xf32>
    %cst_16 = arith.constant 1.000000e+00 : f32
    %41 = vector.broadcast %cst_16 : f32 to vector<8x384xf32>
    %42 = arith.addf %41, %40 : vector<8x384xf32>
    %43 = arith.divf %41, %42 : vector<8x384xf32>
    %44 = vector.extract_strided_slice %37 {offsets = [0, 384], sizes = [8, 128], strides = [1, 1]} : vector<8x512xf32> to vector<8x128xf32>
    %45 = math.tanh %44 : vector<8x128xf32>
    %46 = vector.extract_strided_slice %43 {offsets = [0, 0], sizes = [8, 128], strides = [1, 1]} : vector<8x384xf32> to vector<8x128xf32>
    %47 = vector.extract_strided_slice %43 {offsets = [0, 128], sizes = [8, 128], strides = [1, 1]} : vector<8x384xf32> to vector<8x128xf32>
    %48 = vector.extract_strided_slice %43 {offsets = [0, 256], sizes = [8, 128], strides = [1, 1]} : vector<8x384xf32> to vector<8x128xf32>
    %49 = arith.mulf %47, %28 : vector<8x128xf32>
    %50 = arith.mulf %46, %45 : vector<8x128xf32>
    %51 = arith.addf %49, %50 : vector<8x128xf32>
    %52 = math.tanh %51 : vector<8x128xf32>
    %53 = arith.mulf %48, %52 : vector<8x128xf32>
    %c1 = arith.constant 1 : index
    %c0_17 = arith.constant 0 : index
    %c0_18 = arith.constant 0 : index
    %54 = vector.load %arg11[%c1, %c0_17, %c0_18] : memref<8x8x128xf32, #tpu.memory_space<vmem>>, vector<1x8x128xf32>
    %55 = vector.shape_cast %54 : vector<1x8x128xf32> to vector<8x128xf32>
    %56 = vector.shape_cast %53 : vector<8x128xf32> to vector<1x8x128xf32>
    tpu.vector_store %arg11[%c1, %c0_17, %c0_18], %56 {strides = array<i32>} : memref<8x8x128xf32, #tpu.memory_space<vmem>>, vector<1x8x128xf32>,
    %57 = vector.extract_strided_slice %10 {offsets = [2, 0, 0], sizes = [1, 8, 512], strides = [1, 1, 1]} : vector<8x8x512xf32> to vector<1x8x512xf32>
    %58 = vector.shape_cast %57 : vector<1x8x512xf32> to vector<8x512xf32>
    %cst_19 = arith.constant dense<0.000000e+00> : vector<8x512xf32>
    %59 = tpu.matmul %53, %1, %cst_19 {dimension_numbers = #tpu.dot_dimension_numbers<[1], [0], [0], [1], [0, 0, 1, 1], [], []>} : vector<8x128xf32>, vector<128x512xf32>, vector<8x512xf32> -> vector<8x512xf32>
    %60 = arith.addf %58, %59 : vector<8x512xf32>
    %61 = vector.extract_strided_slice %60 {offsets = [0, 0], sizes = [8, 384], strides = [1, 1]} : vector<8x512xf32> to vector<8x384xf32>
    %62 = arith.negf %61 : vector<8x384xf32>
    %63 = math.exp %62 : vector<8x384xf32>
    %cst_20 = arith.constant 1.000000e+00 : f32
    %64 = vector.broadcast %cst_20 : f32 to vector<8x384xf32>
    %65 = arith.addf %64, %63 : vector<8x384xf32>
    %66 = arith.divf %64, %65 : vector<8x384xf32>
    %67 = vector.extract_strided_slice %60 {offsets = [0, 384], sizes = [8, 128], strides = [1, 1]} : vector<8x512xf32> to vector<8x128xf32>
    %68 = math.tanh %67 : vector<8x128xf32>
    %69 = vector.extract_strided_slice %66 {offsets = [0, 0], sizes = [8, 128], strides = [1, 1]} : vector<8x384xf32> to vector<8x128xf32>
    %70 = vector.extract_strided_slice %66 {offsets = [0, 128], sizes = [8, 128], strides = [1, 1]} : vector<8x384xf32> to vector<8x128xf32>
    %71 = vector.extract_strided_slice %66 {offsets = [0, 256], sizes = [8, 128], strides = [1, 1]} : vector<8x384xf32> to vector<8x128xf32>
    %72 = arith.mulf %70, %51 : vector<8x128xf32>
    %73 = arith.mulf %69, %68 : vector<8x128xf32>
    %74 = arith.addf %72, %73 : vector<8x128xf32>
    %75 = math.tanh %74 : vector<8x128xf32>
    %76 = arith.mulf %71, %75 : vector<8x128xf32>
    %c2 = arith.constant 2 : index
    %c0_21 = arith.constant 0 : index
    %c0_22 = arith.constant 0 : index
    %77 = vector.load %arg11[%c2, %c0_21, %c0_22] : memref<8x8x128xf32, #tpu.memory_space<vmem>>, vector<1x8x128xf32>
    %78 = vector.shape_cast %77 : vector<1x8x128xf32> to vector<8x128xf32>
    %79 = vector.shape_cast %76 : vector<8x128xf32> to vector<1x8x128xf32>
    tpu.vector_store %arg11[%c2, %c0_21, %c0_22], %79 {strides = array<i32>} : memref<8x8x128xf32, #tpu.memory_space<vmem>>, vector<1x8x128xf32>,
    %80 = vector.extract_strided_slice %10 {offsets = [3, 0, 0], sizes = [1, 8, 512], strides = [1, 1, 1]} : vector<8x8x512xf32> to vector<1x8x512xf32>
    %81 = vector.shape_cast %80 : vector<1x8x512xf32> to vector<8x512xf32>
    %cst_23 = arith.constant dense<0.000000e+00> : vector<8x512xf32>
    %82 = tpu.matmul %76, %1, %cst_23 {dimension_numbers = #tpu.dot_dimension_numbers<[1], [0], [0], [1], [0, 0, 1, 1], [], []>} : vector<8x128xf32>, vector<128x512xf32>, vector<8x512xf32> -> vector<8x512xf32>
    %83 = arith.addf %81, %82 : vector<8x512xf32>
    %84 = vector.extract_strided_slice %83 {offsets = [0, 0], sizes = [8, 384], strides = [1, 1]} : vector<8x512xf32> to vector<8x384xf32>
    %85 = arith.negf %84 : vector<8x384xf32>
    %86 = math.exp %85 : vector<8x384xf32>
    %cst_24 = arith.constant 1.000000e+00 : f32
    %87 = vector.broadcast %cst_24 : f32 to vector<8x384xf32>
    %88 = arith.addf %87, %86 : vector<8x384xf32>
    %89 = arith.divf %87, %88 : vector<8x384xf32>
    %90 = vector.extract_strided_slice %83 {offsets = [0, 384], sizes = [8, 128], strides = [1, 1]} : vector<8x512xf32> to vector<8x128xf32>
    %91 = math.tanh %90 : vector<8x128xf32>
    %92 = vector.extract_strided_slice %89 {offsets = [0, 0], sizes = [8, 128], strides = [1, 1]} : vector<8x384xf32> to vector<8x128xf32>
    %93 = vector.extract_strided_slice %89 {offsets = [0, 128], sizes = [8, 128], strides = [1, 1]} : vector<8x384xf32> to vector<8x128xf32>
    %94 = vector.extract_strided_slice %89 {offsets = [0, 256], sizes = [8, 128], strides = [1, 1]} : vector<8x384xf32> to vector<8x128xf32>
    %95 = arith.mulf %93, %74 : vector<8x128xf32>
    %96 = arith.mulf %92, %91 : vector<8x128xf32>
    %97 = arith.addf %95, %96 : vector<8x128xf32>
    %98 = math.tanh %97 : vector<8x128xf32>
    %99 = arith.mulf %94, %98 : vector<8x128xf32>
    %c3 = arith.constant 3 : index
    %c0_25 = arith.constant 0 : index
    %c0_26 = arith.constant 0 : index
    %100 = vector.load %arg11[%c3, %c0_25, %c0_26] : memref<8x8x128xf32, #tpu.memory_space<vmem>>, vector<1x8x128xf32>
    %101 = vector.shape_cast %100 : vector<1x8x128xf32> to vector<8x128xf32>
    %102 = vector.shape_cast %99 : vector<8x128xf32> to vector<1x8x128xf32>
    tpu.vector_store %arg11[%c3, %c0_25, %c0_26], %102 {strides = array<i32>} : memref<8x8x128xf32, #tpu.memory_space<vmem>>, vector<1x8x128xf32>,
    %103 = vector.extract_strided_slice %10 {offsets = [4, 0, 0], sizes = [1, 8, 512], strides = [1, 1, 1]} : vector<8x8x512xf32> to vector<1x8x512xf32>
    %104 = vector.shape_cast %103 : vector<1x8x512xf32> to vector<8x512xf32>
    %cst_27 = arith.constant dense<0.000000e+00> : vector<8x512xf32>
    %105 = tpu.matmul %99, %1, %cst_27 {dimension_numbers = #tpu.dot_dimension_numbers<[1], [0], [0], [1], [0, 0, 1, 1], [], []>} : vector<8x128xf32>, vector<128x512xf32>, vector<8x512xf32> -> vector<8x512xf32>
    %106 = arith.addf %104, %105 : vector<8x512xf32>
    %107 = vector.extract_strided_slice %106 {offsets = [0, 0], sizes = [8, 384], strides = [1, 1]} : vector<8x512xf32> to vector<8x384xf32>
    %108 = arith.negf %107 : vector<8x384xf32>
    %109 = math.exp %108 : vector<8x384xf32>
    %cst_28 = arith.constant 1.000000e+00 : f32
    %110 = vector.broadcast %cst_28 : f32 to vector<8x384xf32>
    %111 = arith.addf %110, %109 : vector<8x384xf32>
    %112 = arith.divf %110, %111 : vector<8x384xf32>
    %113 = vector.extract_strided_slice %106 {offsets = [0, 384], sizes = [8, 128], strides = [1, 1]} : vector<8x512xf32> to vector<8x128xf32>
    %114 = math.tanh %113 : vector<8x128xf32>
    %115 = vector.extract_strided_slice %112 {offsets = [0, 0], sizes = [8, 128], strides = [1, 1]} : vector<8x384xf32> to vector<8x128xf32>
    %116 = vector.extract_strided_slice %112 {offsets = [0, 128], sizes = [8, 128], strides = [1, 1]} : vector<8x384xf32> to vector<8x128xf32>
    %117 = vector.extract_strided_slice %112 {offsets = [0, 256], sizes = [8, 128], strides = [1, 1]} : vector<8x384xf32> to vector<8x128xf32>
    %118 = arith.mulf %116, %97 : vector<8x128xf32>
    %119 = arith.mulf %115, %114 : vector<8x128xf32>
    %120 = arith.addf %118, %119 : vector<8x128xf32>
    %121 = math.tanh %120 : vector<8x128xf32>
    %122 = arith.mulf %117, %121 : vector<8x128xf32>
    %c4 = arith.constant 4 : index
    %c0_29 = arith.constant 0 : index
    %c0_30 = arith.constant 0 : index
    %123 = vector.load %arg11[%c4, %c0_29, %c0_30] : memref<8x8x128xf32, #tpu.memory_space<vmem>>, vector<1x8x128xf32>
    %124 = vector.shape_cast %123 : vector<1x8x128xf32> to vector<8x128xf32>
    %125 = vector.shape_cast %122 : vector<8x128xf32> to vector<1x8x128xf32>
    tpu.vector_store %arg11[%c4, %c0_29, %c0_30], %125 {strides = array<i32>} : memref<8x8x128xf32, #tpu.memory_space<vmem>>, vector<1x8x128xf32>,
    %126 = vector.extract_strided_slice %10 {offsets = [5, 0, 0], sizes = [1, 8, 512], strides = [1, 1, 1]} : vector<8x8x512xf32> to vector<1x8x512xf32>
    %127 = vector.shape_cast %126 : vector<1x8x512xf32> to vector<8x512xf32>
    %cst_31 = arith.constant dense<0.000000e+00> : vector<8x512xf32>
    %128 = tpu.matmul %122, %1, %cst_31 {dimension_numbers = #tpu.dot_dimension_numbers<[1], [0], [0], [1], [0, 0, 1, 1], [], []>} : vector<8x128xf32>, vector<128x512xf32>, vector<8x512xf32> -> vector<8x512xf32>
    %129 = arith.addf %127, %128 : vector<8x512xf32>
    %130 = vector.extract_strided_slice %129 {offsets = [0, 0], sizes = [8, 384], strides = [1, 1]} : vector<8x512xf32> to vector<8x384xf32>
    %131 = arith.negf %130 : vector<8x384xf32>
    %132 = math.exp %131 : vector<8x384xf32>
    %cst_32 = arith.constant 1.000000e+00 : f32
    %133 = vector.broadcast %cst_32 : f32 to vector<8x384xf32>
    %134 = arith.addf %133, %132 : vector<8x384xf32>
    %135 = arith.divf %133, %134 : vector<8x384xf32>
    %136 = vector.extract_strided_slice %129 {offsets = [0, 384], sizes = [8, 128], strides = [1, 1]} : vector<8x512xf32> to vector<8x128xf32>
    %137 = math.tanh %136 : vector<8x128xf32>
    %138 = vector.extract_strided_slice %135 {offsets = [0, 0], sizes = [8, 128], strides = [1, 1]} : vector<8x384xf32> to vector<8x128xf32>
    %139 = vector.extract_strided_slice %135 {offsets = [0, 128], sizes = [8, 128], strides = [1, 1]} : vector<8x384xf32> to vector<8x128xf32>
    %140 = vector.extract_strided_slice %135 {offsets = [0, 256], sizes = [8, 128], strides = [1, 1]} : vector<8x384xf32> to vector<8x128xf32>
    %141 = arith.mulf %139, %120 : vector<8x128xf32>
    %142 = arith.mulf %138, %137 : vector<8x128xf32>
    %143 = arith.addf %141, %142 : vector<8x128xf32>
    %144 = math.tanh %143 : vector<8x128xf32>
    %145 = arith.mulf %140, %144 : vector<8x128xf32>
    %c5 = arith.constant 5 : index
    %c0_33 = arith.constant 0 : index
    %c0_34 = arith.constant 0 : index
    %146 = vector.load %arg11[%c5, %c0_33, %c0_34] : memref<8x8x128xf32, #tpu.memory_space<vmem>>, vector<1x8x128xf32>
    %147 = vector.shape_cast %146 : vector<1x8x128xf32> to vector<8x128xf32>
    %148 = vector.shape_cast %145 : vector<8x128xf32> to vector<1x8x128xf32>
    tpu.vector_store %arg11[%c5, %c0_33, %c0_34], %148 {strides = array<i32>} : memref<8x8x128xf32, #tpu.memory_space<vmem>>, vector<1x8x128xf32>,
    %149 = vector.extract_strided_slice %10 {offsets = [6, 0, 0], sizes = [1, 8, 512], strides = [1, 1, 1]} : vector<8x8x512xf32> to vector<1x8x512xf32>
    %150 = vector.shape_cast %149 : vector<1x8x512xf32> to vector<8x512xf32>
    %cst_35 = arith.constant dense<0.000000e+00> : vector<8x512xf32>
    %151 = tpu.matmul %145, %1, %cst_35 {dimension_numbers = #tpu.dot_dimension_numbers<[1], [0], [0], [1], [0, 0, 1, 1], [], []>} : vector<8x128xf32>, vector<128x512xf32>, vector<8x512xf32> -> vector<8x512xf32>
    %152 = arith.addf %150, %151 : vector<8x512xf32>
    %153 = vector.extract_strided_slice %152 {offsets = [0, 0], sizes = [8, 384], strides = [1, 1]} : vector<8x512xf32> to vector<8x384xf32>
    %154 = arith.negf %153 : vector<8x384xf32>
    %155 = math.exp %154 : vector<8x384xf32>
    %cst_36 = arith.constant 1.000000e+00 : f32
    %156 = vector.broadcast %cst_36 : f32 to vector<8x384xf32>
    %157 = arith.addf %156, %155 : vector<8x384xf32>
    %158 = arith.divf %156, %157 : vector<8x384xf32>
    %159 = vector.extract_strided_slice %152 {offsets = [0, 384], sizes = [8, 128], strides = [1, 1]} : vector<8x512xf32> to vector<8x128xf32>
    %160 = math.tanh %159 : vector<8x128xf32>
    %161 = vector.extract_strided_slice %158 {offsets = [0, 0], sizes = [8, 128], strides = [1, 1]} : vector<8x384xf32> to vector<8x128xf32>
    %162 = vector.extract_strided_slice %158 {offsets = [0, 128], sizes = [8, 128], strides = [1, 1]} : vector<8x384xf32> to vector<8x128xf32>
    %163 = vector.extract_strided_slice %158 {offsets = [0, 256], sizes = [8, 128], strides = [1, 1]} : vector<8x384xf32> to vector<8x128xf32>
    %164 = arith.mulf %162, %143 : vector<8x128xf32>
    %165 = arith.mulf %161, %160 : vector<8x128xf32>
    %166 = arith.addf %164, %165 : vector<8x128xf32>
    %167 = math.tanh %166 : vector<8x128xf32>
    %168 = arith.mulf %163, %167 : vector<8x128xf32>
    %c6 = arith.constant 6 : index
    %c0_37 = arith.constant 0 : index
    %c0_38 = arith.constant 0 : index
    %169 = vector.load %arg11[%c6, %c0_37, %c0_38] : memref<8x8x128xf32, #tpu.memory_space<vmem>>, vector<1x8x128xf32>
    %170 = vector.shape_cast %169 : vector<1x8x128xf32> to vector<8x128xf32>
    %171 = vector.shape_cast %168 : vector<8x128xf32> to vector<1x8x128xf32>
    tpu.vector_store %arg11[%c6, %c0_37, %c0_38], %171 {strides = array<i32>} : memref<8x8x128xf32, #tpu.memory_space<vmem>>, vector<1x8x128xf32>,
    %172 = vector.extract_strided_slice %10 {offsets = [7, 0, 0], sizes = [1, 8, 512], strides = [1, 1, 1]} : vector<8x8x512xf32> to vector<1x8x512xf32>
    %173 = vector.shape_cast %172 : vector<1x8x512xf32> to vector<8x512xf32>
    %cst_39 = arith.constant dense<0.000000e+00> : vector<8x512xf32>
    %174 = tpu.matmul %168, %1, %cst_39 {dimension_numbers = #tpu.dot_dimension_numbers<[1], [0], [0], [1], [0, 0, 1, 1], [], []>} : vector<8x128xf32>, vector<128x512xf32>, vector<8x512xf32> -> vector<8x512xf32>
    %175 = arith.addf %173, %174 : vector<8x512xf32>
    %176 = vector.extract_strided_slice %175 {offsets = [0, 0], sizes = [8, 384], strides = [1, 1]} : vector<8x512xf32> to vector<8x384xf32>
    %177 = arith.negf %176 : vector<8x384xf32>
    %178 = math.exp %177 : vector<8x384xf32>
    %cst_40 = arith.constant 1.000000e+00 : f32
    %179 = vector.broadcast %cst_40 : f32 to vector<8x384xf32>
    %180 = arith.addf %179, %178 : vector<8x384xf32>
    %181 = arith.divf %179, %180 : vector<8x384xf32>
    %182 = vector.extract_strided_slice %175 {offsets = [0, 384], sizes = [8, 128], strides = [1, 1]} : vector<8x512xf32> to vector<8x128xf32>
    %183 = math.tanh %182 : vector<8x128xf32>
    %184 = vector.extract_strided_slice %181 {offsets = [0, 0], sizes = [8, 128], strides = [1, 1]} : vector<8x384xf32> to vector<8x128xf32>
    %185 = vector.extract_strided_slice %181 {offsets = [0, 128], sizes = [8, 128], strides = [1, 1]} : vector<8x384xf32> to vector<8x128xf32>
    %186 = vector.extract_strided_slice %181 {offsets = [0, 256], sizes = [8, 128], strides = [1, 1]} : vector<8x384xf32> to vector<8x128xf32>
    %187 = arith.mulf %185, %166 : vector<8x128xf32>
    %188 = arith.mulf %184, %183 : vector<8x128xf32>
    %189 = arith.addf %187, %188 : vector<8x128xf32>
    %190 = math.tanh %189 : vector<8x128xf32>
    %191 = arith.mulf %186, %190 : vector<8x128xf32>
    %c7 = arith.constant 7 : index
    %c0_41 = arith.constant 0 : index
    %c0_42 = arith.constant 0 : index
    %192 = vector.load %arg11[%c7, %c0_41, %c0_42] : memref<8x8x128xf32, #tpu.memory_space<vmem>>, vector<1x8x128xf32>
    %193 = vector.shape_cast %192 : vector<1x8x128xf32> to vector<8x128xf32>
    %194 = vector.shape_cast %191 : vector<8x128xf32> to vector<1x8x128xf32>
    tpu.vector_store %arg11[%c7, %c0_41, %c0_42], %194 {strides = array<i32>} : memref<8x8x128xf32, #tpu.memory_space<vmem>>, vector<1x8x128xf32>,
    %c0_43 = arith.constant 0 : index
    %c0_44 = arith.constant 0 : index
    %195 = vector.load %arg5[%c0_43, %c0_44] : memref<128x512xf32, #tpu.memory_space<vmem>>, vector<128x512xf32>
    %c0_45 = arith.constant 0 : index
    %c0_46 = arith.constant 0 : index
    %196 = vector.load %arg6[%c0_45, %c0_46] : memref<128x512xf32, #tpu.memory_space<vmem>>, vector<128x512xf32>
    %c0_47 = arith.constant 0 : index
    %c0_48 = arith.constant 0 : index
    %197 = vector.load %arg7[%c0_47, %c0_48] : memref<1x512xf32, #tpu.memory_space<vmem>>, vector<1x512xf32>
    %cst_49 = arith.constant 0.000000e+00 : f32
    %198 = vector.broadcast %cst_49 : f32 to vector<8x128xf32>
    %cst_50 = arith.constant 0.000000e+00 : f32
    %199 = vector.broadcast %cst_50 : f32 to vector<8x128xf32>
    %c0_51 = arith.constant 0 : index
    %c0_52 = arith.constant 0 : index
    %c0_53 = arith.constant 0 : index
    %200 = vector.load %arg11[%c0_51, %c0_52, %c0_53] : memref<8x8x128xf32, #tpu.memory_space<vmem>>, vector<8x8x128xf32>
    %201 = vector.shape_cast %200 : vector<8x8x128xf32> to vector<64x128xf32>
    %cst_54 = arith.constant dense<0.000000e+00> : vector<64x512xf32>
    %202 = tpu.matmul %201, %195, %cst_54 {dimension_numbers = #tpu.dot_dimension_numbers<[1], [0], [0], [1], [0, 0, 1, 1], [], []>} : vector<64x128xf32>, vector<128x512xf32>, vector<64x512xf32> -> vector<64x512xf32>
    %203 = vector.broadcast %197 : vector<1x512xf32> to vector<64x512xf32>
    %204 = arith.addf %202, %203 : vector<64x512xf32>
    %205 = vector.shape_cast %204 : vector<64x512xf32> to vector<8x8x512xf32>
    %206 = vector.extract_strided_slice %205 {offsets = [0, 0, 0], sizes = [1, 8, 512], strides = [1, 1, 1]} : vector<8x8x512xf32> to vector<1x8x512xf32>
    %207 = vector.shape_cast %206 : vector<1x8x512xf32> to vector<8x512xf32>
    %cst_55 = arith.constant dense<0.000000e+00> : vector<8x512xf32>
    %208 = tpu.matmul %198, %196, %cst_55 {dimension_numbers = #tpu.dot_dimension_numbers<[1], [0], [0], [1], [0, 0, 1, 1], [], []>} : vector<8x128xf32>, vector<128x512xf32>, vector<8x512xf32> -> vector<8x512xf32>
    %209 = arith.addf %207, %208 : vector<8x512xf32>
    %210 = vector.extract_strided_slice %209 {offsets = [0, 0], sizes = [8, 384], strides = [1, 1]} : vector<8x512xf32> to vector<8x384xf32>
    %211 = arith.negf %210 : vector<8x384xf32>
    %212 = math.exp %211 : vector<8x384xf32>
    %cst_56 = arith.constant 1.000000e+00 : f32
    %213 = vector.broadcast %cst_56 : f32 to vector<8x384xf32>
    %214 = arith.addf %213, %212 : vector<8x384xf32>
    %215 = arith.divf %213, %214 : vector<8x384xf32>
    %216 = vector.extract_strided_slice %209 {offsets = [0, 384], sizes = [8, 128], strides = [1, 1]} : vector<8x512xf32> to vector<8x128xf32>
    %217 = math.tanh %216 : vector<8x128xf32>
    %218 = vector.extract_strided_slice %215 {offsets = [0, 0], sizes = [8, 128], strides = [1, 1]} : vector<8x384xf32> to vector<8x128xf32>
    %219 = vector.extract_strided_slice %215 {offsets = [0, 128], sizes = [8, 128], strides = [1, 1]} : vector<8x384xf32> to vector<8x128xf32>
    %220 = vector.extract_strided_slice %215 {offsets = [0, 256], sizes = [8, 128], strides = [1, 1]} : vector<8x384xf32> to vector<8x128xf32>
    %221 = arith.mulf %219, %199 : vector<8x128xf32>
    %222 = arith.mulf %218, %217 : vector<8x128xf32>
    %223 = arith.addf %221, %222 : vector<8x128xf32>
    %224 = math.tanh %223 : vector<8x128xf32>
    %225 = arith.mulf %220, %224 : vector<8x128xf32>
    %226 = vector.extract_strided_slice %205 {offsets = [1, 0, 0], sizes = [1, 8, 512], strides = [1, 1, 1]} : vector<8x8x512xf32> to vector<1x8x512xf32>
    %227 = vector.shape_cast %226 : vector<1x8x512xf32> to vector<8x512xf32>
    %cst_57 = arith.constant dense<0.000000e+00> : vector<8x512xf32>
    %228 = tpu.matmul %225, %196, %cst_57 {dimension_numbers = #tpu.dot_dimension_numbers<[1], [0], [0], [1], [0, 0, 1, 1], [], []>} : vector<8x128xf32>, vector<128x512xf32>, vector<8x512xf32> -> vector<8x512xf32>
    %229 = arith.addf %227, %228 : vector<8x512xf32>
    %230 = vector.extract_strided_slice %229 {offsets = [0, 0], sizes = [8, 384], strides = [1, 1]} : vector<8x512xf32> to vector<8x384xf32>
    %231 = arith.negf %230 : vector<8x384xf32>
    %232 = math.exp %231 : vector<8x384xf32>
    %cst_58 = arith.constant 1.000000e+00 : f32
    %233 = vector.broadcast %cst_58 : f32 to vector<8x384xf32>
    %234 = arith.addf %233, %232 : vector<8x384xf32>
    %235 = arith.divf %233, %234 : vector<8x384xf32>
    %236 = vector.extract_strided_slice %229 {offsets = [0, 384], sizes = [8, 128], strides = [1, 1]} : vector<8x512xf32> to vector<8x128xf32>
    %237 = math.tanh %236 : vector<8x128xf32>
    %238 = vector.extract_strided_slice %235 {offsets = [0, 0], sizes = [8, 128], strides = [1, 1]} : vector<8x384xf32> to vector<8x128xf32>
    %239 = vector.extract_strided_slice %235 {offsets = [0, 128], sizes = [8, 128], strides = [1, 1]} : vector<8x384xf32> to vector<8x128xf32>
    %240 = vector.extract_strided_slice %235 {offsets = [0, 256], sizes = [8, 128], strides = [1, 1]} : vector<8x384xf32> to vector<8x128xf32>
    %241 = arith.mulf %239, %223 : vector<8x128xf32>
    %242 = arith.mulf %238, %237 : vector<8x128xf32>
    %243 = arith.addf %241, %242 : vector<8x128xf32>
    %244 = math.tanh %243 : vector<8x128xf32>
    %245 = arith.mulf %240, %244 : vector<8x128xf32>
    %246 = vector.extract_strided_slice %205 {offsets = [2, 0, 0], sizes = [1, 8, 512], strides = [1, 1, 1]} : vector<8x8x512xf32> to vector<1x8x512xf32>
    %247 = vector.shape_cast %246 : vector<1x8x512xf32> to vector<8x512xf32>
    %cst_59 = arith.constant dense<0.000000e+00> : vector<8x512xf32>
    %248 = tpu.matmul %245, %196, %cst_59 {dimension_numbers = #tpu.dot_dimension_numbers<[1], [0], [0], [1], [0, 0, 1, 1], [], []>} : vector<8x128xf32>, vector<128x512xf32>, vector<8x512xf32> -> vector<8x512xf32>
    %249 = arith.addf %247, %248 : vector<8x512xf32>
    %250 = vector.extract_strided_slice %249 {offsets = [0, 0], sizes = [8, 384], strides = [1, 1]} : vector<8x512xf32> to vector<8x384xf32>
    %251 = arith.negf %250 : vector<8x384xf32>
    %252 = math.exp %251 : vector<8x384xf32>
    %cst_60 = arith.constant 1.000000e+00 : f32
    %253 = vector.broadcast %cst_60 : f32 to vector<8x384xf32>
    %254 = arith.addf %253, %252 : vector<8x384xf32>
    %255 = arith.divf %253, %254 : vector<8x384xf32>
    %256 = vector.extract_strided_slice %249 {offsets = [0, 384], sizes = [8, 128], strides = [1, 1]} : vector<8x512xf32> to vector<8x128xf32>
    %257 = math.tanh %256 : vector<8x128xf32>
    %258 = vector.extract_strided_slice %255 {offsets = [0, 0], sizes = [8, 128], strides = [1, 1]} : vector<8x384xf32> to vector<8x128xf32>
    %259 = vector.extract_strided_slice %255 {offsets = [0, 128], sizes = [8, 128], strides = [1, 1]} : vector<8x384xf32> to vector<8x128xf32>
    %260 = vector.extract_strided_slice %255 {offsets = [0, 256], sizes = [8, 128], strides = [1, 1]} : vector<8x384xf32> to vector<8x128xf32>
    %261 = arith.mulf %259, %243 : vector<8x128xf32>
    %262 = arith.mulf %258, %257 : vector<8x128xf32>
    %263 = arith.addf %261, %262 : vector<8x128xf32>
    %264 = math.tanh %263 : vector<8x128xf32>
    %265 = arith.mulf %260, %264 : vector<8x128xf32>
    %266 = vector.extract_strided_slice %205 {offsets = [3, 0, 0], sizes = [1, 8, 512], strides = [1, 1, 1]} : vector<8x8x512xf32> to vector<1x8x512xf32>
    %267 = vector.shape_cast %266 : vector<1x8x512xf32> to vector<8x512xf32>
    %cst_61 = arith.constant dense<0.000000e+00> : vector<8x512xf32>
    %268 = tpu.matmul %265, %196, %cst_61 {dimension_numbers = #tpu.dot_dimension_numbers<[1], [0], [0], [1], [0, 0, 1, 1], [], []>} : vector<8x128xf32>, vector<128x512xf32>, vector<8x512xf32> -> vector<8x512xf32>
    %269 = arith.addf %267, %268 : vector<8x512xf32>
    %270 = vector.extract_strided_slice %269 {offsets = [0, 0], sizes = [8, 384], strides = [1, 1]} : vector<8x512xf32> to vector<8x384xf32>
    %271 = arith.negf %270 : vector<8x384xf32>
    %272 = math.exp %271 : vector<8x384xf32>
    %cst_62 = arith.constant 1.000000e+00 : f32
    %273 = vector.broadcast %cst_62 : f32 to vector<8x384xf32>
    %274 = arith.addf %273, %272 : vector<8x384xf32>
    %275 = arith.divf %273, %274 : vector<8x384xf32>
    %276 = vector.extract_strided_slice %269 {offsets = [0, 384], sizes = [8, 128], strides = [1, 1]} : vector<8x512xf32> to vector<8x128xf32>
    %277 = math.tanh %276 : vector<8x128xf32>
    %278 = vector.extract_strided_slice %275 {offsets = [0, 0], sizes = [8, 128], strides = [1, 1]} : vector<8x384xf32> to vector<8x128xf32>
    %279 = vector.extract_strided_slice %275 {offsets = [0, 128], sizes = [8, 128], strides = [1, 1]} : vector<8x384xf32> to vector<8x128xf32>
    %280 = vector.extract_strided_slice %275 {offsets = [0, 256], sizes = [8, 128], strides = [1, 1]} : vector<8x384xf32> to vector<8x128xf32>
    %281 = arith.mulf %279, %263 : vector<8x128xf32>
    %282 = arith.mulf %278, %277 : vector<8x128xf32>
    %283 = arith.addf %281, %282 : vector<8x128xf32>
    %284 = math.tanh %283 : vector<8x128xf32>
    %285 = arith.mulf %280, %284 : vector<8x128xf32>
    %286 = vector.extract_strided_slice %205 {offsets = [4, 0, 0], sizes = [1, 8, 512], strides = [1, 1, 1]} : vector<8x8x512xf32> to vector<1x8x512xf32>
    %287 = vector.shape_cast %286 : vector<1x8x512xf32> to vector<8x512xf32>
    %cst_63 = arith.constant dense<0.000000e+00> : vector<8x512xf32>
    %288 = tpu.matmul %285, %196, %cst_63 {dimension_numbers = #tpu.dot_dimension_numbers<[1], [0], [0], [1], [0, 0, 1, 1], [], []>} : vector<8x128xf32>, vector<128x512xf32>, vector<8x512xf32> -> vector<8x512xf32>
    %289 = arith.addf %287, %288 : vector<8x512xf32>
    %290 = vector.extract_strided_slice %289 {offsets = [0, 0], sizes = [8, 384], strides = [1, 1]} : vector<8x512xf32> to vector<8x384xf32>
    %291 = arith.negf %290 : vector<8x384xf32>
    %292 = math.exp %291 : vector<8x384xf32>
    %cst_64 = arith.constant 1.000000e+00 : f32
    %293 = vector.broadcast %cst_64 : f32 to vector<8x384xf32>
    %294 = arith.addf %293, %292 : vector<8x384xf32>
    %295 = arith.divf %293, %294 : vector<8x384xf32>
    %296 = vector.extract_strided_slice %289 {offsets = [0, 384], sizes = [8, 128], strides = [1, 1]} : vector<8x512xf32> to vector<8x128xf32>
    %297 = math.tanh %296 : vector<8x128xf32>
    %298 = vector.extract_strided_slice %295 {offsets = [0, 0], sizes = [8, 128], strides = [1, 1]} : vector<8x384xf32> to vector<8x128xf32>
    %299 = vector.extract_strided_slice %295 {offsets = [0, 128], sizes = [8, 128], strides = [1, 1]} : vector<8x384xf32> to vector<8x128xf32>
    %300 = vector.extract_strided_slice %295 {offsets = [0, 256], sizes = [8, 128], strides = [1, 1]} : vector<8x384xf32> to vector<8x128xf32>
    %301 = arith.mulf %299, %283 : vector<8x128xf32>
    %302 = arith.mulf %298, %297 : vector<8x128xf32>
    %303 = arith.addf %301, %302 : vector<8x128xf32>
    %304 = math.tanh %303 : vector<8x128xf32>
    %305 = arith.mulf %300, %304 : vector<8x128xf32>
    %306 = vector.extract_strided_slice %205 {offsets = [5, 0, 0], sizes = [1, 8, 512], strides = [1, 1, 1]} : vector<8x8x512xf32> to vector<1x8x512xf32>
    %307 = vector.shape_cast %306 : vector<1x8x512xf32> to vector<8x512xf32>
    %cst_65 = arith.constant dense<0.000000e+00> : vector<8x512xf32>
    %308 = tpu.matmul %305, %196, %cst_65 {dimension_numbers = #tpu.dot_dimension_numbers<[1], [0], [0], [1], [0, 0, 1, 1], [], []>} : vector<8x128xf32>, vector<128x512xf32>, vector<8x512xf32> -> vector<8x512xf32>
    %309 = arith.addf %307, %308 : vector<8x512xf32>
    %310 = vector.extract_strided_slice %309 {offsets = [0, 0], sizes = [8, 384], strides = [1, 1]} : vector<8x512xf32> to vector<8x384xf32>
    %311 = arith.negf %310 : vector<8x384xf32>
    %312 = math.exp %311 : vector<8x384xf32>
    %cst_66 = arith.constant 1.000000e+00 : f32
    %313 = vector.broadcast %cst_66 : f32 to vector<8x384xf32>
    %314 = arith.addf %313, %312 : vector<8x384xf32>
    %315 = arith.divf %313, %314 : vector<8x384xf32>
    %316 = vector.extract_strided_slice %309 {offsets = [0, 384], sizes = [8, 128], strides = [1, 1]} : vector<8x512xf32> to vector<8x128xf32>
    %317 = math.tanh %316 : vector<8x128xf32>
    %318 = vector.extract_strided_slice %315 {offsets = [0, 0], sizes = [8, 128], strides = [1, 1]} : vector<8x384xf32> to vector<8x128xf32>
    %319 = vector.extract_strided_slice %315 {offsets = [0, 128], sizes = [8, 128], strides = [1, 1]} : vector<8x384xf32> to vector<8x128xf32>
    %320 = vector.extract_strided_slice %315 {offsets = [0, 256], sizes = [8, 128], strides = [1, 1]} : vector<8x384xf32> to vector<8x128xf32>
    %321 = arith.mulf %319, %303 : vector<8x128xf32>
    %322 = arith.mulf %318, %317 : vector<8x128xf32>
    %323 = arith.addf %321, %322 : vector<8x128xf32>
    %324 = math.tanh %323 : vector<8x128xf32>
    %325 = arith.mulf %320, %324 : vector<8x128xf32>
    %326 = vector.extract_strided_slice %205 {offsets = [6, 0, 0], sizes = [1, 8, 512], strides = [1, 1, 1]} : vector<8x8x512xf32> to vector<1x8x512xf32>
    %327 = vector.shape_cast %326 : vector<1x8x512xf32> to vector<8x512xf32>
    %cst_67 = arith.constant dense<0.000000e+00> : vector<8x512xf32>
    %328 = tpu.matmul %325, %196, %cst_67 {dimension_numbers = #tpu.dot_dimension_numbers<[1], [0], [0], [1], [0, 0, 1, 1], [], []>} : vector<8x128xf32>, vector<128x512xf32>, vector<8x512xf32> -> vector<8x512xf32>
    %329 = arith.addf %327, %328 : vector<8x512xf32>
    %330 = vector.extract_strided_slice %329 {offsets = [0, 0], sizes = [8, 384], strides = [1, 1]} : vector<8x512xf32> to vector<8x384xf32>
    %331 = arith.negf %330 : vector<8x384xf32>
    %332 = math.exp %331 : vector<8x384xf32>
    %cst_68 = arith.constant 1.000000e+00 : f32
    %333 = vector.broadcast %cst_68 : f32 to vector<8x384xf32>
    %334 = arith.addf %333, %332 : vector<8x384xf32>
    %335 = arith.divf %333, %334 : vector<8x384xf32>
    %336 = vector.extract_strided_slice %329 {offsets = [0, 384], sizes = [8, 128], strides = [1, 1]} : vector<8x512xf32> to vector<8x128xf32>
    %337 = math.tanh %336 : vector<8x128xf32>
    %338 = vector.extract_strided_slice %335 {offsets = [0, 0], sizes = [8, 128], strides = [1, 1]} : vector<8x384xf32> to vector<8x128xf32>
    %339 = vector.extract_strided_slice %335 {offsets = [0, 128], sizes = [8, 128], strides = [1, 1]} : vector<8x384xf32> to vector<8x128xf32>
    %340 = vector.extract_strided_slice %335 {offsets = [0, 256], sizes = [8, 128], strides = [1, 1]} : vector<8x384xf32> to vector<8x128xf32>
    %341 = arith.mulf %339, %323 : vector<8x128xf32>
    %342 = arith.mulf %338, %337 : vector<8x128xf32>
    %343 = arith.addf %341, %342 : vector<8x128xf32>
    %344 = math.tanh %343 : vector<8x128xf32>
    %345 = arith.mulf %340, %344 : vector<8x128xf32>
    %346 = vector.extract_strided_slice %205 {offsets = [7, 0, 0], sizes = [1, 8, 512], strides = [1, 1, 1]} : vector<8x8x512xf32> to vector<1x8x512xf32>
    %347 = vector.shape_cast %346 : vector<1x8x512xf32> to vector<8x512xf32>
    %cst_69 = arith.constant dense<0.000000e+00> : vector<8x512xf32>
    %348 = tpu.matmul %345, %196, %cst_69 {dimension_numbers = #tpu.dot_dimension_numbers<[1], [0], [0], [1], [0, 0, 1, 1], [], []>} : vector<8x128xf32>, vector<128x512xf32>, vector<8x512xf32> -> vector<8x512xf32>
    %349 = arith.addf %347, %348 : vector<8x512xf32>
    %350 = vector.extract_strided_slice %349 {offsets = [0, 0], sizes = [8, 384], strides = [1, 1]} : vector<8x512xf32> to vector<8x384xf32>
    %351 = arith.negf %350 : vector<8x384xf32>
    %352 = math.exp %351 : vector<8x384xf32>
    %cst_70 = arith.constant 1.000000e+00 : f32
    %353 = vector.broadcast %cst_70 : f32 to vector<8x384xf32>
    %354 = arith.addf %353, %352 : vector<8x384xf32>
    %355 = arith.divf %353, %354 : vector<8x384xf32>
    %356 = vector.extract_strided_slice %349 {offsets = [0, 384], sizes = [8, 128], strides = [1, 1]} : vector<8x512xf32> to vector<8x128xf32>
    %357 = math.tanh %356 : vector<8x128xf32>
    %358 = vector.extract_strided_slice %355 {offsets = [0, 0], sizes = [8, 128], strides = [1, 1]} : vector<8x384xf32> to vector<8x128xf32>
    %359 = vector.extract_strided_slice %355 {offsets = [0, 128], sizes = [8, 128], strides = [1, 1]} : vector<8x384xf32> to vector<8x128xf32>
    %360 = vector.extract_strided_slice %355 {offsets = [0, 256], sizes = [8, 128], strides = [1, 1]} : vector<8x384xf32> to vector<8x128xf32>
    %361 = arith.mulf %359, %343 : vector<8x128xf32>
    %362 = arith.mulf %358, %357 : vector<8x128xf32>
    %363 = arith.addf %361, %362 : vector<8x128xf32>
    %364 = math.tanh %363 : vector<8x128xf32>
    %365 = arith.mulf %360, %364 : vector<8x128xf32>
    %c0_71 = arith.constant 0 : index
    %c0_72 = arith.constant 0 : index
    %366 = vector.load %arg8[%c0_71, %c0_72] : memref<1x128xf32, #tpu.memory_space<vmem>>, vector<1x128xf32>
    %367 = vector.broadcast %366 : vector<1x128xf32> to vector<8x128xf32>
    %368 = arith.mulf %365, %367 : vector<8x128xf32>
    %cst_73 = arith.constant dense<0.000000e+00> : vector<8xf32>
    %369 = vector.multi_reduction <add>, %368, %cst_73 [1] : vector<8x128xf32> to vector<8xf32>
    %370 = vector.shape_cast %369 : vector<8xf32> to vector<8x1xf32>
    %c0_74 = arith.constant 0 : index
    %c0_75 = arith.constant 0 : index
    %371 = vector.load %arg9[%c0_74, %c0_75] : memref<1x1xf32, #tpu.memory_space<vmem>>, vector<1x1xf32>
    %372 = vector.broadcast %371 : vector<1x1xf32> to vector<8x1xf32>
    %373 = arith.addf %370, %372 : vector<8x1xf32>
    %c0_76 = arith.constant 0 : index
    %c0_77 = arith.constant 0 : index
    %374 = vector.load %arg10[%c0_76, %c0_77] : memref<8x1xf32, #tpu.memory_space<vmem>>, vector<8x1xf32>
    tpu.vector_store %arg10[%c0_76, %c0_77], %373 {strides = array<i32>} : memref<8x1xf32, #tpu.memory_space<vmem>>, vector<8x1xf32>,
    return
  }
  func.func @transform_0(%arg0: i32) -> (i32, i32, i32) {
    %c0_i32 = arith.constant 0 : i32
    %c0_i32_0 = arith.constant 0 : i32
    %c0_i32_1 = arith.constant 0 : i32
    return %c0_i32, %arg0, %c0_i32_0 : i32, i32, i32
  }
  func.func @transform_1(%arg0: i32) -> (i32, i32) {
    %c0_i32 = arith.constant 0 : i32
    %c0_i32_0 = arith.constant 0 : i32
    %c0_i32_1 = arith.constant 0 : i32
    return %c0_i32, %c0_i32_0 : i32, i32
  }
  func.func @transform_2(%arg0: i32) -> (i32, i32) {
    %c0_i32 = arith.constant 0 : i32
    %c0_i32_0 = arith.constant 0 : i32
    %c0_i32_1 = arith.constant 0 : i32
    return %c0_i32, %c0_i32_0 : i32, i32
  }
  func.func @transform_3(%arg0: i32) -> (i32, i32) {
    %c0_i32 = arith.constant 0 : i32
    %c0_i32_0 = arith.constant 0 : i32
    %c0_i32_1 = arith.constant 0 : i32
    return %c0_i32, %c0_i32_0 : i32, i32
  }
  func.func @transform_4(%arg0: i32) -> (i32, i32) {
    %c0_i32 = arith.constant 0 : i32
    %c0_i32_0 = arith.constant 0 : i32
    %c0_i32_1 = arith.constant 0 : i32
    return %c0_i32, %c0_i32_0 : i32, i32
  }
  func.func @transform_5(%arg0: i32) -> (i32, i32) {
    %c0_i32 = arith.constant 0 : i32
    %c0_i32_0 = arith.constant 0 : i32
    %c0_i32_1 = arith.constant 0 : i32
    return %c0_i32, %c0_i32_0 : i32, i32
  }
  func.func @transform_6(%arg0: i32) -> (i32, i32) {
    %c0_i32 = arith.constant 0 : i32
    %c0_i32_0 = arith.constant 0 : i32
    %c0_i32_1 = arith.constant 0 : i32
    return %c0_i32, %c0_i32_0 : i32, i32
  }
  func.func @transform_7(%arg0: i32) -> (i32, i32) {
    %c0_i32 = arith.constant 0 : i32
    %c0_i32_0 = arith.constant 0 : i32
    %c0_i32_1 = arith.constant 0 : i32
    return %c0_i32, %c0_i32_0 : i32, i32
  }
  func.func @transform_8(%arg0: i32) -> (i32, i32) {
    %c0_i32 = arith.constant 0 : i32
    %c0_i32_0 = arith.constant 0 : i32
    %c0_i32_1 = arith.constant 0 : i32
    return %c0_i32, %c0_i32_0 : i32, i32
  }
  func.func @transform_9(%arg0: i32) -> (i32, i32) {
    %c0_i32 = arith.constant 0 : i32
    %c0_i32_0 = arith.constant 0 : i32
    return %arg0, %c0_i32 : i32, i32
  }
}

</mosaic_0001>

<llo_original>
// kernel: lstm_forward.1
$region0: #{lstm_forward.1}
  #allocation0 [shape = 'u32[]', space=smem, size = 0x4, offset = 0x4, fixed_abs, tag = 'smem constant byte address 0x4 - core index']
  #allocation1 [shape = 'u32[144,128]{1,0:T(1,128)}', space=vmem, size = 0x12000, scoped, tag = 'internal scratch']
  #allocation2 [shape = 'f32[8,8,128]{2,1,0:T(8,128)}', space=vmem, size = 0x8000, scoped, tag = 'scratch operand']
  #allocation3 [shape = 'f32[1,1]{1,0:T(1,128)S(1)}', space=vmem, size = 0x200, scoped, tag = 'scoped memory for lstm_forward.1']
  %s0 = inlined_call_operand.vmem [shape: f32[8,8,16], index: 0, kind: input, shape index: {}]
  %s1 = inlined_call_operand.vmem [shape: f32[16,512], index: 1, kind: input, shape index: {}]
  %s2 = inlined_call_operand.hbm [shape: f32[128,512], index: 2, kind: input, shape index: {}]
  %s3 = inlined_call_operand.vmem [shape: f32[1,512], index: 3, kind: input, shape index: {}]
  %s4 = inlined_call_operand.hbm [shape: f32[128,512], index: 4, kind: input, shape index: {}]
  %s5 = inlined_call_operand.hbm [shape: f32[128,512], index: 5, kind: input, shape index: {}]
  %s6 = inlined_call_operand.vmem [shape: f32[1,512], index: 6, kind: input, shape index: {}]
  %s7 = inlined_call_operand.vmem [shape: f32[1,128], index: 7, kind: input, shape index: {}]
  %s8 = inlined_call_operand.<no memory space> [shape: f32[1,1], index: 8, kind: input, shape index: {}]
  %s9 = inlined_call_operand.vmem [shape: f32[8,1], index: 9, kind: output, shape index: {}]
  %s10 = sld [smem:[#allocation0]]
  $region58: #{lstm_forward.1} parent=0
    _
  %s12 = ssub.s32 1, %s10
  %s13 = scalar_select 0, %s12, %s10
  %v14 = vstv %s8
  %15 = vst [vmem:[#allocation3] sm:$0x1] %v14
  $region1: #{lstm_forward.1} parent=0
    #allocation4 [shape = 'u8[262144]{0}', space=vmem, size = 0x40000, scoped, tag = 'input window, operand 2, single buffered']
    #allocation5 [shape = 's32[1]{0}', space=sflag, size = 0x4, scoped, tag = 'scoped memory for lstm_forward.1']
    #allocation6 [shape = 'u8[262144]{0}', space=vmem, size = 0x40000, scoped, tag = 'input window, operand 4, single buffered']
    #allocation7 [shape = 's32[1]{0}', space=sflag, size = 0x4, scoped, tag = 'scoped memory for lstm_forward.1']
    #allocation8 [shape = 'u8[262144]{0}', space=vmem, size = 0x40000, scoped, tag = 'input window, operand 5, single buffered']
    %16 = vsyncpa [#allocation5], 0
    %17 = vsyncpa [#allocation7], 0
    // Predicated region
    $region2: #{lstm_forward.1} parent=1 // pred_check
      _
    $region3: #{lstm_forward.1} parent=1 // pred_check_branch
      %19 = sbr.rel (0) target = $region5
    $region4: #{lstm_forward.1} parent=1 // pred_region
      _
    $region5: #{lstm_forward.1} parent=1 // pred_fallthru
      _
    // Predicated region
    $region6: #{lstm_forward.1} parent=1 // pred_check
      _
    $region7: #{lstm_forward.1} parent=1 // pred_check_branch
      %21 = sbr.rel (0) target = $region9
    $region8: #{lstm_forward.1} parent=1 // pred_region
      _
    $region9: #{lstm_forward.1} parent=1 // pred_fallthru
      _
    // Predicated region
    $region10: #{lstm_forward.1} parent=1 // pred_check
      _
    $region11: #{lstm_forward.1} parent=1 // pred_check_branch
      %23 = sbr.rel (0) target = $region13
    $region12: #{lstm_forward.1} parent=1 // pred_region
      %s25 = ssub.s32 8192, 8192
      %26 = vsyncadd [#allocation5], %s25
      %s27 = sshll.u32 [#allocation4], 4
      %s28 = int_to_ptr.vmem [resolvable:$true] %s27
      %33 = dma.hbm_to_vmem [thread:$0]  %s2, 8192, %s28, [#allocation5], 512, 512, 32
    $region13: #{lstm_forward.1} parent=1 // pred_fallthru
      _
    // Predicated region
    $region14: #{lstm_forward.1} parent=1 // pred_check
      _
    $region15: #{lstm_forward.1} parent=1 // pred_check_branch
      %35 = sbr.rel (0) target = $region17
    $region16: #{lstm_forward.1} parent=1 // pred_region
      _
    $region17: #{lstm_forward.1} parent=1 // pred_fallthru
      _
    // Predicated region
    $region18: #{lstm_forward.1} parent=1 // pred_check
      _
    $region19: #{lstm_forward.1} parent=1 // pred_check_branch
      %37 = sbr.rel (0) target = $region21
    $region20: #{lstm_forward.1} parent=1 // pred_region
      %s39 = ssub.s32 8192, 8192
      %40 = vsyncadd [#allocation7], %s39
      %s41 = sshll.u32 [#allocation6], 4
      %s42 = int_to_ptr.vmem [resolvable:$true] %s41
      %47 = dma.hbm_to_vmem [thread:$0]  %s4, 8192, %s42, [#allocation7], 512, 512, 32
    $region21: #{lstm_forward.1} parent=1 // pred_fallthru
      _
    // Predicated region
    $region22: #{lstm_forward.1} parent=1 // pred_check
      _
    $region23: #{lstm_forward.1} parent=1 // pred_check_branch
      %49 = sbr.rel (0) target = $region25
    $region24: #{lstm_forward.1} parent=1 // pred_region
      %s51 = ssub.s32 8192, 8192
      %52 = vsyncadd [#allocation7], %s51
      %s53 = sshll.u32 [#allocation8], 4
      %s54 = int_to_ptr.vmem [resolvable:$true] %s53
      %59 = dma.hbm_to_vmem [thread:$0]  %s5, 8192, %s54, [#allocation7], 512, 512, 32
    $region25: #{lstm_forward.1} parent=1 // pred_fallthru
      _
    // Predicated region
    $region26: #{lstm_forward.1} parent=1 // pred_check
      _
    $region27: #{lstm_forward.1} parent=1 // pred_check_branch
      %61 = sbr.rel (0) target = $region29
    $region28: #{lstm_forward.1} parent=1 // pred_region
      _
    $region29: #{lstm_forward.1} parent=1 // pred_fallthru
      _
    // Predicated region
    $region30: #{lstm_forward.1} parent=1 // pred_check
      _
    $region31: #{lstm_forward.1} parent=1 // pred_check_branch
      %63 = sbr.rel (0) target = $region33
    $region32: #{lstm_forward.1} parent=1 // pred_region
      _
    $region33: #{lstm_forward.1} parent=1 // pred_fallthru
      _
    // Predicated region
    $region34: #{lstm_forward.1} parent=1 // pred_check
      _
    $region35: #{lstm_forward.1} parent=1 // pred_check_branch
      %65 = sbr.rel (0) target = $region37
    $region36: #{lstm_forward.1} parent=1 // pred_region
      _
    $region37: #{lstm_forward.1} parent=1 // pred_fallthru
      _
    // Predicated region
    $region38: #{lstm_forward.1} parent=1 // pred_check
      _
    $region39: #{lstm_forward.1} parent=1 // pred_check_branch
      %67 = sbr.rel (0) target = $region41
    $region40: #{lstm_forward.1} parent=1 // pred_region
      %68 = dma.done [#allocation5], 8192
    $region41: #{lstm_forward.1} parent=1 // pred_fallthru
      _
    // Predicated region
    $region42: #{lstm_forward.1} parent=1 // pred_check
      _
    $region43: #{lstm_forward.1} parent=1 // pred_check_branch
      %70 = sbr.rel (0) target = $region45
    $region44: #{lstm_forward.1} parent=1 // pred_region
      %71 = dma.done [#allocation7], 8192
    $region45: #{lstm_forward.1} parent=1 // pred_fallthru
      _
    // Predicated region
    $region46: #{lstm_forward.1} parent=1 // pred_check
      _
    $region47: #{lstm_forward.1} parent=1 // pred_check_branch
      %73 = sbr.rel (0) target = $region49
    $region48: #{lstm_forward.1} parent=1 // pred_region
      %74 = dma.done [#allocation7], 8192
    $region49: #{lstm_forward.1} parent=1 // pred_fallthru
      _
    %v75 = vld [vmem:[%s1] sm:$0xff]
    %v76 = vld [vmem:[%s1 + $0x8] sm:$0xff]
    %v77 = vld [vmem:[%s1 + $0x10] sm:$0xff]
    %v78 = vld [vmem:[%s1 + $0x18] sm:$0xff]
    %v79 = vld [vmem:[%s1 + $0x20] sm:$0xff]
    %v80 = vld [vmem:[%s1 + $0x28] sm:$0xff]
    %v81 = vld [vmem:[%s1 + $0x30] sm:$0xff]
    %v82 = vld [vmem:[%s1 + $0x38] sm:$0xff]
    %v83 = vld [vmem:[#allocation4] sm:$0xff]
    %v84 = vld [vmem:[#allocation4 + $0x8] sm:$0xff]
    %v85 = vld [vmem:[#allocation4 + $0x10] sm:$0xff]
    %v86 = vld [vmem:[#allocation4 + $0x18] sm:$0xff]
    %v87 = vld [vmem:[#allocation4 + $0x20] sm:$0xff]
    %v88 = vld [vmem:[#allocation4 + $0x28] sm:$0xff]
    %v89 = vld [vmem:[#allocation4 + $0x30] sm:$0xff]
    %v90 = vld [vmem:[#allocation4 + $0x38] sm:$0xff]
    %v91 = vld [vmem:[#allocation4 + $0x40] sm:$0xff]
    %v92 = vld [vmem:[#allocation4 + $0x48] sm:$0xff]
    %v93 = vld [vmem:[#allocation4 + $0x50] sm:$0xff]
    %v94 = vld [vmem:[#allocation4 + $0x58] sm:$0xff]
    %v95 = vld [vmem:[#allocation4 + $0x60] sm:$0xff]
    %v96 = vld [vmem:[#allocation4 + $0x68] sm:$0xff]
    %v97 = vld [vmem:[#allocation4 + $0x70] sm:$0xff]
    %v98 = vld [vmem:[#allocation4 + $0x78] sm:$0xff]
    %v99 = vld [vmem:[#allocation4 + $0x80] sm:$0xff]
    %v100 = vld [vmem:[#allocation4 + $0x88] sm:$0xff]
    %v101 = vld [vmem:[#allocation4 + $0x90] sm:$0xff]
    %v102 = vld [vmem:[#allocation4 + $0x98] sm:$0xff]
    %v103 = vld [vmem:[#allocation4 + $0xa0] sm:$0xff]
    %v104 = vld [vmem:[#allocation4 + $0xa8] sm:$0xff]
    %v105 = vld [vmem:[#allocation4 + $0xb0] sm:$0xff]
    %v106 = vld [vmem:[#allocation4 + $0xb8] sm:$0xff]
    %v107 = vld [vmem:[#allocation4 + $0xc0] sm:$0xff]
    %v108 = vld [vmem:[#allocation4 + $0xc8] sm:$0xff]
    %v109 = vld [vmem:[#allocation4 + $0xd0] sm:$0xff]
    %v110 = vld [vmem:[#allocation4 + $0xd8] sm:$0xff]
    %v111 = vld [vmem:[#allocation4 + $0xe0] sm:$0xff]
    %v112 = vld [vmem:[#allocation4 + $0xe8] sm:$0xff]
    %v113 = vld [vmem:[#allocation4 + $0xf0] sm:$0xff]
    %v114 = vld [vmem:[#allocation4 + $0xf8] sm:$0xff]
    %v115 = vld [vmem:[#allocation4 + $0x100] sm:$0xff]
    %v116 = vld [vmem:[#allocation4 + $0x108] sm:$0xff]
    %v117 = vld [vmem:[#allocation4 + $0x110] sm:$0xff]
    %v118 = vld [vmem:[#allocation4 + $0x118] sm:$0xff]
    %v119 = vld [vmem:[#allocation4 + $0x120] sm:$0xff]
    %v120 = vld [vmem:[#allocation4 + $0x128] sm:$0xff]
    %v121 = vld [vmem:[#allocation4 + $0x130] sm:$0xff]
    %v122 = vld [vmem:[#allocation4 + $0x138] sm:$0xff]
    %v123 = vld [vmem:[#allocation4 + $0x140] sm:$0xff]
    %v124 = vld [vmem:[#allocation4 + $0x148] sm:$0xff]
    %v125 = vld [vmem:[#allocation4 + $0x150] sm:$0xff]
    %v126 = vld [vmem:[#allocation4 + $0x158] sm:$0xff]
    %v127 = vld [vmem:[#allocation4 + $0x160] sm:$0xff]
    %v128 = vld [vmem:[#allocation4 + $0x168] sm:$0xff]
    %v129 = vld [vmem:[#allocation4 + $0x170] sm:$0xff]
    %v130 = vld [vmem:[#allocation4 + $0x178] sm:$0xff]
    %v131 = vld [vmem:[#allocation4 + $0x180] sm:$0xff]
    %v132 = vld [vmem:[#allocation4 + $0x188] sm:$0xff]
    %v133 = vld [vmem:[#allocation4 + $0x190] sm:$0xff]
    %v134 = vld [vmem:[#allocation4 + $0x198] sm:$0xff]
    %v135 = vld [vmem:[#allocation4 + $0x1a0] sm:$0xff]
    %v136 = vld [vmem:[#allocation4 + $0x1a8] sm:$0xff]
    %v137 = vld [vmem:[#allocation4 + $0x1b0] sm:$0xff]
    %v138 = vld [vmem:[#allocation4 + $0x1b8] sm:$0xff]
    %v139 = vld [vmem:[#allocation4 + $0x1c0] sm:$0xff]
    %v140 = vld [vmem:[#allocation4 + $0x1c8] sm:$0xff]
    %v141 = vld [vmem:[#allocation4 + $0x1d0] sm:$0xff]
    %v142 = vld [vmem:[#allocation4 + $0x1d8] sm:$0xff]
    %v143 = vld [vmem:[#allocation4 + $0x1e0] sm:$0xff]
    %v144 = vld [vmem:[#allocation4 + $0x1e8] sm:$0xff]
    %v145 = vld [vmem:[#allocation4 + $0x1f0] sm:$0xff]
    %v146 = vld [vmem:[#allocation4 + $0x1f8] sm:$0xff]
    %v147 = vld [vmem:[%s3] sm:$0xf]
    %v148 = vld [vmem:[%s0] sm:$0xff]
    %v149 = vld [vmem:[%s0 + $0x8] sm:$0xff]
    %v150 = vld [vmem:[%s0 + $0x10] sm:$0xff]
    %v151 = vld [vmem:[%s0 + $0x18] sm:$0xff]
    %v152 = vld [vmem:[%s0 + $0x20] sm:$0xff]
    %v153 = vld [vmem:[%s0 + $0x28] sm:$0xff]
    %v154 = vld [vmem:[%s0 + $0x30] sm:$0xff]
    %v155 = vld [vmem:[%s0 + $0x38] sm:$0xff]
    %v157 = vlaneseq
    %v158 = vshrl.u32 %v157, 7
    %v159 = vsub.s32 0, %v158
    %v160 = vrot.slane %v147, %v159
    %v161 = vlaneseq
    %v162 = vshrl.u32 %v161, 7
    %v163 = vsub.s32 1, %v162
    %v164 = vrot.slane %v147, %v163
    %v165 = vlaneseq
    %v166 = vshrl.u32 %v165, 7
    %v167 = vsub.s32 2, %v166
    %v168 = vrot.slane %v147, %v167
    %v169 = vlaneseq
    %v170 = vshrl.u32 %v169, 7
    %v171 = vsub.s32 3, %v170
    %v172 = vrot.slane %v147, %v171
    %vm177 = vcmask 130048
    %v179 = vsel %vm177, %v148, 0
    %v182 = vsel %vm177, %v149, 0
    %v185 = vsel %vm177, %v150, 0
    %v188 = vsel %vm177, %v151, 0
    %v191 = vsel %vm177, %v152, 0
    %v194 = vsel %vm177, %v153, 0
    %v197 = vsel %vm177, %v154, 0
    %v200 = vsel %vm177, %v155, 0
    %202 = vmatprep.subr.mxu0 %v76
    %203 = vmatpush1.msra.mxu0 %v75
    %204 = vmatprep.subr.mxu0 %v80
    %205 = vmatpush1.msra.mxu0 %v79
    %206 = vmatprep.subr.mxu0 0.0
    %207 = vmatpush1.msra.mxu0 0.0
    %208 = vmatprep.subr.mxu0 0.0
    %209 = vmatpush1.msra.mxu0 0.0
    %210 = vmatprep.subr.mxu0 0.0
    %211 = vmatpush1.msra.mxu0 0.0
    %212 = vmatprep.subr.mxu0 0.0
    %213 = vmatpush1.msra.mxu0 0.0
    %214 = vmatprep.subr.mxu0 0.0
    %215 = vmatpush1.msra.mxu0 0.0
    %216 = vmatprep.subr.mxu0 0.0
    %217 = vmatpush1.msra.mxu0 0.0
    %218 = vmatprep.subr.mxu0 0.0
    %219 = vmatpush1.msra.mxu0 0.0
    %220 = vmatprep.subr.mxu0 0.0
    %221 = vmatpush1.msra.mxu0 0.0
    %222 = vmatprep.subr.mxu0 0.0
    %223 = vmatpush1.msra.mxu0 0.0
    %224 = vmatprep.subr.mxu0 0.0
    %225 = vmatpush1.msra.mxu0 0.0
    %226 = vmatprep.subr.mxu0 0.0
    %227 = vmatpush1.msra.mxu0 0.0
    %228 = vmatprep.subr.mxu0 0.0
    %229 = vmatpush1.msra.mxu0 0.0
    %230 = vmatprep.subr.mxu0 0.0
    %231 = vmatpush1.msra.mxu0 0.0
    %232 = vmatprep.subr.mxu0 0.0
    %233 = vmatpush1.msra.mxu0 0.0
    %234 = vmatprep.subr.mxu0 0.0
    %235 = vmatpush1.msra.mxu0 0.0
    %236 = vmatprep.subr.mxu0 0.0
    %237 = vmatpush1.msra.mxu0 0.0
    %238 = vmatprep.subr.mxu0 0.0
    %239 = vmatpush1.msra.mxu0 0.0
    %240 = vmatprep.subr.mxu0 0.0
    %241 = vmatpush1.msra.mxu0 0.0
    %242 = vmatprep.subr.mxu0 0.0
    %243 = vmatpush1.msra.mxu0 0.0
    %244 = vmatprep.subr.mxu0 0.0
    %245 = vmatpush1.msra.mxu0 0.0
    %246 = vmatprep.subr.mxu0 0.0
    %247 = vmatpush1.msra.mxu0 0.0
    %248 = vmatprep.subr.mxu0 0.0
    %249 = vmatpush1.msra.mxu0 0.0
    %250 = vmatprep.subr.mxu0 0.0
    %251 = vmatpush1.msra.mxu0 0.0
    %252 = vmatprep.subr.mxu0 0.0
    %253 = vmatpush1.msra.mxu0 0.0
    %254 = vmatprep.subr.mxu0 0.0
    %255 = vmatpush1.msra.mxu0 0.0
    %256 = vmatprep.subr.mxu0 0.0
    %257 = vmatpush1.msra.mxu0 0.0
    %258 = vmatprep.subr.mxu0 0.0
    %259 = vmatpush1.msra.mxu0 0.0
    %260 = vmatprep.subr.mxu0 0.0
    %261 = vmatpush1.msra.mxu0 0.0
    %262 = vmatprep.subr.mxu0 0.0
    %263 = vmatpush1.msra.mxu0 0.0
    %264 = vmatprep.subr.mxu0 0.0
    %265 = vmatpush1.msra.mxu0 0.0
    %266 = vmatprep.mubr.f32.mxu0 0.0
    %267 = vmatmul.mubr.f32.gmra.mrb[0].mxu0 %v179
    %v268 = vpop.f32.mrb[0].mxu0
    %v269 = vadd.f32 %v160, %v268
    %v270 = vpop.f32.mrb[0].mxu0
    %v271 = vadd.f32 %v164, %v270
    %272 = vmatprep.mubr.f32.mxu0 0.0
    %273 = vmatmul.mubr.f32.gmra.mrb[0].mxu0 %v182
    %v274 = vpop.f32.mrb[0].mxu0
    %v275 = vadd.f32 %v160, %v274
    %v276 = vpop.f32.mrb[0].mxu0
    %v277 = vadd.f32 %v164, %v276
    %278 = vmatprep.mubr.f32.mxu0 0.0
    %279 = vmatmul.mubr.f32.gmra.mrb[0].mxu0 %v185
    %v280 = vpop.f32.mrb[0].mxu0
    %v281 = vadd.f32 %v160, %v280
    %v282 = vpop.f32.mrb[0].mxu0
    %v283 = vadd.f32 %v164, %v282
    %284 = vmatprep.mubr.f32.mxu0 0.0
    %285 = vmatmul.mubr.f32.gmra.mrb[0].mxu0 %v188
    %v286 = vpop.f32.mrb[0].mxu0
    %v287 = vadd.f32 %v160, %v286
    %v288 = vpop.f32.mrb[0].mxu0
    %v289 = vadd.f32 %v164, %v288
    %290 = vmatprep.mubr.f32.mxu0 0.0
    %291 = vmatmul.mubr.f32.gmra.mrb[0].mxu0 %v191
    %v292 = vpop.f32.mrb[0].mxu0
    %v293 = vadd.f32 %v160, %v292
    %v294 = vpop.f32.mrb[0].mxu0
    %v295 = vadd.f32 %v164, %v294
    %296 = vmatprep.mubr.f32.mxu0 0.0
    %297 = vmatmul.mubr.f32.gmra.mrb[0].mxu0 %v194
    %v298 = vpop.f32.mrb[0].mxu0
    %v299 = vadd.f32 %v160, %v298
    %v300 = vpop.f32.mrb[0].mxu0
    %v301 = vadd.f32 %v164, %v300
    %302 = vmatprep.mubr.f32.mxu0 0.0
    %303 = vmatmul.mubr.f32.gmra.mrb[0].mxu0 %v197
    %v304 = vpop.f32.mrb[0].mxu0
    %v305 = vadd.f32 %v160, %v304
    %v306 = vpop.f32.mrb[0].mxu0
    %v307 = vadd.f32 %v164, %v306
    %308 = vmatprep.mubr.f32.mxu0 0.0
    %309 = vmatmul.mubr.f32.gmra.mrb[0].mxu0 %v200
    %v310 = vpop.f32.mrb[0].mxu0
    %v311 = vadd.f32 %v160, %v310
    %v312 = vpop.f32.mrb[0].mxu0
    %v313 = vadd.f32 %v164, %v312
    %314 = vdwg.mxu0
    %315 = vmatprep.subr.mxu0 %v78
    %316 = vmatpush1.msra.mxu0 %v77
    %317 = vmatprep.subr.mxu0 %v82
    %318 = vmatpush1.msra.mxu0 %v81
    %319 = vmatprep.subr.mxu0 0.0
    %320 = vmatpush1.msra.mxu0 0.0
    %321 = vmatprep.subr.mxu0 0.0
    %322 = vmatpush1.msra.mxu0 0.0
    %323 = vmatprep.subr.mxu0 0.0
    %324 = vmatpush1.msra.mxu0 0.0
    %325 = vmatprep.subr.mxu0 0.0
    %326 = vmatpush1.msra.mxu0 0.0
    %327 = vmatprep.subr.mxu0 0.0
    %328 = vmatpush1.msra.mxu0 0.0
    %329 = vmatprep.subr.mxu0 0.0
    %330 = vmatpush1.msra.mxu0 0.0
    %331 = vmatprep.subr.mxu0 0.0
    %332 = vmatpush1.msra.mxu0 0.0
    %333 = vmatprep.subr.mxu0 0.0
    %334 = vmatpush1.msra.mxu0 0.0
    %335 = vmatprep.subr.mxu0 0.0
    %336 = vmatpush1.msra.mxu0 0.0
    %337 = vmatprep.subr.mxu0 0.0
    %338 = vmatpush1.msra.mxu0 0.0
    %339 = vmatprep.subr.mxu0 0.0
    %340 = vmatpush1.msra.mxu0 0.0
    %341 = vmatprep.subr.mxu0 0.0
    %342 = vmatpush1.msra.mxu0 0.0
    %343 = vmatprep.subr.mxu0 0.0
    %344 = vmatpush1.msra.mxu0 0.0
    %345 = vmatprep.subr.mxu0 0.0
    %346 = vmatpush1.msra.mxu0 0.0
    %347 = vmatprep.subr.mxu0 0.0
    %348 = vmatpush1.msra.mxu0 0.0
    %349 = vmatprep.subr.mxu0 0.0
    %350 = vmatpush1.msra.mxu0 0.0
    %351 = vmatprep.subr.mxu0 0.0
    %352 = vmatpush1.msra.mxu0 0.0
    %353 = vmatprep.subr.mxu0 0.0
    %354 = vmatpush1.msra.mxu0 0.0
    %355 = vmatprep.subr.mxu0 0.0
    %356 = vmatpush1.msra.mxu0 0.0
    %357 = vmatprep.subr.mxu0 0.0
    %358 = vmatpush1.msra.mxu0 0.0
    %359 = vmatprep.subr.mxu0 0.0
    %360 = vmatpush1.msra.mxu0 0.0
    %361 = vmatprep.subr.mxu0 0.0
    %362 = vmatpush1.msra.mxu0 0.0
    %363 = vmatprep.subr.mxu0 0.0
    %364 = vmatpush1.msra.mxu0 0.0
    %365 = vmatprep.subr.mxu0 0.0
    %366 = vmatpush1.msra.mxu0 0.0
    %367 = vmatprep.subr.mxu0 0.0
    %368 = vmatpush1.msra.mxu0 0.0
    %369 = vmatprep.subr.mxu0 0.0
    %370 = vmatpush1.msra.mxu0 0.0
    %371 = vmatprep.subr.mxu0 0.0
    %372 = vmatpush1.msra.mxu0 0.0
    %373 = vmatprep.subr.mxu0 0.0
    %374 = vmatpush1.msra.mxu0 0.0
    %375 = vmatprep.subr.mxu0 0.0
    %376 = vmatpush1.msra.mxu0 0.0
    %377 = vmatprep.subr.mxu0 0.0
    %378 = vmatpush1.msra.mxu0 0.0
    %379 = vmatprep.mubr.f32.mxu0 0.0
    %380 = vmatmul.mubr.f32.gmra.mrb[0].mxu0 %v179
    %v381 = vpop.f32.mrb[0].mxu0
    %v382 = vadd.f32 %v168, %v381
    %v383 = vpop.f32.mrb[0].mxu0
    %v384 = vadd.f32 %v172, %v383
    %385 = vmatprep.mubr.f32.mxu0 0.0
    %386 = vmatmul.mubr.f32.gmra.mrb[0].mxu0 %v182
    %v387 = vpop.f32.mrb[0].mxu0
    %v388 = vadd.f32 %v168, %v387
    %v389 = vpop.f32.mrb[0].mxu0
    %v390 = vadd.f32 %v172, %v389
    %391 = vmatprep.mubr.f32.mxu0 0.0
    %392 = vmatmul.mubr.f32.gmra.mrb[0].mxu0 %v185
    %v393 = vpop.f32.mrb[0].mxu0
    %v394 = vadd.f32 %v168, %v393
    %v395 = vpop.f32.mrb[0].mxu0
    %v396 = vadd.f32 %v172, %v395
    %397 = vmatprep.mubr.f32.mxu0 0.0
    %398 = vmatmul.mubr.f32.gmra.mrb[0].mxu0 %v188
    %v399 = vpop.f32.mrb[0].mxu0
    %v400 = vadd.f32 %v168, %v399
    %v401 = vpop.f32.mrb[0].mxu0
    %v402 = vadd.f32 %v172, %v401
    %403 = vmatprep.mubr.f32.mxu0 0.0
    %404 = vmatmul.mubr.f32.gmra.mrb[0].mxu0 %v191
    %v405 = vpop.f32.mrb[0].mxu0
    %v406 = vadd.f32 %v168, %v405
    %v407 = vpop.f32.mrb[0].mxu0
    %v408 = vadd.f32 %v172, %v407
    %409 = vmatprep.mubr.f32.mxu0 0.0
    %410 = vmatmul.mubr.f32.gmra.mrb[0].mxu0 %v194
    %v411 = vpop.f32.mrb[0].mxu0
    %v412 = vadd.f32 %v168, %v411
    %v413 = vpop.f32.mrb[0].mxu0
    %v414 = vadd.f32 %v172, %v413
    %415 = vmatprep.mubr.f32.mxu0 0.0
    %416 = vmatmul.mubr.f32.gmra.mrb[0].mxu0 %v197
    %v417 = vpop.f32.mrb[0].mxu0
    %v418 = vadd.f32 %v168, %v417
    %v419 = vpop.f32.mrb[0].mxu0
    %v420 = vadd.f32 %v172, %v419
    %421 = vmatprep.mubr.f32.mxu0 0.0
    %422 = vmatmul.mubr.f32.gmra.mrb[0].mxu0 %v200
    %v423 = vpop.f32.mrb[0].mxu0
    %v424 = vadd.f32 %v168, %v423
    %v425 = vpop.f32.mrb[0].mxu0
    %v426 = vadd.f32 %v172, %v425
    %427 = vdwg.mxu0
    %428 = vmatprep.subr.mxu0 %v84
    %429 = vmatpush1.msra.mxu0 %v83
    %430 = vmatprep.subr.mxu0 %v88
    %431 = vmatpush1.msra.mxu0 %v87
    %432 = vmatprep.subr.mxu0 %v92
    %433 = vmatpush1.msra.mxu0 %v91
    %434 = vmatprep.subr.mxu0 %v96
    %435 = vmatpush1.msra.mxu0 %v95
    %436 = vmatprep.subr.mxu0 %v100
    %437 = vmatpush1.msra.mxu0 %v99
    %438 = vmatprep.subr.mxu0 %v104
    %439 = vmatpush1.msra.mxu0 %v103
    %440 = vmatprep.subr.mxu0 %v108
    %441 = vmatpush1.msra.mxu0 %v107
    %442 = vmatprep.subr.mxu0 %v112
    %443 = vmatpush1.msra.mxu0 %v111
    %444 = vmatprep.subr.mxu0 %v116
    %445 = vmatpush1.msra.mxu0 %v115
    %446 = vmatprep.subr.mxu0 %v120
    %447 = vmatpush1.msra.mxu0 %v119
    %448 = vmatprep.subr.mxu0 %v124
    %449 = vmatpush1.msra.mxu0 %v123
    %450 = vmatprep.subr.mxu0 %v128
    %451 = vmatpush1.msra.mxu0 %v127
    %452 = vmatprep.subr.mxu0 %v132
    %453 = vmatpush1.msra.mxu0 %v131
    %454 = vmatprep.subr.mxu0 %v136
    %455 = vmatpush1.msra.mxu0 %v135
    %456 = vmatprep.subr.mxu0 %v140
    %457 = vmatpush1.msra.mxu0 %v139
    %458 = vmatprep.subr.mxu0 %v144
    %459 = vmatpush1.msra.mxu0 %v143
    %460 = vmatprep.subr.mxu0 0.0
    %461 = vmatpush1.msra.mxu0 0.0
    %462 = vmatprep.subr.mxu0 0.0
    %463 = vmatpush1.msra.mxu0 0.0
    %464 = vmatprep.subr.mxu0 0.0
    %465 = vmatpush1.msra.mxu0 0.0
    %466 = vmatprep.subr.mxu0 0.0
    %467 = vmatpush1.msra.mxu0 0.0
    %468 = vmatprep.subr.mxu0 0.0
    %469 = vmatpush1.msra.mxu0 0.0
    %470 = vmatprep.subr.mxu0 0.0
    %471 = vmatpush1.msra.mxu0 0.0
    %472 = vmatprep.subr.mxu0 0.0
    %473 = vmatpush1.msra.mxu0 0.0
    %474 = vmatprep.subr.mxu0 0.0
    %475 = vmatpush1.msra.mxu0 0.0
    %476 = vmatprep.subr.mxu0 0.0
    %477 = vmatpush1.msra.mxu0 0.0
    %478 = vmatprep.subr.mxu0 0.0
    %479 = vmatpush1.msra.mxu0 0.0
    %480 = vmatprep.subr.mxu0 0.0
    %481 = vmatpush1.msra.mxu0 0.0
    %482 = vmatprep.subr.mxu0 0.0
    %483 = vmatpush1.msra.mxu0 0.0
    %484 = vmatprep.subr.mxu0 0.0
    %485 = vmatpush1.msra.mxu0 0.0
    %486 = vmatprep.subr.mxu0 0.0
    %487 = vmatpush1.msra.mxu0 0.0
    %488 = vmatprep.subr.mxu0 0.0
    %489 = vmatpush1.msra.mxu0 0.0
    %490 = vmatprep.subr.mxu0 0.0
    %491 = vmatpush1.msra.mxu0 0.0
    %492 = vmatprep.mubr.f32.mxu0 0.0
    %493 = vmatmul.mubr.f32.gmra.mrb[0].mxu0 0.0
    %v494 = vpop.f32.mrb[0].mxu0
    %v495 = vadd.f32 0.0, %v494
    %v496 = vpop.f32.mrb[0].mxu0
    %v497 = vadd.f32 0.0, %v496
    %498 = vdwg.mxu0
    %499 = vmatprep.subr.mxu0 %v86
    %500 = vmatpush1.msra.mxu0 %v85
    %501 = vmatprep.subr.mxu0 %v90
    %502 = vmatpush1.msra.mxu0 %v89
    %503 = vmatprep.subr.mxu0 %v94
    %504 = vmatpush1.msra.mxu0 %v93
    %505 = vmatprep.subr.mxu0 %v98
    %506 = vmatpush1.msra.mxu0 %v97
    %507 = vmatprep.subr.mxu0 %v102
    %508 = vmatpush1.msra.mxu0 %v101
    %509 = vmatprep.subr.mxu0 %v106
    %510 = vmatpush1.msra.mxu0 %v105
    %511 = vmatprep.subr.mxu0 %v110
    %512 = vmatpush1.msra.mxu0 %v109
    %513 = vmatprep.subr.mxu0 %v114
    %514 = vmatpush1.msra.mxu0 %v113
    %515 = vmatprep.subr.mxu0 %v118
    %516 = vmatpush1.msra.mxu0 %v117
    %517 = vmatprep.subr.mxu0 %v122
    %518 = vmatpush1.msra.mxu0 %v121
    %519 = vmatprep.subr.mxu0 %v126
    %520 = vmatpush1.msra.mxu0 %v125
    %521 = vmatprep.subr.mxu0 %v130
    %522 = vmatpush1.msra.mxu0 %v129
    %523 = vmatprep.subr.mxu0 %v134
    %524 = vmatpush1.msra.mxu0 %v133
    %525 = vmatprep.subr.mxu0 %v138
    %526 = vmatpush1.msra.mxu0 %v137
    %527 = vmatprep.subr.mxu0 %v142
    %528 = vmatpush1.msra.mxu0 %v141
    %529 = vmatprep.subr.mxu0 %v146
    %530 = vmatpush1.msra.mxu0 %v145
    %531 = vmatprep.subr.mxu0 0.0
    %532 = vmatpush1.msra.mxu0 0.0
    %533 = vmatprep.subr.mxu0 0.0
    %534 = vmatpush1.msra.mxu0 0.0
    %535 = vmatprep.subr.mxu0 0.0
    %536 = vmatpush1.msra.mxu0 0.0
    %537 = vmatprep.subr.mxu0 0.0
    %538 = vmatpush1.msra.mxu0 0.0
    %539 = vmatprep.subr.mxu0 0.0
    %540 = vmatpush1.msra.mxu0 0.0
    %541 = vmatprep.subr.mxu0 0.0
    %542 = vmatpush1.msra.mxu0 0.0
    %543 = vmatprep.subr.mxu0 0.0
    %544 = vmatpush1.msra.mxu0 0.0
    %545 = vmatprep.subr.mxu0 0.0
    %546 = vmatpush1.msra.mxu0 0.0
    %547 = vmatprep.subr.mxu0 0.0
    %548 = vmatpush1.msra.mxu0 0.0
    %549 = vmatprep.subr.mxu0 0.0
    %550 = vmatpush1.msra.mxu0 0.0
    %551 = vmatprep.subr.mxu0 0.0
    %552 = vmatpush1.msra.mxu0 0.0
    %553 = vmatprep.subr.mxu0 0.0
    %554 = vmatpush1.msra.mxu0 0.0
    %555 = vmatprep.subr.mxu0 0.0
    %556 = vmatpush1.msra.mxu0 0.0
    %557 = vmatprep.subr.mxu0 0.0
    %558 = vmatpush1.msra.mxu0 0.0
    %559 = vmatprep.subr.mxu0 0.0
    %560 = vmatpush1.msra.mxu0 0.0
    %561 = vmatprep.subr.mxu0 0.0
    %562 = vmatpush1.msra.mxu0 0.0
    %563 = vmatprep.mubr.f32.mxu0 0.0
    %564 = vmatmul.mubr.f32.gmra.mrb[0].mxu0 0.0
    %v565 = vpop.f32.mrb[0].mxu0
    %v566 = vadd.f32 0.0, %v565
    %v567 = vpop.f32.mrb[0].mxu0
    %v568 = vadd.f32 0.0, %v567
    %569 = vdwg.mxu0
    %v570 = vadd.f32 %v269, %v495
    %v571 = vadd.f32 %v271, %v497
    %v572 = vadd.f32 %v382, %v566
    %v573 = vadd.f32 %v384, %v568
    %v574 = vxor.u32 %v570, 2147483648
    %v575 = vxor.u32 %v571, 2147483648
    %v576 = vxor.u32 %v572, 2147483648
    %v577 = vmul.f32 %v574, 1.442695
    %v578 = vpow.pop %v577
    %v579 = vmul.f32 %v575, 1.442695
    %v580 = vpow.pop %v579
    %v581 = vmul.f32 %v576, 1.442695
    %v582 = vpow.pop %v581
    %v583 = vadd.f32 %v578, 1.0
    %v584 = vadd.f32 %v580, 1.0
    %v585 = vadd.f32 %v582, 1.0
    %v586 = vrcp.pop %v583
    %v587 = vmul.f32 1.0, %v586
    %v588 = vrcp.pop %v584
    %v589 = vmul.f32 1.0, %v588
    %v590 = vrcp.pop %v585
    %v591 = vmul.f32 1.0, %v590
    %v592 = vtanh.pop %v573
    %v593 = vmul.f32 %v589, 0.0
    %v594 = vmul.f32 %v587, %v592
    %v595 = vadd.f32 %v593, %v594
    %v596 = vtanh.pop %v595
    %v597 = vmul.f32 %v591, %v596
    %598 = vst [vmem:[#allocation2] sm:$0xff] %v597
    %599 = vmatprep.subr.mxu0 %v84
    %600 = vmatpush1.msra.mxu0 %v83
    %601 = vmatprep.subr.mxu0 %v88
    %602 = vmatpush1.msra.mxu0 %v87
    %603 = vmatprep.subr.mxu0 %v92
    %604 = vmatpush1.msra.mxu0 %v91
    %605 = vmatprep.subr.mxu0 %v96
    %606 = vmatpush1.msra.mxu0 %v95
    %607 = vmatprep.subr.mxu0 %v100
    %608 = vmatpush1.msra.mxu0 %v99
    %609 = vmatprep.subr.mxu0 %v104
    %610 = vmatpush1.msra.mxu0 %v103
    %611 = vmatprep.subr.mxu0 %v108
    %612 = vmatpush1.msra.mxu0 %v107
    %613 = vmatprep.subr.mxu0 %v112
    %614 = vmatpush1.msra.mxu0 %v111
    %615 = vmatprep.subr.mxu0 %v116
    %616 = vmatpush1.msra.mxu0 %v115
    %617 = vmatprep.subr.mxu0 %v120
    %618 = vmatpush1.msra.mxu0 %v119
    %619 = vmatprep.subr.mxu0 %v124
    %620 = vmatpush1.msra.mxu0 %v123
    %621 = vmatprep.subr.mxu0 %v128
    %622 = vmatpush1.msra.mxu0 %v127
    %623 = vmatprep.subr.mxu0 %v132
    %624 = vmatpush1.msra.mxu0 %v131
    %625 = vmatprep.subr.mxu0 %v136
    %626 = vmatpush1.msra.mxu0 %v135
    %627 = vmatprep.subr.mxu0 %v140
    %628 = vmatpush1.msra.mxu0 %v139
    %629 = vmatprep.subr.mxu0 %v144
    %630 = vmatpush1.msra.mxu0 %v143
    %631 = vmatprep.subr.mxu0 0.0
    %632 = vmatpush1.msra.mxu0 0.0
    %633 = vmatprep.subr.mxu0 0.0
    %634 = vmatpush1.msra.mxu0 0.0
    %635 = vmatprep.subr.mxu0 0.0
    %636 = vmatpush1.msra.mxu0 0.0
    %637 = vmatprep.subr.mxu0 0.0
    %638 = vmatpush1.msra.mxu0 0.0
    %639 = vmatprep.subr.mxu0 0.0
    %640 = vmatpush1.msra.mxu0 0.0
    %641 = vmatprep.subr.mxu0 0.0
    %642 = vmatpush1.msra.mxu0 0.0
    %643 = vmatprep.subr.mxu0 0.0
    %644 = vmatpush1.msra.mxu0 0.0
    %645 = vmatprep.subr.mxu0 0.0
    %646 = vmatpush1.msra.mxu0 0.0
    %647 = vmatprep.subr.mxu0 0.0
    %648 = vmatpush1.msra.mxu0 0.0
    %649 = vmatprep.subr.mxu0 0.0
    %650 = vmatpush1.msra.mxu0 0.0
    %651 = vmatprep.subr.mxu0 0.0
    %652 = vmatpush1.msra.mxu0 0.0
    %653 = vmatprep.subr.mxu0 0.0
    %654 = vmatpush1.msra.mxu0 0.0
    %655 = vmatprep.subr.mxu0 0.0
    %656 = vmatpush1.msra.mxu0 0.0
    %657 = vmatprep.subr.mxu0 0.0
    %658 = vmatpush1.msra.mxu0 0.0
    %659 = vmatprep.subr.mxu0 0.0
    %660 = vmatpush1.msra.mxu0 0.0
    %661 = vmatprep.subr.mxu0 0.0
    %662 = vmatpush1.msra.mxu0 0.0
    %663 = vmatprep.mubr.f32.mxu0 0.0
    %664 = vmatmul.mubr.f32.gmra.mrb[0].mxu0 %v597
    %v665 = vpop.f32.mrb[0].mxu0
    %v666 = vadd.f32 0.0, %v665
    %v667 = vpop.f32.mrb[0].mxu0
    %v668 = vadd.f32 0.0, %v667
    %669 = vdwg.mxu0
    %670 = vmatprep.subr.mxu0 %v86
    %671 = vmatpush1.msra.mxu0 %v85
    %672 = vmatprep.subr.mxu0 %v90
    %673 = vmatpush1.msra.mxu0 %v89
    %674 = vmatprep.subr.mxu0 %v94
    %675 = vmatpush1.msra.mxu0 %v93
    %676 = vmatprep.subr.mxu0 %v98
    %677 = vmatpush1.msra.mxu0 %v97
    %678 = vmatprep.subr.mxu0 %v102
    %679 = vmatpush1.msra.mxu0 %v101
    %680 = vmatprep.subr.mxu0 %v106
    %681 = vmatpush1.msra.mxu0 %v105
    %682 = vmatprep.subr.mxu0 %v110
    %683 = vmatpush1.msra.mxu0 %v109
    %684 = vmatprep.subr.mxu0 %v114
    %685 = vmatpush1.msra.mxu0 %v113
    %686 = vmatprep.subr.mxu0 %v118
    %687 = vmatpush1.msra.mxu0 %v117
    %688 = vmatprep.subr.mxu0 %v122
    %689 = vmatpush1.msra.mxu0 %v121
    %690 = vmatprep.subr.mxu0 %v126
    %691 = vmatpush1.msra.mxu0 %v125
    %692 = vmatprep.subr.mxu0 %v130
    %693 = vmatpush1.msra.mxu0 %v129
    %694 = vmatprep.subr.mxu0 %v134
    %695 = vmatpush1.msra.mxu0 %v133
    %696 = vmatprep.subr.mxu0 %v138
    %697 = vmatpush1.msra.mxu0 %v137
    %698 = vmatprep.subr.mxu0 %v142
    %699 = vmatpush1.msra.mxu0 %v141
    %700 = vmatprep.subr.mxu0 %v146
    %701 = vmatpush1.msra.mxu0 %v145
    %702 = vmatprep.subr.mxu0 0.0
    %703 = vmatpush1.msra.mxu0 0.0
    %704 = vmatprep.subr.mxu0 0.0
    %705 = vmatpush1.msra.mxu0 0.0
    %706 = vmatprep.subr.mxu0 0.0
    %707 = vmatpush1.msra.mxu0 0.0
    %708 = vmatprep.subr.mxu0 0.0
    %709 = vmatpush1.msra.mxu0 0.0
    %710 = vmatprep.subr.mxu0 0.0
    %711 = vmatpush1.msra.mxu0 0.0
    %712 = vmatprep.subr.mxu0 0.0
    %713 = vmatpush1.msra.mxu0 0.0
    %714 = vmatprep.subr.mxu0 0.0
    %715 = vmatpush1.msra.mxu0 0.0
    %716 = vmatprep.subr.mxu0 0.0
    %717 = vmatpush1.msra.mxu0 0.0
    %718 = vmatprep.subr.mxu0 0.0
    %719 = vmatpush1.msra.mxu0 0.0
    %720 = vmatprep.subr.mxu0 0.0
    %721 = vmatpush1.msra.mxu0 0.0
    %722 = vmatprep.subr.mxu0 0.0
    %723 = vmatpush1.msra.mxu0 0.0
    %724 = vmatprep.subr.mxu0 0.0
    %725 = vmatpush1.msra.mxu0 0.0
    %726 = vmatprep.subr.mxu0 0.0
    %727 = vmatpush1.msra.mxu0 0.0
    %728 = vmatprep.subr.mxu0 0.0
    %729 = vmatpush1.msra.mxu0 0.0
    %730 = vmatprep.subr.mxu0 0.0
    %731 = vmatpush1.msra.mxu0 0.0
    %732 = vmatprep.subr.mxu0 0.0
    %733 = vmatpush1.msra.mxu0 0.0
    %734 = vmatprep.mubr.f32.mxu0 0.0
    %735 = vmatmul.mubr.f32.gmra.mrb[0].mxu0 %v597
    %v736 = vpop.f32.mrb[0].mxu0
    %v737 = vadd.f32 0.0, %v736
    %v738 = vpop.f32.mrb[0].mxu0
    %v739 = vadd.f32 0.0, %v738
    %740 = vdwg.mxu0
    %v741 = vadd.f32 %v275, %v666
    %v742 = vadd.f32 %v277, %v668
    %v743 = vadd.f32 %v388, %v737
    %v744 = vadd.f32 %v390, %v739
    %v745 = vxor.u32 %v741, 2147483648
    %v746 = vxor.u32 %v742, 2147483648
    %v747 = vxor.u32 %v743, 2147483648
    %v748 = vmul.f32 %v745, 1.442695
    %v749 = vpow.pop %v748
    %v750 = vmul.f32 %v746, 1.442695
    %v751 = vpow.pop %v750
    %v752 = vmul.f32 %v747, 1.442695
    %v753 = vpow.pop %v752
    %v754 = vadd.f32 %v749, 1.0
    %v755 = vadd.f32 %v751, 1.0
    %v756 = vadd.f32 %v753, 1.0
    %v757 = vrcp.pop %v754
    %v758 = vmul.f32 1.0, %v757
    %v759 = vrcp.pop %v755
    %v760 = vmul.f32 1.0, %v759
    %v761 = vrcp.pop %v756
    %v762 = vmul.f32 1.0, %v761
    %v763 = vtanh.pop %v744
    %v764 = vmul.f32 %v760, %v595
    %v765 = vmul.f32 %v758, %v763
    %v766 = vadd.f32 %v764, %v765
    %v767 = vtanh.pop %v766
    %v768 = vmul.f32 %v762, %v767
    %s769 = scalar_lea.vmem [#allocation2], 8
    %770 = vst [vmem:[%s769] sm:$0xff] %v768
    %771 = vmatprep.subr.mxu0 %v84
    %772 = vmatpush1.msra.mxu0 %v83
    %773 = vmatprep.subr.mxu0 %v88
    %774 = vmatpush1.msra.mxu0 %v87
    %775 = vmatprep.subr.mxu0 %v92
    %776 = vmatpush1.msra.mxu0 %v91
    %777 = vmatprep.subr.mxu0 %v96
    %778 = vmatpush1.msra.mxu0 %v95
    %779 = vmatprep.subr.mxu0 %v100
    %780 = vmatpush1.msra.mxu0 %v99
    %781 = vmatprep.subr.mxu0 %v104
    %782 = vmatpush1.msra.mxu0 %v103
    %783 = vmatprep.subr.mxu0 %v108
    %784 = vmatpush1.msra.mxu0 %v107
    %785 = vmatprep.subr.mxu0 %v112
    %786 = vmatpush1.msra.mxu0 %v111
    %787 = vmatprep.subr.mxu0 %v116
    %788 = vmatpush1.msra.mxu0 %v115
    %789 = vmatprep.subr.mxu0 %v120
    %790 = vmatpush1.msra.mxu0 %v119
    %791 = vmatprep.subr.mxu0 %v124
    %792 = vmatpush1.msra.mxu0 %v123
    %793 = vmatprep.subr.mxu0 %v128
    %794 = vmatpush1.msra.mxu0 %v127
    %795 = vmatprep.subr.mxu0 %v132
    %796 = vmatpush1.msra.mxu0 %v131
    %797 = vmatprep.subr.mxu0 %v136
    %798 = vmatpush1.msra.mxu0 %v135
    %799 = vmatprep.subr.mxu0 %v140
    %800 = vmatpush1.msra.mxu0 %v139
    %801 = vmatprep.subr.mxu0 %v144
    %802 = vmatpush1.msra.mxu0 %v143
    %803 = vmatprep.subr.mxu0 0.0
    %804 = vmatpush1.msra.mxu0 0.0
    %805 = vmatprep.subr.mxu0 0.0
    %806 = vmatpush1.msra.mxu0 0.0
    %807 = vmatprep.subr.mxu0 0.0
    %808 = vmatpush1.msra.mxu0 0.0
    %809 = vmatprep.subr.mxu0 0.0
    %810 = vmatpush1.msra.mxu0 0.0
    %811 = vmatprep.subr.mxu0 0.0
    %812 = vmatpush1.msra.mxu0 0.0
    %813 = vmatprep.subr.mxu0 0.0
    %814 = vmatpush1.msra.mxu0 0.0
    %815 = vmatprep.subr.mxu0 0.0
    %816 = vmatpush1.msra.mxu0 0.0
    %817 = vmatprep.subr.mxu0 0.0
    %818 = vmatpush1.msra.mxu0 0.0
    %819 = vmatprep.subr.mxu0 0.0
    %820 = vmatpush1.msra.mxu0 0.0
    %821 = vmatprep.subr.mxu0 0.0
    %822 = vmatpush1.msra.mxu0 0.0
    %823 = vmatprep.subr.mxu0 0.0
    %824 = vmatpush1.msra.mxu0 0.0
    %825 = vmatprep.subr.mxu0 0.0
    %826 = vmatpush1.msra.mxu0 0.0
    %827 = vmatprep.subr.mxu0 0.0
    %828 = vmatpush1.msra.mxu0 0.0
    %829 = vmatprep.subr.mxu0 0.0
    %830 = vmatpush1.msra.mxu0 0.0
    %831 = vmatprep.subr.mxu0 0.0
    %832 = vmatpush1.msra.mxu0 0.0
    %833 = vmatprep.subr.mxu0 0.0
    %834 = vmatpush1.msra.mxu0 0.0
    %835 = vmatprep.mubr.f32.mxu0 0.0
    %836 = vmatmul.mubr.f32.gmra.mrb[0].mxu0 %v768
    %v837 = vpop.f32.mrb[0].mxu0
    %v838 = vadd.f32 0.0, %v837
    %v839 = vpop.f32.mrb[0].mxu0
    %v840 = vadd.f32 0.0, %v839
    %841 = vdwg.mxu0
    %842 = vmatprep.subr.mxu0 %v86
    %843 = vmatpush1.msra.mxu0 %v85
    %844 = vmatprep.subr.mxu0 %v90
    %845 = vmatpush1.msra.mxu0 %v89
    %846 = vmatprep.subr.mxu0 %v94
    %847 = vmatpush1.msra.mxu0 %v93
    %848 = vmatprep.subr.mxu0 %v98
    %849 = vmatpush1.msra.mxu0 %v97
    %850 = vmatprep.subr.mxu0 %v102
    %851 = vmatpush1.msra.mxu0 %v101
    %852 = vmatprep.subr.mxu0 %v106
    %853 = vmatpush1.msra.mxu0 %v105
    %854 = vmatprep.subr.mxu0 %v110
    %855 = vmatpush1.msra.mxu0 %v109
    %856 = vmatprep.subr.mxu0 %v114
    %857 = vmatpush1.msra.mxu0 %v113
    %858 = vmatprep.subr.mxu0 %v118
    %859 = vmatpush1.msra.mxu0 %v117
    %860 = vmatprep.subr.mxu0 %v122
    %861 = vmatpush1.msra.mxu0 %v121
    %862 = vmatprep.subr.mxu0 %v126
    %863 = vmatpush1.msra.mxu0 %v125
    %864 = vmatprep.subr.mxu0 %v130
    %865 = vmatpush1.msra.mxu0 %v129
    %866 = vmatprep.subr.mxu0 %v134
    %867 = vmatpush1.msra.mxu0 %v133
    %868 = vmatprep.subr.mxu0 %v138
    %869 = vmatpush1.msra.mxu0 %v137
    %870 = vmatprep.subr.mxu0 %v142
    %871 = vmatpush1.msra.mxu0 %v141
    %872 = vmatprep.subr.mxu0 %v146
    %873 = vmatpush1.msra.mxu0 %v145
    %874 = vmatprep.subr.mxu0 0.0
    %875 = vmatpush1.msra.mxu0 0.0
    %876 = vmatprep.subr.mxu0 0.0
    %877 = vmatpush1.msra.mxu0 0.0
    %878 = vmatprep.subr.mxu0 0.0
    %879 = vmatpush1.msra.mxu0 0.0
    %880 = vmatprep.subr.mxu0 0.0
    %881 = vmatpush1.msra.mxu0 0.0
    %882 = vmatprep.subr.mxu0 0.0
    %883 = vmatpush1.msra.mxu0 0.0
    %884 = vmatprep.subr.mxu0 0.0
    %885 = vmatpush1.msra.mxu0 0.0
    %886 = vmatprep.subr.mxu0 0.0
    %887 = vmatpush1.msra.mxu0 0.0
    %888 = vmatprep.subr.mxu0 0.0
    %889 = vmatpush1.msra.mxu0 0.0
    %890 = vmatprep.subr.mxu0 0.0
    %891 = vmatpush1.msra.mxu0 0.0
    %892 = vmatprep.subr.mxu0 0.0
    %893 = vmatpush1.msra.mxu0 0.0
    %894 = vmatprep.subr.mxu0 0.0
    %895 = vmatpush1.msra.mxu0 0.0
    %896 = vmatprep.subr.mxu0 0.0
    %897 = vmatpush1.msra.mxu0 0.0
    %898 = vmatprep.subr.mxu0 0.0
    %899 = vmatpush1.msra.mxu0 0.0
    %900 = vmatprep.subr.mxu0 0.0
    %901 = vmatpush1.msra.mxu0 0.0
    %902 = vmatprep.subr.mxu0 0.0
    %903 = vmatpush1.msra.mxu0 0.0
    %904 = vmatprep.subr.mxu0 0.0
    %905 = vmatpush1.msra.mxu0 0.0
    %906 = vmatprep.mubr.f32.mxu0 0.0
    %907 = vmatmul.mubr.f32.gmra.mrb[0].mxu0 %v768
    %v908 = vpop.f32.mrb[0].mxu0
    %v909 = vadd.f32 0.0, %v908
    %v910 = vpop.f32.mrb[0].mxu0
    %v911 = vadd.f32 0.0, %v910
    %912 = vdwg.mxu0
    %v913 = vadd.f32 %v281, %v838
    %v914 = vadd.f32 %v283, %v840
    %v915 = vadd.f32 %v394, %v909
    %v916 = vadd.f32 %v396, %v911
    %v917 = vxor.u32 %v913, 2147483648
    %v918 = vxor.u32 %v914, 2147483648
    %v919 = vxor.u32 %v915, 2147483648
    %v920 = vmul.f32 %v917, 1.442695
    %v921 = vpow.pop %v920
    %v922 = vmul.f32 %v918, 1.442695
    %v923 = vpow.pop %v922
    %v924 = vmul.f32 %v919, 1.442695
    %v925 = vpow.pop %v924
    %v926 = vadd.f32 %v921, 1.0
    %v927 = vadd.f32 %v923, 1.0
    %v928 = vadd.f32 %v925, 1.0
    %v929 = vrcp.pop %v926
    %v930 = vmul.f32 1.0, %v929
    %v931 = vrcp.pop %v927
    %v932 = vmul.f32 1.0, %v931
    %v933 = vrcp.pop %v928
    %v934 = vmul.f32 1.0, %v933
    %v935 = vtanh.pop %v916
    %v936 = vmul.f32 %v932, %v766
    %v937 = vmul.f32 %v930, %v935
    %v938 = vadd.f32 %v936, %v937
    %v939 = vtanh.pop %v938
    %v940 = vmul.f32 %v934, %v939
    %s941 = scalar_lea.vmem [#allocation2], 16
    %942 = vst [vmem:[%s941] sm:$0xff] %v940
    %943 = vmatprep.subr.mxu0 %v84
    %944 = vmatpush1.msra.mxu0 %v83
    %945 = vmatprep.subr.mxu0 %v88
    %946 = vmatpush1.msra.mxu0 %v87
    %947 = vmatprep.subr.mxu0 %v92
    %948 = vmatpush1.msra.mxu0 %v91
    %949 = vmatprep.subr.mxu0 %v96
    %950 = vmatpush1.msra.mxu0 %v95
    %951 = vmatprep.subr.mxu0 %v100
    %952 = vmatpush1.msra.mxu0 %v99
    %953 = vmatprep.subr.mxu0 %v104
    %954 = vmatpush1.msra.mxu0 %v103
    %955 = vmatprep.subr.mxu0 %v108
    %956 = vmatpush1.msra.mxu0 %v107
    %957 = vmatprep.subr.mxu0 %v112
    %958 = vmatpush1.msra.mxu0 %v111
    %959 = vmatprep.subr.mxu0 %v116
    %960 = vmatpush1.msra.mxu0 %v115
    %961 = vmatprep.subr.mxu0 %v120
    %962 = vmatpush1.msra.mxu0 %v119
    %963 = vmatprep.subr.mxu0 %v124
    %964 = vmatpush1.msra.mxu0 %v123
    %965 = vmatprep.subr.mxu0 %v128
    %966 = vmatpush1.msra.mxu0 %v127
    %967 = vmatprep.subr.mxu0 %v132
    %968 = vmatpush1.msra.mxu0 %v131
    %969 = vmatprep.subr.mxu0 %v136
    %970 = vmatpush1.msra.mxu0 %v135
    %971 = vmatprep.subr.mxu0 %v140
    %972 = vmatpush1.msra.mxu0 %v139
    %973 = vmatprep.subr.mxu0 %v144
    %974 = vmatpush1.msra.mxu0 %v143
    %975 = vmatprep.subr.mxu0 0.0
    %976 = vmatpush1.msra.mxu0 0.0
    %977 = vmatprep.subr.mxu0 0.0
    %978 = vmatpush1.msra.mxu0 0.0
    %979 = vmatprep.subr.mxu0 0.0
    %980 = vmatpush1.msra.mxu0 0.0
    %981 = vmatprep.subr.mxu0 0.0
    %982 = vmatpush1.msra.mxu0 0.0
    %983 = vmatprep.subr.mxu0 0.0
    %984 = vmatpush1.msra.mxu0 0.0
    %985 = vmatprep.subr.mxu0 0.0
    %986 = vmatpush1.msra.mxu0 0.0
    %987 = vmatprep.subr.mxu0 0.0
    %988 = vmatpush1.msra.mxu0 0.0
    %989 = vmatprep.subr.mxu0 0.0
    %990 = vmatpush1.msra.mxu0 0.0
    %991 = vmatprep.subr.mxu0 0.0
    %992 = vmatpush1.msra.mxu0 0.0
    %993 = vmatprep.subr.mxu0 0.0
    %994 = vmatpush1.msra.mxu0 0.0
    %995 = vmatprep.subr.mxu0 0.0
    %996 = vmatpush1.msra.mxu0 0.0
    %997 = vmatprep.subr.mxu0 0.0
    %998 = vmatpush1.msra.mxu0 0.0
    %999 = vmatprep.subr.mxu0 0.0
    %1000 = vmatpush1.msra.mxu0 0.0
    %1001 = vmatprep.subr.mxu0 0.0
    %1002 = vmatpush1.msra.mxu0 0.0
    %1003 = vmatprep.subr.mxu0 0.0
    %1004 = vmatpush1.msra.mxu0 0.0
    %1005 = vmatprep.subr.mxu0 0.0
    %1006 = vmatpush1.msra.mxu0 0.0
    %1007 = vmatprep.mubr.f32.mxu0 0.0
    %1008 = vmatmul.mubr.f32.gmra.mrb[0].mxu0 %v940
    %v1009 = vpop.f32.mrb[0].mxu0
    %v1010 = vadd.f32 0.0, %v1009
    %v1011 = vpop.f32.mrb[0].mxu0
    %v1012 = vadd.f32 0.0, %v1011
    %1013 = vdwg.mxu0
    %1014 = vmatprep.subr.mxu0 %v86
    %1015 = vmatpush1.msra.mxu0 %v85
    %1016 = vmatprep.subr.mxu0 %v90
    %1017 = vmatpush1.msra.mxu0 %v89
    %1018 = vmatprep.subr.mxu0 %v94
    %1019 = vmatpush1.msra.mxu0 %v93
    %1020 = vmatprep.subr.mxu0 %v98
    %1021 = vmatpush1.msra.mxu0 %v97
    %1022 = vmatprep.subr.mxu0 %v102
    %1023 = vmatpush1.msra.mxu0 %v101
    %1024 = vmatprep.subr.mxu0 %v106
    %1025 = vmatpush1.msra.mxu0 %v105
    %1026 = vmatprep.subr.mxu0 %v110
    %1027 = vmatpush1.msra.mxu0 %v109
    %1028 = vmatprep.subr.mxu0 %v114
    %1029 = vmatpush1.msra.mxu0 %v113
    %1030 = vmatprep.subr.mxu0 %v118
    %1031 = vmatpush1.msra.mxu0 %v117
    %1032 = vmatprep.subr.mxu0 %v122
    %1033 = vmatpush1.msra.mxu0 %v121
    %1034 = vmatprep.subr.mxu0 %v126
    %1035 = vmatpush1.msra.mxu0 %v125
    %1036 = vmatprep.subr.mxu0 %v130
    %1037 = vmatpush1.msra.mxu0 %v129
    %1038 = vmatprep.subr.mxu0 %v134
    %1039 = vmatpush1.msra.mxu0 %v133
    %1040 = vmatprep.subr.mxu0 %v138
    %1041 = vmatpush1.msra.mxu0 %v137
    %1042 = vmatprep.subr.mxu0 %v142
    %1043 = vmatpush1.msra.mxu0 %v141
    %1044 = vmatprep.subr.mxu0 %v146
    %1045 = vmatpush1.msra.mxu0 %v145
    %1046 = vmatprep.subr.mxu0 0.0
    %1047 = vmatpush1.msra.mxu0 0.0
    %1048 = vmatprep.subr.mxu0 0.0
    %1049 = vmatpush1.msra.mxu0 0.0
    %1050 = vmatprep.subr.mxu0 0.0
    %1051 = vmatpush1.msra.mxu0 0.0
    %1052 = vmatprep.subr.mxu0 0.0
    %1053 = vmatpush1.msra.mxu0 0.0
    %1054 = vmatprep.subr.mxu0 0.0
    %1055 = vmatpush1.msra.mxu0 0.0
    %1056 = vmatprep.subr.mxu0 0.0
    %1057 = vmatpush1.msra.mxu0 0.0
    %1058 = vmatprep.subr.mxu0 0.0
    %1059 = vmatpush1.msra.mxu0 0.0
    %1060 = vmatprep.subr.mxu0 0.0
    %1061 = vmatpush1.msra.mxu0 0.0
    %1062 = vmatprep.subr.mxu0 0.0
    %1063 = vmatpush1.msra.mxu0 0.0
    %1064 = vmatprep.subr.mxu0 0.0
    %1065 = vmatpush1.msra.mxu0 0.0
    %1066 = vmatprep.subr.mxu0 0.0
    %1067 = vmatpush1.msra.mxu0 0.0
    %1068 = vmatprep.subr.mxu0 0.0
    %1069 = vmatpush1.msra.mxu0 0.0
    %1070 = vmatprep.subr.mxu0 0.0
    %1071 = vmatpush1.msra.mxu0 0.0
    %1072 = vmatprep.subr.mxu0 0.0
    %1073 = vmatpush1.msra.mxu0 0.0
    %1074 = vmatprep.subr.mxu0 0.0
    %1075 = vmatpush1.msra.mxu0 0.0
    %1076 = vmatprep.subr.mxu0 0.0
    %1077 = vmatpush1.msra.mxu0 0.0
    %1078 = vmatprep.mubr.f32.mxu0 0.0
    %1079 = vmatmul.mubr.f32.gmra.mrb[0].mxu0 %v940
    %v1080 = vpop.f32.mrb[0].mxu0
    %v1081 = vadd.f32 0.0, %v1080
    %v1082 = vpop.f32.mrb[0].mxu0
    %v1083 = vadd.f32 0.0, %v1082
    %1084 = vdwg.mxu0
    %v1085 = vadd.f32 %v287, %v1010
    %v1086 = vadd.f32 %v289, %v1012
    %v1087 = vadd.f32 %v400, %v1081
    %v1088 = vadd.f32 %v402, %v1083
    %v1089 = vxor.u32 %v1085, 2147483648
    %v1090 = vxor.u32 %v1086, 2147483648
    %v1091 = vxor.u32 %v1087, 2147483648
    %v1092 = vmul.f32 %v1089, 1.442695
    %v1093 = vpow.pop %v1092
    %v1094 = vmul.f32 %v1090, 1.442695
    %v1095 = vpow.pop %v1094
    %v1096 = vmul.f32 %v1091, 1.442695
    %v1097 = vpow.pop %v1096
    %v1098 = vadd.f32 %v1093, 1.0
    %v1099 = vadd.f32 %v1095, 1.0
    %v1100 = vadd.f32 %v1097, 1.0
    %v1101 = vrcp.pop %v1098
    %v1102 = vmul.f32 1.0, %v1101
    %v1103 = vrcp.pop %v1099
    %v1104 = vmul.f32 1.0, %v1103
    %v1105 = vrcp.pop %v1100
    %v1106 = vmul.f32 1.0, %v1105
    %v1107 = vtanh.pop %v1088
    %v1108 = vmul.f32 %v1104, %v938
    %v1109 = vmul.f32 %v1102, %v1107
    %v1110 = vadd.f32 %v1108, %v1109
    %v1111 = vtanh.pop %v1110
    %v1112 = vmul.f32 %v1106, %v1111
    %s1113 = scalar_lea.vmem [#allocation2], 24
    %1114 = vst [vmem:[%s1113] sm:$0xff] %v1112
    %1115 = vmatprep.subr.mxu0 %v84
    %1116 = vmatpush1.msra.mxu0 %v83
    %1117 = vmatprep.subr.mxu0 %v88
    %1118 = vmatpush1.msra.mxu0 %v87
    %1119 = vmatprep.subr.mxu0 %v92
    %1120 = vmatpush1.msra.mxu0 %v91
    %1121 = vmatprep.subr.mxu0 %v96
    %1122 = vmatpush1.msra.mxu0 %v95
    %1123 = vmatprep.subr.mxu0 %v100
    %1124 = vmatpush1.msra.mxu0 %v99
    %1125 = vmatprep.subr.mxu0 %v104
    %1126 = vmatpush1.msra.mxu0 %v103
    %1127 = vmatprep.subr.mxu0 %v108
    %1128 = vmatpush1.msra.mxu0 %v107
    %1129 = vmatprep.subr.mxu0 %v112
    %1130 = vmatpush1.msra.mxu0 %v111
    %1131 = vmatprep.subr.mxu0 %v116
    %1132 = vmatpush1.msra.mxu0 %v115
    %1133 = vmatprep.subr.mxu0 %v120
    %1134 = vmatpush1.msra.mxu0 %v119
    %1135 = vmatprep.subr.mxu0 %v124
    %1136 = vmatpush1.msra.mxu0 %v123
    %1137 = vmatprep.subr.mxu0 %v128
    %1138 = vmatpush1.msra.mxu0 %v127
    %1139 = vmatprep.subr.mxu0 %v132
    %1140 = vmatpush1.msra.mxu0 %v131
    %1141 = vmatprep.subr.mxu0 %v136
    %1142 = vmatpush1.msra.mxu0 %v135
    %1143 = vmatprep.subr.mxu0 %v140
    %1144 = vmatpush1.msra.mxu0 %v139
    %1145 = vmatprep.subr.mxu0 %v144
    %1146 = vmatpush1.msra.mxu0 %v143
    %1147 = vmatprep.subr.mxu0 0.0
    %1148 = vmatpush1.msra.mxu0 0.0
    %1149 = vmatprep.subr.mxu0 0.0
    %1150 = vmatpush1.msra.mxu0 0.0
    %1151 = vmatprep.subr.mxu0 0.0
    %1152 = vmatpush1.msra.mxu0 0.0
    %1153 = vmatprep.subr.mxu0 0.0
    %1154 = vmatpush1.msra.mxu0 0.0
    %1155 = vmatprep.subr.mxu0 0.0
    %1156 = vmatpush1.msra.mxu0 0.0
    %1157 = vmatprep.subr.mxu0 0.0
    %1158 = vmatpush1.msra.mxu0 0.0
    %1159 = vmatprep.subr.mxu0 0.0
    %1160 = vmatpush1.msra.mxu0 0.0
    %1161 = vmatprep.subr.mxu0 0.0
    %1162 = vmatpush1.msra.mxu0 0.0
    %1163 = vmatprep.subr.mxu0 0.0
    %1164 = vmatpush1.msra.mxu0 0.0
    %1165 = vmatprep.subr.mxu0 0.0
    %1166 = vmatpush1.msra.mxu0 0.0
    %1167 = vmatprep.subr.mxu0 0.0
    %1168 = vmatpush1.msra.mxu0 0.0
    %1169 = vmatprep.subr.mxu0 0.0
    %1170 = vmatpush1.msra.mxu0 0.0
    %1171 = vmatprep.subr.mxu0 0.0
    %1172 = vmatpush1.msra.mxu0 0.0
    %1173 = vmatprep.subr.mxu0 0.0
    %1174 = vmatpush1.msra.mxu0 0.0
    %1175 = vmatprep.subr.mxu0 0.0
    %1176 = vmatpush1.msra.mxu0 0.0
    %1177 = vmatprep.subr.mxu0 0.0
    %1178 = vmatpush1.msra.mxu0 0.0
    %1179 = vmatprep.mubr.f32.mxu0 0.0
    %1180 = vmatmul.mubr.f32.gmra.mrb[0].mxu0 %v1112
    %v1181 = vpop.f32.mrb[0].mxu0
    %v1182 = vadd.f32 0.0, %v1181
    %v1183 = vpop.f32.mrb[0].mxu0
    %v1184 = vadd.f32 0.0, %v1183
    %1185 = vdwg.mxu0
    %1186 = vmatprep.subr.mxu0 %v86
    %1187 = vmatpush1.msra.mxu0 %v85
    %1188 = vmatprep.subr.mxu0 %v90
    %1189 = vmatpush1.msra.mxu0 %v89
    %1190 = vmatprep.subr.mxu0 %v94
    %1191 = vmatpush1.msra.mxu0 %v93
    %1192 = vmatprep.subr.mxu0 %v98
    %1193 = vmatpush1.msra.mxu0 %v97
    %1194 = vmatprep.subr.mxu0 %v102
    %1195 = vmatpush1.msra.mxu0 %v101
    %1196 = vmatprep.subr.mxu0 %v106
    %1197 = vmatpush1.msra.mxu0 %v105
    %1198 = vmatprep.subr.mxu0 %v110
    %1199 = vmatpush1.msra.mxu0 %v109
    %1200 = vmatprep.subr.mxu0 %v114
    %1201 = vmatpush1.msra.mxu0 %v113
    %1202 = vmatprep.subr.mxu0 %v118
    %1203 = vmatpush1.msra.mxu0 %v117
    %1204 = vmatprep.subr.mxu0 %v122
    %1205 = vmatpush1.msra.mxu0 %v121
    %1206 = vmatprep.subr.mxu0 %v126
    %1207 = vmatpush1.msra.mxu0 %v125
    %1208 = vmatprep.subr.mxu0 %v130
    %1209 = vmatpush1.msra.mxu0 %v129
    %1210 = vmatprep.subr.mxu0 %v134
    %1211 = vmatpush1.msra.mxu0 %v133
    %1212 = vmatprep.subr.mxu0 %v138
    %1213 = vmatpush1.msra.mxu0 %v137
    %1214 = vmatprep.subr.mxu0 %v142
    %1215 = vmatpush1.msra.mxu0 %v141
    %1216 = vmatprep.subr.mxu0 %v146
    %1217 = vmatpush1.msra.mxu0 %v145
    %1218 = vmatprep.subr.mxu0 0.0
    %1219 = vmatpush1.msra.mxu0 0.0
    %1220 = vmatprep.subr.mxu0 0.0
    %1221 = vmatpush1.msra.mxu0 0.0
    %1222 = vmatprep.subr.mxu0 0.0
    %1223 = vmatpush1.msra.mxu0 0.0
    %1224 = vmatprep.subr.mxu0 0.0
    %1225 = vmatpush1.msra.mxu0 0.0
    %1226 = vmatprep.subr.mxu0 0.0
    %1227 = vmatpush1.msra.mxu0 0.0
    %1228 = vmatprep.subr.mxu0 0.0
    %1229 = vmatpush1.msra.mxu0 0.0
    %1230 = vmatprep.subr.mxu0 0.0
    %1231 = vmatpush1.msra.mxu0 0.0
    %1232 = vmatprep.subr.mxu0 0.0
    %1233 = vmatpush1.msra.mxu0 0.0
    %1234 = vmatprep.subr.mxu0 0.0
    %1235 = vmatpush1.msra.mxu0 0.0
    %1236 = vmatprep.subr.mxu0 0.0
    %1237 = vmatpush1.msra.mxu0 0.0
    %1238 = vmatprep.subr.mxu0 0.0
    %1239 = vmatpush1.msra.mxu0 0.0
    %1240 = vmatprep.subr.mxu0 0.0
    %1241 = vmatpush1.msra.mxu0 0.0
    %1242 = vmatprep.subr.mxu0 0.0
    %1243 = vmatpush1.msra.mxu0 0.0
    %1244 = vmatprep.subr.mxu0 0.0
    %1245 = vmatpush1.msra.mxu0 0.0
    %1246 = vmatprep.subr.mxu0 0.0
    %1247 = vmatpush1.msra.mxu0 0.0
    %1248 = vmatprep.subr.mxu0 0.0
    %1249 = vmatpush1.msra.mxu0 0.0
    %1250 = vmatprep.mubr.f32.mxu0 0.0
    %1251 = vmatmul.mubr.f32.gmra.mrb[0].mxu0 %v1112
    %v1252 = vpop.f32.mrb[0].mxu0
    %v1253 = vadd.f32 0.0, %v1252
    %v1254 = vpop.f32.mrb[0].mxu0
    %v1255 = vadd.f32 0.0, %v1254
    %1256 = vdwg.mxu0
    %v1257 = vadd.f32 %v293, %v1182
    %v1258 = vadd.f32 %v295, %v1184
    %v1259 = vadd.f32 %v406, %v1253
    %v1260 = vadd.f32 %v408, %v1255
    %v1261 = vxor.u32 %v1257, 2147483648
    %v1262 = vxor.u32 %v1258, 2147483648
    %v1263 = vxor.u32 %v1259, 2147483648
    %v1264 = vmul.f32 %v1261, 1.442695
    %v1265 = vpow.pop %v1264
    %v1266 = vmul.f32 %v1262, 1.442695
    %v1267 = vpow.pop %v1266
    %v1268 = vmul.f32 %v1263, 1.442695
    %v1269 = vpow.pop %v1268
    %v1270 = vadd.f32 %v1265, 1.0
    %v1271 = vadd.f32 %v1267, 1.0
    %v1272 = vadd.f32 %v1269, 1.0
    %v1273 = vrcp.pop %v1270
    %v1274 = vmul.f32 1.0, %v1273
    %v1275 = vrcp.pop %v1271
    %v1276 = vmul.f32 1.0, %v1275
    %v1277 = vrcp.pop %v1272
    %v1278 = vmul.f32 1.0, %v1277
    %v1279 = vtanh.pop %v1260
    %v1280 = vmul.f32 %v1276, %v1110
    %v1281 = vmul.f32 %v1274, %v1279
    %v1282 = vadd.f32 %v1280, %v1281
    %v1283 = vtanh.pop %v1282
    %v1284 = vmul.f32 %v1278, %v1283
    %s1285 = scalar_lea.vmem [#allocation2], 32
    %1286 = vst [vmem:[%s1285] sm:$0xff] %v1284
    %1287 = vmatprep.subr.mxu0 %v84
    %1288 = vmatpush1.msra.mxu0 %v83
    %1289 = vmatprep.subr.mxu0 %v88
    %1290 = vmatpush1.msra.mxu0 %v87
    %1291 = vmatprep.subr.mxu0 %v92
    %1292 = vmatpush1.msra.mxu0 %v91
    %1293 = vmatprep.subr.mxu0 %v96
    %1294 = vmatpush1.msra.mxu0 %v95
    %1295 = vmatprep.subr.mxu0 %v100
    %1296 = vmatpush1.msra.mxu0 %v99
    %1297 = vmatprep.subr.mxu0 %v104
    %1298 = vmatpush1.msra.mxu0 %v103
    %1299 = vmatprep.subr.mxu0 %v108
    %1300 = vmatpush1.msra.mxu0 %v107
    %1301 = vmatprep.subr.mxu0 %v112
    %1302 = vmatpush1.msra.mxu0 %v111
    %1303 = vmatprep.subr.mxu0 %v116
    %1304 = vmatpush1.msra.mxu0 %v115
    %1305 = vmatprep.subr.mxu0 %v120
    %1306 = vmatpush1.msra.mxu0 %v119
    %1307 = vmatprep.subr.mxu0 %v124
    %1308 = vmatpush1.msra.mxu0 %v123
    %1309 = vmatprep.subr.mxu0 %v128
    %1310 = vmatpush1.msra.mxu0 %v127
    %1311 = vmatprep.subr.mxu0 %v132
    %1312 = vmatpush1.msra.mxu0 %v131
    %1313 = vmatprep.subr.mxu0 %v136
    %1314 = vmatpush1.msra.mxu0 %v135
    %1315 = vmatprep.subr.mxu0 %v140
    %1316 = vmatpush1.msra.mxu0 %v139
    %1317 = vmatprep.subr.mxu0 %v144
    %1318 = vmatpush1.msra.mxu0 %v143
    %1319 = vmatprep.subr.mxu0 0.0
    %1320 = vmatpush1.msra.mxu0 0.0
    %1321 = vmatprep.subr.mxu0 0.0
    %1322 = vmatpush1.msra.mxu0 0.0
    %1323 = vmatprep.subr.mxu0 0.0
    %1324 = vmatpush1.msra.mxu0 0.0
    %1325 = vmatprep.subr.mxu0 0.0
    %1326 = vmatpush1.msra.mxu0 0.0
    %1327 = vmatprep.subr.mxu0 0.0
    %1328 = vmatpush1.msra.mxu0 0.0
    %1329 = vmatprep.subr.mxu0 0.0
    %1330 = vmatpush1.msra.mxu0 0.0
    %1331 = vmatprep.subr.mxu0 0.0
    %1332 = vmatpush1.msra.mxu0 0.0
    %1333 = vmatprep.subr.mxu0 0.0
    %1334 = vmatpush1.msra.mxu0 0.0
    %1335 = vmatprep.subr.mxu0 0.0
    %1336 = vmatpush1.msra.mxu0 0.0
    %1337 = vmatprep.subr.mxu0 0.0
    %1338 = vmatpush1.msra.mxu0 0.0
    %1339 = vmatprep.subr.mxu0 0.0
    %1340 = vmatpush1.msra.mxu0 0.0
    %1341 = vmatprep.subr.mxu0 0.0
    %1342 = vmatpush1.msra.mxu0 0.0
    %1343 = vmatprep.subr.mxu0 0.0
    %1344 = vmatpush1.msra.mxu0 0.0
    %1345 = vmatprep.subr.mxu0 0.0
    %1346 = vmatpush1.msra.mxu0 0.0
    %1347 = vmatprep.subr.mxu0 0.0
    %1348 = vmatpush1.msra.mxu0 0.0
    %1349 = vmatprep.subr.mxu0 0.0
    %1350 = vmatpush1.msra.mxu0 0.0
    %1351 = vmatprep.mubr.f32.mxu0 0.0
    %1352 = vmatmul.mubr.f32.gmra.mrb[0].mxu0 %v1284
    %v1353 = vpop.f32.mrb[0].mxu0
    %v1354 = vadd.f32 0.0, %v1353
    %v1355 = vpop.f32.mrb[0].mxu0
    %v1356 = vadd.f32 0.0, %v1355
    %1357 = vdwg.mxu0
    %1358 = vmatprep.subr.mxu0 %v86
    %1359 = vmatpush1.msra.mxu0 %v85
    %1360 = vmatprep.subr.mxu0 %v90
    %1361 = vmatpush1.msra.mxu0 %v89
    %1362 = vmatprep.subr.mxu0 %v94
    %1363 = vmatpush1.msra.mxu0 %v93
    %1364 = vmatprep.subr.mxu0 %v98
    %1365 = vmatpush1.msra.mxu0 %v97
    %1366 = vmatprep.subr.mxu0 %v102
    %1367 = vmatpush1.msra.mxu0 %v101
    %1368 = vmatprep.subr.mxu0 %v106
    %1369 = vmatpush1.msra.mxu0 %v105
    %1370 = vmatprep.subr.mxu0 %v110
    %1371 = vmatpush1.msra.mxu0 %v109
    %1372 = vmatprep.subr.mxu0 %v114
    %1373 = vmatpush1.msra.mxu0 %v113
    %1374 = vmatprep.subr.mxu0 %v118
    %1375 = vmatpush1.msra.mxu0 %v117
    %1376 = vmatprep.subr.mxu0 %v122
    %1377 = vmatpush1.msra.mxu0 %v121
    %1378 = vmatprep.subr.mxu0 %v126
    %1379 = vmatpush1.msra.mxu0 %v125
    %1380 = vmatprep.subr.mxu0 %v130
    %1381 = vmatpush1.msra.mxu0 %v129
    %1382 = vmatprep.subr.mxu0 %v134
    %1383 = vmatpush1.msra.mxu0 %v133
    %1384 = vmatprep.subr.mxu0 %v138
    %1385 = vmatpush1.msra.mxu0 %v137
    %1386 = vmatprep.subr.mxu0 %v142
    %1387 = vmatpush1.msra.mxu0 %v141
    %1388 = vmatprep.subr.mxu0 %v146
    %1389 = vmatpush1.msra.mxu0 %v145
    %1390 = vmatprep.subr.mxu0 0.0
    %1391 = vmatpush1.msra.mxu0 0.0
    %1392 = vmatprep.subr.mxu0 0.0
    %1393 = vmatpush1.msra.mxu0 0.0
    %1394 = vmatprep.subr.mxu0 0.0
    %1395 = vmatpush1.msra.mxu0 0.0
    %1396 = vmatprep.subr.mxu0 0.0
    %1397 = vmatpush1.msra.mxu0 0.0
    %1398 = vmatprep.subr.mxu0 0.0
    %1399 = vmatpush1.msra.mxu0 0.0
    %1400 = vmatprep.subr.mxu0 0.0
    %1401 = vmatpush1.msra.mxu0 0.0
    %1402 = vmatprep.subr.mxu0 0.0
    %1403 = vmatpush1.msra.mxu0 0.0
    %1404 = vmatprep.subr.mxu0 0.0
    %1405 = vmatpush1.msra.mxu0 0.0
    %1406 = vmatprep.subr.mxu0 0.0
    %1407 = vmatpush1.msra.mxu0 0.0
    %1408 = vmatprep.subr.mxu0 0.0
    %1409 = vmatpush1.msra.mxu0 0.0
    %1410 = vmatprep.subr.mxu0 0.0
    %1411 = vmatpush1.msra.mxu0 0.0
    %1412 = vmatprep.subr.mxu0 0.0
    %1413 = vmatpush1.msra.mxu0 0.0
    %1414 = vmatprep.subr.mxu0 0.0
    %1415 = vmatpush1.msra.mxu0 0.0
    %1416 = vmatprep.subr.mxu0 0.0
    %1417 = vmatpush1.msra.mxu0 0.0
    %1418 = vmatprep.subr.mxu0 0.0
    %1419 = vmatpush1.msra.mxu0 0.0
    %1420 = vmatprep.subr.mxu0 0.0
    %1421 = vmatpush1.msra.mxu0 0.0
    %1422 = vmatprep.mubr.f32.mxu0 0.0
    %1423 = vmatmul.mubr.f32.gmra.mrb[0].mxu0 %v1284
    %v1424 = vpop.f32.mrb[0].mxu0
    %v1425 = vadd.f32 0.0, %v1424
    %v1426 = vpop.f32.mrb[0].mxu0
    %v1427 = vadd.f32 0.0, %v1426
    %1428 = vdwg.mxu0
    %v1429 = vadd.f32 %v299, %v1354
    %v1430 = vadd.f32 %v301, %v1356
    %v1431 = vadd.f32 %v412, %v1425
    %v1432 = vadd.f32 %v414, %v1427
    %v1433 = vxor.u32 %v1429, 2147483648
    %v1434 = vxor.u32 %v1430, 2147483648
    %v1435 = vxor.u32 %v1431, 2147483648
    %v1436 = vmul.f32 %v1433, 1.442695
    %v1437 = vpow.pop %v1436
    %v1438 = vmul.f32 %v1434, 1.442695
    %v1439 = vpow.pop %v1438
    %v1440 = vmul.f32 %v1435, 1.442695
    %v1441 = vpow.pop %v1440
    %v1442 = vadd.f32 %v1437, 1.0
    %v1443 = vadd.f32 %v1439, 1.0
    %v1444 = vadd.f32 %v1441, 1.0
    %v1445 = vrcp.pop %v1442
    %v1446 = vmul.f32 1.0, %v1445
    %v1447 = vrcp.pop %v1443
    %v1448 = vmul.f32 1.0, %v1447
    %v1449 = vrcp.pop %v1444
    %v1450 = vmul.f32 1.0, %v1449
    %v1451 = vtanh.pop %v1432
    %v1452 = vmul.f32 %v1448, %v1282
    %v1453 = vmul.f32 %v1446, %v1451
    %v1454 = vadd.f32 %v1452, %v1453
    %v1455 = vtanh.pop %v1454
    %v1456 = vmul.f32 %v1450, %v1455
    %s1457 = scalar_lea.vmem [#allocation2], 40
    %1458 = vst [vmem:[%s1457] sm:$0xff] %v1456
    %1459 = vmatprep.subr.mxu0 %v84
    %1460 = vmatpush1.msra.mxu0 %v83
    %1461 = vmatprep.subr.mxu0 %v88
    %1462 = vmatpush1.msra.mxu0 %v87
    %1463 = vmatprep.subr.mxu0 %v92
    %1464 = vmatpush1.msra.mxu0 %v91
    %1465 = vmatprep.subr.mxu0 %v96
    %1466 = vmatpush1.msra.mxu0 %v95
    %1467 = vmatprep.subr.mxu0 %v100
    %1468 = vmatpush1.msra.mxu0 %v99
    %1469 = vmatprep.subr.mxu0 %v104
    %1470 = vmatpush1.msra.mxu0 %v103
    %1471 = vmatprep.subr.mxu0 %v108
    %1472 = vmatpush1.msra.mxu0 %v107
    %1473 = vmatprep.subr.mxu0 %v112
    %1474 = vmatpush1.msra.mxu0 %v111
    %1475 = vmatprep.subr.mxu0 %v116
    %1476 = vmatpush1.msra.mxu0 %v115
    %1477 = vmatprep.subr.mxu0 %v120
    %1478 = vmatpush1.msra.mxu0 %v119
    %1479 = vmatprep.subr.mxu0 %v124
    %1480 = vmatpush1.msra.mxu0 %v123
    %1481 = vmatprep.subr.mxu0 %v128
    %1482 = vmatpush1.msra.mxu0 %v127
    %1483 = vmatprep.subr.mxu0 %v132
    %1484 = vmatpush1.msra.mxu0 %v131
    %1485 = vmatprep.subr.mxu0 %v136
    %1486 = vmatpush1.msra.mxu0 %v135
    %1487 = vmatprep.subr.mxu0 %v140
    %1488 = vmatpush1.msra.mxu0 %v139
    %1489 = vmatprep.subr.mxu0 %v144
    %1490 = vmatpush1.msra.mxu0 %v143
    %1491 = vmatprep.subr.mxu0 0.0
    %1492 = vmatpush1.msra.mxu0 0.0
    %1493 = vmatprep.subr.mxu0 0.0
    %1494 = vmatpush1.msra.mxu0 0.0
    %1495 = vmatprep.subr.mxu0 0.0
    %1496 = vmatpush1.msra.mxu0 0.0
    %1497 = vmatprep.subr.mxu0 0.0
    %1498 = vmatpush1.msra.mxu0 0.0
    %1499 = vmatprep.subr.mxu0 0.0
    %1500 = vmatpush1.msra.mxu0 0.0
    %1501 = vmatprep.subr.mxu0 0.0
    %1502 = vmatpush1.msra.mxu0 0.0
    %1503 = vmatprep.subr.mxu0 0.0
    %1504 = vmatpush1.msra.mxu0 0.0
    %1505 = vmatprep.subr.mxu0 0.0
    %1506 = vmatpush1.msra.mxu0 0.0
    %1507 = vmatprep.subr.mxu0 0.0
    %1508 = vmatpush1.msra.mxu0 0.0
    %1509 = vmatprep.subr.mxu0 0.0
    %1510 = vmatpush1.msra.mxu0 0.0
    %1511 = vmatprep.subr.mxu0 0.0
    %1512 = vmatpush1.msra.mxu0 0.0
    %1513 = vmatprep.subr.mxu0 0.0
    %1514 = vmatpush1.msra.mxu0 0.0
    %1515 = vmatprep.subr.mxu0 0.0
    %1516 = vmatpush1.msra.mxu0 0.0
    %1517 = vmatprep.subr.mxu0 0.0
    %1518 = vmatpush1.msra.mxu0 0.0
    %1519 = vmatprep.subr.mxu0 0.0
    %1520 = vmatpush1.msra.mxu0 0.0
    %1521 = vmatprep.subr.mxu0 0.0
    %1522 = vmatpush1.msra.mxu0 0.0
    %1523 = vmatprep.mubr.f32.mxu0 0.0
    %1524 = vmatmul.mubr.f32.gmra.mrb[0].mxu0 %v1456
    %v1525 = vpop.f32.mrb[0].mxu0
    %v1526 = vadd.f32 0.0, %v1525
    %v1527 = vpop.f32.mrb[0].mxu0
    %v1528 = vadd.f32 0.0, %v1527
    %1529 = vdwg.mxu0
    %1530 = vmatprep.subr.mxu0 %v86
    %1531 = vmatpush1.msra.mxu0 %v85
    %1532 = vmatprep.subr.mxu0 %v90
    %1533 = vmatpush1.msra.mxu0 %v89
    %1534 = vmatprep.subr.mxu0 %v94
    %1535 = vmatpush1.msra.mxu0 %v93
    %1536 = vmatprep.subr.mxu0 %v98
    %1537 = vmatpush1.msra.mxu0 %v97
    %1538 = vmatprep.subr.mxu0 %v102
    %1539 = vmatpush1.msra.mxu0 %v101
    %1540 = vmatprep.subr.mxu0 %v106
    %1541 = vmatpush1.msra.mxu0 %v105
    %1542 = vmatprep.subr.mxu0 %v110
    %1543 = vmatpush1.msra.mxu0 %v109
    %1544 = vmatprep.subr.mxu0 %v114
    %1545 = vmatpush1.msra.mxu0 %v113
    %1546 = vmatprep.subr.mxu0 %v118
    %1547 = vmatpush1.msra.mxu0 %v117
    %1548 = vmatprep.subr.mxu0 %v122
    %1549 = vmatpush1.msra.mxu0 %v121
    %1550 = vmatprep.subr.mxu0 %v126
    %1551 = vmatpush1.msra.mxu0 %v125
    %1552 = vmatprep.subr.mxu0 %v130
    %1553 = vmatpush1.msra.mxu0 %v129
    %1554 = vmatprep.subr.mxu0 %v134
    %1555 = vmatpush1.msra.mxu0 %v133
    %1556 = vmatprep.subr.mxu0 %v138
    %1557 = vmatpush1.msra.mxu0 %v137
    %1558 = vmatprep.subr.mxu0 %v142
    %1559 = vmatpush1.msra.mxu0 %v141
    %1560 = vmatprep.subr.mxu0 %v146
    %1561 = vmatpush1.msra.mxu0 %v145
    %1562 = vmatprep.subr.mxu0 0.0
    %1563 = vmatpush1.msra.mxu0 0.0
    %1564 = vmatprep.subr.mxu0 0.0
    %1565 = vmatpush1.msra.mxu0 0.0
    %1566 = vmatprep.subr.mxu0 0.0
    %1567 = vmatpush1.msra.mxu0 0.0
    %1568 = vmatprep.subr.mxu0 0.0
    %1569 = vmatpush1.msra.mxu0 0.0
    %1570 = vmatprep.subr.mxu0 0.0
    %1571 = vmatpush1.msra.mxu0 0.0
    %1572 = vmatprep.subr.mxu0 0.0
    %1573 = vmatpush1.msra.mxu0 0.0
    %1574 = vmatprep.subr.mxu0 0.0
    %1575 = vmatpush1.msra.mxu0 0.0
    %1576 = vmatprep.subr.mxu0 0.0
    %1577 = vmatpush1.msra.mxu0 0.0
    %1578 = vmatprep.subr.mxu0 0.0
    %1579 = vmatpush1.msra.mxu0 0.0
    %1580 = vmatprep.subr.mxu0 0.0
    %1581 = vmatpush1.msra.mxu0 0.0
    %1582 = vmatprep.subr.mxu0 0.0
    %1583 = vmatpush1.msra.mxu0 0.0
    %1584 = vmatprep.subr.mxu0 0.0
    %1585 = vmatpush1.msra.mxu0 0.0
    %1586 = vmatprep.subr.mxu0 0.0
    %1587 = vmatpush1.msra.mxu0 0.0
    %1588 = vmatprep.subr.mxu0 0.0
    %1589 = vmatpush1.msra.mxu0 0.0
    %1590 = vmatprep.subr.mxu0 0.0
    %1591 = vmatpush1.msra.mxu0 0.0
    %1592 = vmatprep.subr.mxu0 0.0
    %1593 = vmatpush1.msra.mxu0 0.0
    %1594 = vmatprep.mubr.f32.mxu0 0.0
    %1595 = vmatmul.mubr.f32.gmra.mrb[0].mxu0 %v1456
    %v1596 = vpop.f32.mrb[0].mxu0
    %v1597 = vadd.f32 0.0, %v1596
    %v1598 = vpop.f32.mrb[0].mxu0
    %v1599 = vadd.f32 0.0, %v1598
    %1600 = vdwg.mxu0
    %v1601 = vadd.f32 %v305, %v1526
    %v1602 = vadd.f32 %v307, %v1528
    %v1603 = vadd.f32 %v418, %v1597
    %v1604 = vadd.f32 %v420, %v1599
    %v1605 = vxor.u32 %v1601, 2147483648
    %v1606 = vxor.u32 %v1602, 2147483648
    %v1607 = vxor.u32 %v1603, 2147483648
    %v1608 = vmul.f32 %v1605, 1.442695
    %v1609 = vpow.pop %v1608
    %v1610 = vmul.f32 %v1606, 1.442695
    %v1611 = vpow.pop %v1610
    %v1612 = vmul.f32 %v1607, 1.442695
    %v1613 = vpow.pop %v1612
    %v1614 = vadd.f32 %v1609, 1.0
    %v1615 = vadd.f32 %v1611, 1.0
    %v1616 = vadd.f32 %v1613, 1.0
    %v1617 = vrcp.pop %v1614
    %v1618 = vmul.f32 1.0, %v1617
    %v1619 = vrcp.pop %v1615
    %v1620 = vmul.f32 1.0, %v1619
    %v1621 = vrcp.pop %v1616
    %v1622 = vmul.f32 1.0, %v1621
    %v1623 = vtanh.pop %v1604
    %v1624 = vmul.f32 %v1620, %v1454
    %v1625 = vmul.f32 %v1618, %v1623
    %v1626 = vadd.f32 %v1624, %v1625
    %v1627 = vtanh.pop %v1626
    %v1628 = vmul.f32 %v1622, %v1627
    %s1629 = scalar_lea.vmem [#allocation2], 48
    %1630 = vst [vmem:[%s1629] sm:$0xff] %v1628
    %1631 = vmatprep.subr.mxu0 %v84
    %1632 = vmatpush1.msra.mxu0 %v83
    %1633 = vmatprep.subr.mxu0 %v88
    %1634 = vmatpush1.msra.mxu0 %v87
    %1635 = vmatprep.subr.mxu0 %v92
    %1636 = vmatpush1.msra.mxu0 %v91
    %1637 = vmatprep.subr.mxu0 %v96
    %1638 = vmatpush1.msra.mxu0 %v95
    %1639 = vmatprep.subr.mxu0 %v100
    %1640 = vmatpush1.msra.mxu0 %v99
    %1641 = vmatprep.subr.mxu0 %v104
    %1642 = vmatpush1.msra.mxu0 %v103
    %1643 = vmatprep.subr.mxu0 %v108
    %1644 = vmatpush1.msra.mxu0 %v107
    %1645 = vmatprep.subr.mxu0 %v112
    %1646 = vmatpush1.msra.mxu0 %v111
    %1647 = vmatprep.subr.mxu0 %v116
    %1648 = vmatpush1.msra.mxu0 %v115
    %1649 = vmatprep.subr.mxu0 %v120
    %1650 = vmatpush1.msra.mxu0 %v119
    %1651 = vmatprep.subr.mxu0 %v124
    %1652 = vmatpush1.msra.mxu0 %v123
    %1653 = vmatprep.subr.mxu0 %v128
    %1654 = vmatpush1.msra.mxu0 %v127
    %1655 = vmatprep.subr.mxu0 %v132
    %1656 = vmatpush1.msra.mxu0 %v131
    %1657 = vmatprep.subr.mxu0 %v136
    %1658 = vmatpush1.msra.mxu0 %v135
    %1659 = vmatprep.subr.mxu0 %v140
    %1660 = vmatpush1.msra.mxu0 %v139
    %1661 = vmatprep.subr.mxu0 %v144
    %1662 = vmatpush1.msra.mxu0 %v143
    %1663 = vmatprep.subr.mxu0 0.0
    %1664 = vmatpush1.msra.mxu0 0.0
    %1665 = vmatprep.subr.mxu0 0.0
    %1666 = vmatpush1.msra.mxu0 0.0
    %1667 = vmatprep.subr.mxu0 0.0
    %1668 = vmatpush1.msra.mxu0 0.0
    %1669 = vmatprep.subr.mxu0 0.0
    %1670 = vmatpush1.msra.mxu0 0.0
    %1671 = vmatprep.subr.mxu0 0.0
    %1672 = vmatpush1.msra.mxu0 0.0
    %1673 = vmatprep.subr.mxu0 0.0
    %1674 = vmatpush1.msra.mxu0 0.0
    %1675 = vmatprep.subr.mxu0 0.0
    %1676 = vmatpush1.msra.mxu0 0.0
    %1677 = vmatprep.subr.mxu0 0.0
    %1678 = vmatpush1.msra.mxu0 0.0
    %1679 = vmatprep.subr.mxu0 0.0
    %1680 = vmatpush1.msra.mxu0 0.0
    %1681 = vmatprep.subr.mxu0 0.0
    %1682 = vmatpush1.msra.mxu0 0.0
    %1683 = vmatprep.subr.mxu0 0.0
    %1684 = vmatpush1.msra.mxu0 0.0
    %1685 = vmatprep.subr.mxu0 0.0
    %1686 = vmatpush1.msra.mxu0 0.0
    %1687 = vmatprep.subr.mxu0 0.0
    %1688 = vmatpush1.msra.mxu0 0.0
    %1689 = vmatprep.subr.mxu0 0.0
    %1690 = vmatpush1.msra.mxu0 0.0
    %1691 = vmatprep.subr.mxu0 0.0
    %1692 = vmatpush1.msra.mxu0 0.0
    %1693 = vmatprep.subr.mxu0 0.0
    %1694 = vmatpush1.msra.mxu0 0.0
    %1695 = vmatprep.mubr.f32.mxu0 0.0
    %1696 = vmatmul.mubr.f32.gmra.mrb[0].mxu0 %v1628
    %v1697 = vpop.f32.mrb[0].mxu0
    %v1698 = vadd.f32 0.0, %v1697
    %v1699 = vpop.f32.mrb[0].mxu0
    %v1700 = vadd.f32 0.0, %v1699
    %1701 = vdwg.mxu0
    %1702 = vmatprep.subr.mxu0 %v86
    %1703 = vmatpush1.msra.mxu0 %v85
    %1704 = vmatprep.subr.mxu0 %v90
    %1705 = vmatpush1.msra.mxu0 %v89
    %1706 = vmatprep.subr.mxu0 %v94
    %1707 = vmatpush1.msra.mxu0 %v93
    %1708 = vmatprep.subr.mxu0 %v98
    %1709 = vmatpush1.msra.mxu0 %v97
    %1710 = vmatprep.subr.mxu0 %v102
    %1711 = vmatpush1.msra.mxu0 %v101
    %1712 = vmatprep.subr.mxu0 %v106
    %1713 = vmatpush1.msra.mxu0 %v105
    %1714 = vmatprep.subr.mxu0 %v110
    %1715 = vmatpush1.msra.mxu0 %v109
    %1716 = vmatprep.subr.mxu0 %v114
    %1717 = vmatpush1.msra.mxu0 %v113
    %1718 = vmatprep.subr.mxu0 %v118
    %1719 = vmatpush1.msra.mxu0 %v117
    %1720 = vmatprep.subr.mxu0 %v122
    %1721 = vmatpush1.msra.mxu0 %v121
    %1722 = vmatprep.subr.mxu0 %v126
    %1723 = vmatpush1.msra.mxu0 %v125
    %1724 = vmatprep.subr.mxu0 %v130
    %1725 = vmatpush1.msra.mxu0 %v129
    %1726 = vmatprep.subr.mxu0 %v134
    %1727 = vmatpush1.msra.mxu0 %v133
    %1728 = vmatprep.subr.mxu0 %v138
    %1729 = vmatpush1.msra.mxu0 %v137
    %1730 = vmatprep.subr.mxu0 %v142
    %1731 = vmatpush1.msra.mxu0 %v141
    %1732 = vmatprep.subr.mxu0 %v146
    %1733 = vmatpush1.msra.mxu0 %v145
    %1734 = vmatprep.subr.mxu0 0.0
    %1735 = vmatpush1.msra.mxu0 0.0
    %1736 = vmatprep.subr.mxu0 0.0
    %1737 = vmatpush1.msra.mxu0 0.0
    %1738 = vmatprep.subr.mxu0 0.0
    %1739 = vmatpush1.msra.mxu0 0.0
    %1740 = vmatprep.subr.mxu0 0.0
    %1741 = vmatpush1.msra.mxu0 0.0
    %1742 = vmatprep.subr.mxu0 0.0
    %1743 = vmatpush1.msra.mxu0 0.0
    %1744 = vmatprep.subr.mxu0 0.0
    %1745 = vmatpush1.msra.mxu0 0.0
    %1746 = vmatprep.subr.mxu0 0.0
    %1747 = vmatpush1.msra.mxu0 0.0
    %1748 = vmatprep.subr.mxu0 0.0
    %1749 = vmatpush1.msra.mxu0 0.0
    %1750 = vmatprep.subr.mxu0 0.0
    %1751 = vmatpush1.msra.mxu0 0.0
    %1752 = vmatprep.subr.mxu0 0.0
    %1753 = vmatpush1.msra.mxu0 0.0
    %1754 = vmatprep.subr.mxu0 0.0
    %1755 = vmatpush1.msra.mxu0 0.0
    %1756 = vmatprep.subr.mxu0 0.0
    %1757 = vmatpush1.msra.mxu0 0.0
    %1758 = vmatprep.subr.mxu0 0.0
    %1759 = vmatpush1.msra.mxu0 0.0
    %1760 = vmatprep.subr.mxu0 0.0
    %1761 = vmatpush1.msra.mxu0 0.0
    %1762 = vmatprep.subr.mxu0 0.0
    %1763 = vmatpush1.msra.mxu0 0.0
    %1764 = vmatprep.subr.mxu0 0.0
    %1765 = vmatpush1.msra.mxu0 0.0
    %1766 = vmatprep.mubr.f32.mxu0 0.0
    %1767 = vmatmul.mubr.f32.gmra.mrb[0].mxu0 %v1628
    %v1768 = vpop.f32.mrb[0].mxu0
    %v1769 = vadd.f32 0.0, %v1768
    %v1770 = vpop.f32.mrb[0].mxu0
    %v1771 = vadd.f32 0.0, %v1770
    %1772 = vdwg.mxu0
    %v1773 = vadd.f32 %v311, %v1698
    %v1774 = vadd.f32 %v313, %v1700
    %v1775 = vadd.f32 %v424, %v1769
    %v1776 = vadd.f32 %v426, %v1771
    %v1777 = vxor.u32 %v1773, 2147483648
    %v1778 = vxor.u32 %v1774, 2147483648
    %v1779 = vxor.u32 %v1775, 2147483648
    %v1780 = vmul.f32 %v1777, 1.442695
    %v1781 = vpow.pop %v1780
    %v1782 = vmul.f32 %v1778, 1.442695
    %v1783 = vpow.pop %v1782
    %v1784 = vmul.f32 %v1779, 1.442695
    %v1785 = vpow.pop %v1784
    %v1786 = vadd.f32 %v1781, 1.0
    %v1787 = vadd.f32 %v1783, 1.0
    %v1788 = vadd.f32 %v1785, 1.0
    %v1789 = vrcp.pop %v1786
    %v1790 = vmul.f32 1.0, %v1789
    %v1791 = vrcp.pop %v1787
    %v1792 = vmul.f32 1.0, %v1791
    %v1793 = vrcp.pop %v1788
    %v1794 = vmul.f32 1.0, %v1793
    %v1795 = vtanh.pop %v1776
    %v1796 = vmul.f32 %v1792, %v1626
    %v1797 = vmul.f32 %v1790, %v1795
    %v1798 = vadd.f32 %v1796, %v1797
    %v1799 = vtanh.pop %v1798
    %v1800 = vmul.f32 %v1794, %v1799
    %s1801 = scalar_lea.vmem [#allocation2], 56
    %1802 = vst [vmem:[%s1801] sm:$0xff] %v1800
    %v1803 = vld [vmem:[#allocation6] sm:$0xff]
    %v1804 = vld [vmem:[#allocation6 + $0x8] sm:$0xff]
    %v1805 = vld [vmem:[#allocation6 + $0x10] sm:$0xff]
    %v1806 = vld [vmem:[#allocation6 + $0x18] sm:$0xff]
    %v1807 = vld [vmem:[#allocation6 + $0x20] sm:$0xff]
    %v1808 = vld [vmem:[#allocation6 + $0x28] sm:$0xff]
    %v1809 = vld [vmem:[#allocation6 + $0x30] sm:$0xff]
    %v1810 = vld [vmem:[#allocation6 + $0x38] sm:$0xff]
    %v1811 = vld [vmem:[#allocation6 + $0x40] sm:$0xff]
    %v1812 = vld [vmem:[#allocation6 + $0x48] sm:$0xff]
    %v1813 = vld [vmem:[#allocation6 + $0x50] sm:$0xff]
    %v1814 = vld [vmem:[#allocation6 + $0x58] sm:$0xff]
    %v1815 = vld [vmem:[#allocation6 + $0x60] sm:$0xff]
    %v1816 = vld [vmem:[#allocation6 + $0x68] sm:$0xff]
    %v1817 = vld [vmem:[#allocation6 + $0x70] sm:$0xff]
    %v1818 = vld [vmem:[#allocation6 + $0x78] sm:$0xff]
    %v1819 = vld [vmem:[#allocation6 + $0x80] sm:$0xff]
    %v1820 = vld [vmem:[#allocation6 + $0x88] sm:$0xff]
    %v1821 = vld [vmem:[#allocation6 + $0x90] sm:$0xff]
    %v1822 = vld [vmem:[#allocation6 + $0x98] sm:$0xff]
    %v1823 = vld [vmem:[#allocation6 + $0xa0] sm:$0xff]
    %v1824 = vld [vmem:[#allocation6 + $0xa8] sm:$0xff]
    %v1825 = vld [vmem:[#allocation6 + $0xb0] sm:$0xff]
    %v1826 = vld [vmem:[#allocation6 + $0xb8] sm:$0xff]
    %v1827 = vld [vmem:[#allocation6 + $0xc0] sm:$0xff]
    %v1828 = vld [vmem:[#allocation6 + $0xc8] sm:$0xff]
    %v1829 = vld [vmem:[#allocation6 + $0xd0] sm:$0xff]
    %v1830 = vld [vmem:[#allocation6 + $0xd8] sm:$0xff]
    %v1831 = vld [vmem:[#allocation6 + $0xe0] sm:$0xff]
    %v1832 = vld [vmem:[#allocation6 + $0xe8] sm:$0xff]
    %v1833 = vld [vmem:[#allocation6 + $0xf0] sm:$0xff]
    %v1834 = vld [vmem:[#allocation6 + $0xf8] sm:$0xff]
    %v1835 = vld [vmem:[#allocation6 + $0x100] sm:$0xff]
    %v1836 = vld [vmem:[#allocation6 + $0x108] sm:$0xff]
    %v1837 = vld [vmem:[#allocation6 + $0x110] sm:$0xff]
    %v1838 = vld [vmem:[#allocation6 + $0x118] sm:$0xff]
    %v1839 = vld [vmem:[#allocation6 + $0x120] sm:$0xff]
    %v1840 = vld [vmem:[#allocation6 + $0x128] sm:$0xff]
    %v1841 = vld [vmem:[#allocation6 + $0x130] sm:$0xff]
    %v1842 = vld [vmem:[#allocation6 + $0x138] sm:$0xff]
    %v1843 = vld [vmem:[#allocation6 + $0x140] sm:$0xff]
    %v1844 = vld [vmem:[#allocation6 + $0x148] sm:$0xff]
    %v1845 = vld [vmem:[#allocation6 + $0x150] sm:$0xff]
    %v1846 = vld [vmem:[#allocation6 + $0x158] sm:$0xff]
    %v1847 = vld [vmem:[#allocation6 + $0x160] sm:$0xff]
    %v1848 = vld [vmem:[#allocation6 + $0x168] sm:$0xff]
    %v1849 = vld [vmem:[#allocation6 + $0x170] sm:$0xff]
    %v1850 = vld [vmem:[#allocation6 + $0x178] sm:$0xff]
    %v1851 = vld [vmem:[#allocation6 + $0x180] sm:$0xff]
    %v1852 = vld [vmem:[#allocation6 + $0x188] sm:$0xff]
    %v1853 = vld [vmem:[#allocation6 + $0x190] sm:$0xff]
    %v1854 = vld [vmem:[#allocation6 + $0x198] sm:$0xff]
    %v1855 = vld [vmem:[#allocation6 + $0x1a0] sm:$0xff]
    %v1856 = vld [vmem:[#allocation6 + $0x1a8] sm:$0xff]
    %v1857 = vld [vmem:[#allocation6 + $0x1b0] sm:$0xff]
    %v1858 = vld [vmem:[#allocation6 + $0x1b8] sm:$0xff]
    %v1859 = vld [vmem:[#allocation6 + $0x1c0] sm:$0xff]
    %v1860 = vld [vmem:[#allocation6 + $0x1c8] sm:$0xff]
    %v1861 = vld [vmem:[#allocation6 + $0x1d0] sm:$0xff]
    %v1862 = vld [vmem:[#allocation6 + $0x1d8] sm:$0xff]
    %v1863 = vld [vmem:[#allocation6 + $0x1e0] sm:$0xff]
    %v1864 = vld [vmem:[#allocation6 + $0x1e8] sm:$0xff]
    %v1865 = vld [vmem:[#allocation6 + $0x1f0] sm:$0xff]
    %v1866 = vld [vmem:[#allocation6 + $0x1f8] sm:$0xff]
    %v1867 = vld [vmem:[#allocation8] sm:$0xff]
    %v1868 = vld [vmem:[#allocation8 + $0x8] sm:$0xff]
    %v1869 = vld [vmem:[#allocation8 + $0x10] sm:$0xff]
    %v1870 = vld [vmem:[#allocation8 + $0x18] sm:$0xff]
    %v1871 = vld [vmem:[#allocation8 + $0x20] sm:$0xff]
    %v1872 = vld [vmem:[#allocation8 + $0x28] sm:$0xff]
    %v1873 = vld [vmem:[#allocation8 + $0x30] sm:$0xff]
    %v1874 = vld [vmem:[#allocation8 + $0x38] sm:$0xff]
    %v1875 = vld [vmem:[#allocation8 + $0x40] sm:$0xff]
    %v1876 = vld [vmem:[#allocation8 + $0x48] sm:$0xff]
    %v1877 = vld [vmem:[#allocation8 + $0x50] sm:$0xff]
    %v1878 = vld [vmem:[#allocation8 + $0x58] sm:$0xff]
    %v1879 = vld [vmem:[#allocation8 + $0x60] sm:$0xff]
    %v1880 = vld [vmem:[#allocation8 + $0x68] sm:$0xff]
    %v1881 = vld [vmem:[#allocation8 + $0x70] sm:$0xff]
    %v1882 = vld [vmem:[#allocation8 + $0x78] sm:$0xff]
    %v1883 = vld [vmem:[#allocation8 + $0x80] sm:$0xff]
    %v1884 = vld [vmem:[#allocation8 + $0x88] sm:$0xff]
    %v1885 = vld [vmem:[#allocation8 + $0x90] sm:$0xff]
    %v1886 = vld [vmem:[#allocation8 + $0x98] sm:$0xff]
    %v1887 = vld [vmem:[#allocation8 + $0xa0] sm:$0xff]
    %v1888 = vld [vmem:[#allocation8 + $0xa8] sm:$0xff]
    %v1889 = vld [vmem:[#allocation8 + $0xb0] sm:$0xff]
    %v1890 = vld [vmem:[#allocation8 + $0xb8] sm:$0xff]
    %v1891 = vld [vmem:[#allocation8 + $0xc0] sm:$0xff]
    %v1892 = vld [vmem:[#allocation8 + $0xc8] sm:$0xff]
    %v1893 = vld [vmem:[#allocation8 + $0xd0] sm:$0xff]
    %v1894 = vld [vmem:[#allocation8 + $0xd8] sm:$0xff]
    %v1895 = vld [vmem:[#allocation8 + $0xe0] sm:$0xff]
    %v1896 = vld [vmem:[#allocation8 + $0xe8] sm:$0xff]
    %v1897 = vld [vmem:[#allocation8 + $0xf0] sm:$0xff]
    %v1898 = vld [vmem:[#allocation8 + $0xf8] sm:$0xff]
    %v1899 = vld [vmem:[#allocation8 + $0x100] sm:$0xff]
    %v1900 = vld [vmem:[#allocation8 + $0x108] sm:$0xff]
    %v1901 = vld [vmem:[#allocation8 + $0x110] sm:$0xff]
    %v1902 = vld [vmem:[#allocation8 + $0x118] sm:$0xff]
    %v1903 = vld [vmem:[#allocation8 + $0x120] sm:$0xff]
    %v1904 = vld [vmem:[#allocation8 + $0x128] sm:$0xff]
    %v1905 = vld [vmem:[#allocation8 + $0x130] sm:$0xff]
    %v1906 = vld [vmem:[#allocation8 + $0x138] sm:$0xff]
    %v1907 = vld [vmem:[#allocation8 + $0x140] sm:$0xff]
    %v1908 = vld [vmem:[#allocation8 + $0x148] sm:$0xff]
    %v1909 = vld [vmem:[#allocation8 + $0x150] sm:$0xff]
    %v1910 = vld [vmem:[#allocation8 + $0x158] sm:$0xff]
    %v1911 = vld [vmem:[#allocation8 + $0x160] sm:$0xff]
    %v1912 = vld [vmem:[#allocation8 + $0x168] sm:$0xff]
    %v1913 = vld [vmem:[#allocation8 + $0x170] sm:$0xff]
    %v1914 = vld [vmem:[#allocation8 + $0x178] sm:$0xff]
    %v1915 = vld [vmem:[#allocation8 + $0x180] sm:$0xff]
    %v1916 = vld [vmem:[#allocation8 + $0x188] sm:$0xff]
    %v1917 = vld [vmem:[#allocation8 + $0x190] sm:$0xff]
    %v1918 = vld [vmem:[#allocation8 + $0x198] sm:$0xff]
    %v1919 = vld [vmem:[#allocation8 + $0x1a0] sm:$0xff]
    %v1920 = vld [vmem:[#allocation8 + $0x1a8] sm:$0xff]
    %v1921 = vld [vmem:[#allocation8 + $0x1b0] sm:$0xff]
    %v1922 = vld [vmem:[#allocation8 + $0x1b8] sm:$0xff]
    %v1923 = vld [vmem:[#allocation8 + $0x1c0] sm:$0xff]
    %v1924 = vld [vmem:[#allocation8 + $0x1c8] sm:$0xff]
    %v1925 = vld [vmem:[#allocation8 + $0x1d0] sm:$0xff]
    %v1926 = vld [vmem:[#allocation8 + $0x1d8] sm:$0xff]
    %v1927 = vld [vmem:[#allocation8 + $0x1e0] sm:$0xff]
    %v1928 = vld [vmem:[#allocation8 + $0x1e8] sm:$0xff]
    %v1929 = vld [vmem:[#allocation8 + $0x1f0] sm:$0xff]
    %v1930 = vld [vmem:[#allocation8 + $0x1f8] sm:$0xff]
    %v1931 = vld [vmem:[%s6] sm:$0xf]
    %v1932 = vld [vmem:[#allocation2] sm:$0xff]
    %v1933 = vld [vmem:[#allocation2 + $0x8] sm:$0xff]
    %v1934 = vld [vmem:[#allocation2 + $0x10] sm:$0xff]
    %v1935 = vld [vmem:[#allocation2 + $0x18] sm:$0xff]
    %v1936 = vld [vmem:[#allocation2 + $0x20] sm:$0xff]
    %v1937 = vld [vmem:[#allocation2 + $0x28] sm:$0xff]
    %v1938 = vld [vmem:[#allocation2 + $0x30] sm:$0xff]
    %v1939 = vld [vmem:[#allocation2 + $0x38] sm:$0xff]
    %v1941 = vlaneseq
    %v1942 = vshrl.u32 %v1941, 7
    %v1943 = vsub.s32 0, %v1942
    %v1944 = vrot.slane %v1931, %v1943
    %v1945 = vlaneseq
    %v1946 = vshrl.u32 %v1945, 7
    %v1947 = vsub.s32 1, %v1946
    %v1948 = vrot.slane %v1931, %v1947
    %v1949 = vlaneseq
    %v1950 = vshrl.u32 %v1949, 7
    %v1951 = vsub.s32 2, %v1950
    %v1952 = vrot.slane %v1931, %v1951
    %v1953 = vlaneseq
    %v1954 = vshrl.u32 %v1953, 7
    %v1955 = vsub.s32 3, %v1954
    %v1956 = vrot.slane %v1931, %v1955
    %1961 = vmatprep.subr.mxu0 %v1804
    %1962 = vmatpush1.msra.mxu0 %v1803
    %1963 = vmatprep.subr.mxu0 %v1808
    %1964 = vmatpush1.msra.mxu0 %v1807
    %1965 = vmatprep.subr.mxu0 %v1812
    %1966 = vmatpush1.msra.mxu0 %v1811
    %1967 = vmatprep.subr.mxu0 %v1816
    %1968 = vmatpush1.msra.mxu0 %v1815
    %1969 = vmatprep.subr.mxu0 %v1820
    %1970 = vmatpush1.msra.mxu0 %v1819
    %1971 = vmatprep.subr.mxu0 %v1824
    %1972 = vmatpush1.msra.mxu0 %v1823
    %1973 = vmatprep.subr.mxu0 %v1828
    %1974 = vmatpush1.msra.mxu0 %v1827
    %1975 = vmatprep.subr.mxu0 %v1832
    %1976 = vmatpush1.msra.mxu0 %v1831
    %1977 = vmatprep.subr.mxu0 %v1836
    %1978 = vmatpush1.msra.mxu0 %v1835
    %1979 = vmatprep.subr.mxu0 %v1840
    %1980 = vmatpush1.msra.mxu0 %v1839
    %1981 = vmatprep.subr.mxu0 %v1844
    %1982 = vmatpush1.msra.mxu0 %v1843
    %1983 = vmatprep.subr.mxu0 %v1848
    %1984 = vmatpush1.msra.mxu0 %v1847
    %1985 = vmatprep.subr.mxu0 %v1852
    %1986 = vmatpush1.msra.mxu0 %v1851
    %1987 = vmatprep.subr.mxu0 %v1856
    %1988 = vmatpush1.msra.mxu0 %v1855
    %1989 = vmatprep.subr.mxu0 %v1860
    %1990 = vmatpush1.msra.mxu0 %v1859
    %1991 = vmatprep.subr.mxu0 %v1864
    %1992 = vmatpush1.msra.mxu0 %v1863
    %1993 = vmatprep.subr.mxu0 0.0
    %1994 = vmatpush1.msra.mxu0 0.0
    %1995 = vmatprep.subr.mxu0 0.0
    %1996 = vmatpush1.msra.mxu0 0.0
    %1997 = vmatprep.subr.mxu0 0.0
    %1998 = vmatpush1.msra.mxu0 0.0
    %1999 = vmatprep.subr.mxu0 0.0
    %2000 = vmatpush1.msra.mxu0 0.0
    %2001 = vmatprep.subr.mxu0 0.0
    %2002 = vmatpush1.msra.mxu0 0.0
    %2003 = vmatprep.subr.mxu0 0.0
    %2004 = vmatpush1.msra.mxu0 0.0
    %2005 = vmatprep.subr.mxu0 0.0
    %2006 = vmatpush1.msra.mxu0 0.0
    %2007 = vmatprep.subr.mxu0 0.0
    %2008 = vmatpush1.msra.mxu0 0.0
    %2009 = vmatprep.subr.mxu0 0.0
    %2010 = vmatpush1.msra.mxu0 0.0
    %2011 = vmatprep.subr.mxu0 0.0
    %2012 = vmatpush1.msra.mxu0 0.0
    %2013 = vmatprep.subr.mxu0 0.0
    %2014 = vmatpush1.msra.mxu0 0.0
    %2015 = vmatprep.subr.mxu0 0.0
    %2016 = vmatpush1.msra.mxu0 0.0
    %2017 = vmatprep.subr.mxu0 0.0
    %2018 = vmatpush1.msra.mxu0 0.0
    %2019 = vmatprep.subr.mxu0 0.0
    %2020 = vmatpush1.msra.mxu0 0.0
    %2021 = vmatprep.subr.mxu0 0.0
    %2022 = vmatpush1.msra.mxu0 0.0
    %2023 = vmatprep.subr.mxu0 0.0
    %2024 = vmatpush1.msra.mxu0 0.0
    %2025 = vmatprep.mubr.f32.mxu0 0.0
    %2026 = vmatmul.mubr.f32.gmra.mrb[0].mxu0 %v1932
    %v2027 = vpop.f32.mrb[0].mxu0
    %v2028 = vadd.f32 %v1944, %v2027
    %v2029 = vpop.f32.mrb[0].mxu0
    %v2030 = vadd.f32 %v1948, %v2029
    %2031 = vmatprep.mubr.f32.mxu0 0.0
    %2032 = vmatmul.mubr.f32.gmra.mrb[0].mxu0 %v1933
    %v2033 = vpop.f32.mrb[0].mxu0
    %v2034 = vadd.f32 %v1944, %v2033
    %v2035 = vpop.f32.mrb[0].mxu0
    %v2036 = vadd.f32 %v1948, %v2035
    %2037 = vmatprep.mubr.f32.mxu0 0.0
    %2038 = vmatmul.mubr.f32.gmra.mrb[0].mxu0 %v1934
    %v2039 = vpop.f32.mrb[0].mxu0
    %v2040 = vadd.f32 %v1944, %v2039
    %v2041 = vpop.f32.mrb[0].mxu0
    %v2042 = vadd.f32 %v1948, %v2041
    %2043 = vmatprep.mubr.f32.mxu0 0.0
    %2044 = vmatmul.mubr.f32.gmra.mrb[0].mxu0 %v1935
    %v2045 = vpop.f32.mrb[0].mxu0
    %v2046 = vadd.f32 %v1944, %v2045
    %v2047 = vpop.f32.mrb[0].mxu0
    %v2048 = vadd.f32 %v1948, %v2047
    %2049 = vmatprep.mubr.f32.mxu0 0.0
    %2050 = vmatmul.mubr.f32.gmra.mrb[0].mxu0 %v1936
    %v2051 = vpop.f32.mrb[0].mxu0
    %v2052 = vadd.f32 %v1944, %v2051
    %v2053 = vpop.f32.mrb[0].mxu0
    %v2054 = vadd.f32 %v1948, %v2053
    %2055 = vmatprep.mubr.f32.mxu0 0.0
    %2056 = vmatmul.mubr.f32.gmra.mrb[0].mxu0 %v1937
    %v2057 = vpop.f32.mrb[0].mxu0
    %v2058 = vadd.f32 %v1944, %v2057
    %v2059 = vpop.f32.mrb[0].mxu0
    %v2060 = vadd.f32 %v1948, %v2059
    %2061 = vmatprep.mubr.f32.mxu0 0.0
    %2062 = vmatmul.mubr.f32.gmra.mrb[0].mxu0 %v1938
    %v2063 = vpop.f32.mrb[0].mxu0
    %v2064 = vadd.f32 %v1944, %v2063
    %v2065 = vpop.f32.mrb[0].mxu0
    %v2066 = vadd.f32 %v1948, %v2065
    %2067 = vmatprep.mubr.f32.mxu0 0.0
    %2068 = vmatmul.mubr.f32.gmra.mrb[0].mxu0 %v1939
    %v2069 = vpop.f32.mrb[0].mxu0
    %v2070 = vadd.f32 %v1944, %v2069
    %v2071 = vpop.f32.mrb[0].mxu0
    %v2072 = vadd.f32 %v1948, %v2071
    %2073 = vdwg.mxu0
    %2074 = vmatprep.subr.mxu0 %v1806
    %2075 = vmatpush1.msra.mxu0 %v1805
    %2076 = vmatprep.subr.mxu0 %v1810
    %2077 = vmatpush1.msra.mxu0 %v1809
    %2078 = vmatprep.subr.mxu0 %v1814
    %2079 = vmatpush1.msra.mxu0 %v1813
    %2080 = vmatprep.subr.mxu0 %v1818
    %2081 = vmatpush1.msra.mxu0 %v1817
    %2082 = vmatprep.subr.mxu0 %v1822
    %2083 = vmatpush1.msra.mxu0 %v1821
    %2084 = vmatprep.subr.mxu0 %v1826
    %2085 = vmatpush1.msra.mxu0 %v1825
    %2086 = vmatprep.subr.mxu0 %v1830
    %2087 = vmatpush1.msra.mxu0 %v1829
    %2088 = vmatprep.subr.mxu0 %v1834
    %2089 = vmatpush1.msra.mxu0 %v1833
    %2090 = vmatprep.subr.mxu0 %v1838
    %2091 = vmatpush1.msra.mxu0 %v1837
    %2092 = vmatprep.subr.mxu0 %v1842
    %2093 = vmatpush1.msra.mxu0 %v1841
    %2094 = vmatprep.subr.mxu0 %v1846
    %2095 = vmatpush1.msra.mxu0 %v1845
    %2096 = vmatprep.subr.mxu0 %v1850
    %2097 = vmatpush1.msra.mxu0 %v1849
    %2098 = vmatprep.subr.mxu0 %v1854
    %2099 = vmatpush1.msra.mxu0 %v1853
    %2100 = vmatprep.subr.mxu0 %v1858
    %2101 = vmatpush1.msra.mxu0 %v1857
    %2102 = vmatprep.subr.mxu0 %v1862
    %2103 = vmatpush1.msra.mxu0 %v1861
    %2104 = vmatprep.subr.mxu0 %v1866
    %2105 = vmatpush1.msra.mxu0 %v1865
    %2106 = vmatprep.subr.mxu0 0.0
    %2107 = vmatpush1.msra.mxu0 0.0
    %2108 = vmatprep.subr.mxu0 0.0
    %2109 = vmatpush1.msra.mxu0 0.0
    %2110 = vmatprep.subr.mxu0 0.0
    %2111 = vmatpush1.msra.mxu0 0.0
    %2112 = vmatprep.subr.mxu0 0.0
    %2113 = vmatpush1.msra.mxu0 0.0
    %2114 = vmatprep.subr.mxu0 0.0
    %2115 = vmatpush1.msra.mxu0 0.0
    %2116 = vmatprep.subr.mxu0 0.0
    %2117 = vmatpush1.msra.mxu0 0.0
    %2118 = vmatprep.subr.mxu0 0.0
    %2119 = vmatpush1.msra.mxu0 0.0
    %2120 = vmatprep.subr.mxu0 0.0
    %2121 = vmatpush1.msra.mxu0 0.0
    %2122 = vmatprep.subr.mxu0 0.0
    %2123 = vmatpush1.msra.mxu0 0.0
    %2124 = vmatprep.subr.mxu0 0.0
    %2125 = vmatpush1.msra.mxu0 0.0
    %2126 = vmatprep.subr.mxu0 0.0
    %2127 = vmatpush1.msra.mxu0 0.0
    %2128 = vmatprep.subr.mxu0 0.0
    %2129 = vmatpush1.msra.mxu0 0.0
    %2130 = vmatprep.subr.mxu0 0.0
    %2131 = vmatpush1.msra.mxu0 0.0
    %2132 = vmatprep.subr.mxu0 0.0
    %2133 = vmatpush1.msra.mxu0 0.0
    %2134 = vmatprep.subr.mxu0 0.0
    %2135 = vmatpush1.msra.mxu0 0.0
    %2136 = vmatprep.subr.mxu0 0.0
    %2137 = vmatpush1.msra.mxu0 0.0
    %2138 = vmatprep.mubr.f32.mxu0 0.0
    %2139 = vmatmul.mubr.f32.gmra.mrb[0].mxu0 %v1932
    %v2140 = vpop.f32.mrb[0].mxu0
    %v2141 = vadd.f32 %v1952, %v2140
    %v2142 = vpop.f32.mrb[0].mxu0
    %v2143 = vadd.f32 %v1956, %v2142
    %2144 = vmatprep.mubr.f32.mxu0 0.0
    %2145 = vmatmul.mubr.f32.gmra.mrb[0].mxu0 %v1933
    %v2146 = vpop.f32.mrb[0].mxu0
    %v2147 = vadd.f32 %v1952, %v2146
    %v2148 = vpop.f32.mrb[0].mxu0
    %v2149 = vadd.f32 %v1956, %v2148
    %2150 = vmatprep.mubr.f32.mxu0 0.0
    %2151 = vmatmul.mubr.f32.gmra.mrb[0].mxu0 %v1934
    %v2152 = vpop.f32.mrb[0].mxu0
    %v2153 = vadd.f32 %v1952, %v2152
    %v2154 = vpop.f32.mrb[0].mxu0
    %v2155 = vadd.f32 %v1956, %v2154
    %2156 = vmatprep.mubr.f32.mxu0 0.0
    %2157 = vmatmul.mubr.f32.gmra.mrb[0].mxu0 %v1935
    %v2158 = vpop.f32.mrb[0].mxu0
    %v2159 = vadd.f32 %v1952, %v2158
    %v2160 = vpop.f32.mrb[0].mxu0
    %v2161 = vadd.f32 %v1956, %v2160
    %2162 = vmatprep.mubr.f32.mxu0 0.0
    %2163 = vmatmul.mubr.f32.gmra.mrb[0].mxu0 %v1936
    %v2164 = vpop.f32.mrb[0].mxu0
    %v2165 = vadd.f32 %v1952, %v2164
    %v2166 = vpop.f32.mrb[0].mxu0
    %v2167 = vadd.f32 %v1956, %v2166
    %2168 = vmatprep.mubr.f32.mxu0 0.0
    %2169 = vmatmul.mubr.f32.gmra.mrb[0].mxu0 %v1937
    %v2170 = vpop.f32.mrb[0].mxu0
    %v2171 = vadd.f32 %v1952, %v2170
    %v2172 = vpop.f32.mrb[0].mxu0
    %v2173 = vadd.f32 %v1956, %v2172
    %2174 = vmatprep.mubr.f32.mxu0 0.0
    %2175 = vmatmul.mubr.f32.gmra.mrb[0].mxu0 %v1938
    %v2176 = vpop.f32.mrb[0].mxu0
    %v2177 = vadd.f32 %v1952, %v2176
    %v2178 = vpop.f32.mrb[0].mxu0
    %v2179 = vadd.f32 %v1956, %v2178
    %2180 = vmatprep.mubr.f32.mxu0 0.0
    %2181 = vmatmul.mubr.f32.gmra.mrb[0].mxu0 %v1939
    %v2182 = vpop.f32.mrb[0].mxu0
    %v2183 = vadd.f32 %v1952, %v2182
    %v2184 = vpop.f32.mrb[0].mxu0
    %v2185 = vadd.f32 %v1956, %v2184
    %2186 = vdwg.mxu0
    %2187 = vmatprep.subr.mxu0 %v1868
    %2188 = vmatpush1.msra.mxu0 %v1867
    %2189 = vmatprep.subr.mxu0 %v1872
    %2190 = vmatpush1.msra.mxu0 %v1871
    %2191 = vmatprep.subr.mxu0 %v1876
    %2192 = vmatpush1.msra.mxu0 %v1875
    %2193 = vmatprep.subr.mxu0 %v1880
    %2194 = vmatpush1.msra.mxu0 %v1879
    %2195 = vmatprep.subr.mxu0 %v1884
    %2196 = vmatpush1.msra.mxu0 %v1883
    %2197 = vmatprep.subr.mxu0 %v1888
    %2198 = vmatpush1.msra.mxu0 %v1887
    %2199 = vmatprep.subr.mxu0 %v1892
    %2200 = vmatpush1.msra.mxu0 %v1891
    %2201 = vmatprep.subr.mxu0 %v1896
    %2202 = vmatpush1.msra.mxu0 %v1895
    %2203 = vmatprep.subr.mxu0 %v1900
    %2204 = vmatpush1.msra.mxu0 %v1899
    %2205 = vmatprep.subr.mxu0 %v1904
    %2206 = vmatpush1.msra.mxu0 %v1903
    %2207 = vmatprep.subr.mxu0 %v1908
    %2208 = vmatpush1.msra.mxu0 %v1907
    %2209 = vmatprep.subr.mxu0 %v1912
    %2210 = vmatpush1.msra.mxu0 %v1911
    %2211 = vmatprep.subr.mxu0 %v1916
    %2212 = vmatpush1.msra.mxu0 %v1915
    %2213 = vmatprep.subr.mxu0 %v1920
    %2214 = vmatpush1.msra.mxu0 %v1919
    %2215 = vmatprep.subr.mxu0 %v1924
    %2216 = vmatpush1.msra.mxu0 %v1923
    %2217 = vmatprep.subr.mxu0 %v1928
    %2218 = vmatpush1.msra.mxu0 %v1927
    %2219 = vmatprep.subr.mxu0 0.0
    %2220 = vmatpush1.msra.mxu0 0.0
    %2221 = vmatprep.subr.mxu0 0.0
    %2222 = vmatpush1.msra.mxu0 0.0
    %2223 = vmatprep.subr.mxu0 0.0
    %2224 = vmatpush1.msra.mxu0 0.0
    %2225 = vmatprep.subr.mxu0 0.0
    %2226 = vmatpush1.msra.mxu0 0.0
    %2227 = vmatprep.subr.mxu0 0.0
    %2228 = vmatpush1.msra.mxu0 0.0
    %2229 = vmatprep.subr.mxu0 0.0
    %2230 = vmatpush1.msra.mxu0 0.0
    %2231 = vmatprep.subr.mxu0 0.0
    %2232 = vmatpush1.msra.mxu0 0.0
    %2233 = vmatprep.subr.mxu0 0.0
    %2234 = vmatpush1.msra.mxu0 0.0
    %2235 = vmatprep.subr.mxu0 0.0
    %2236 = vmatpush1.msra.mxu0 0.0
    %2237 = vmatprep.subr.mxu0 0.0
    %2238 = vmatpush1.msra.mxu0 0.0
    %2239 = vmatprep.subr.mxu0 0.0
    %2240 = vmatpush1.msra.mxu0 0.0
    %2241 = vmatprep.subr.mxu0 0.0
    %2242 = vmatpush1.msra.mxu0 0.0
    %2243 = vmatprep.subr.mxu0 0.0
    %2244 = vmatpush1.msra.mxu0 0.0
    %2245 = vmatprep.subr.mxu0 0.0
    %2246 = vmatpush1.msra.mxu0 0.0
    %2247 = vmatprep.subr.mxu0 0.0
    %2248 = vmatpush1.msra.mxu0 0.0
    %2249 = vmatprep.subr.mxu0 0.0
    %2250 = vmatpush1.msra.mxu0 0.0
    %2251 = vmatprep.mubr.f32.mxu0 0.0
    %2252 = vmatmul.mubr.f32.gmra.mrb[0].mxu0 0.0
    %v2253 = vpop.f32.mrb[0].mxu0
    %v2254 = vadd.f32 0.0, %v2253
    %v2255 = vpop.f32.mrb[0].mxu0
    %v2256 = vadd.f32 0.0, %v2255
    %2257 = vdwg.mxu0
    %2258 = vmatprep.subr.mxu0 %v1870
    %2259 = vmatpush1.msra.mxu0 %v1869
    %2260 = vmatprep.subr.mxu0 %v1874
    %2261 = vmatpush1.msra.mxu0 %v1873
    %2262 = vmatprep.subr.mxu0 %v1878
    %2263 = vmatpush1.msra.mxu0 %v1877
    %2264 = vmatprep.subr.mxu0 %v1882
    %2265 = vmatpush1.msra.mxu0 %v1881
    %2266 = vmatprep.subr.mxu0 %v1886
    %2267 = vmatpush1.msra.mxu0 %v1885
    %2268 = vmatprep.subr.mxu0 %v1890
    %2269 = vmatpush1.msra.mxu0 %v1889
    %2270 = vmatprep.subr.mxu0 %v1894
    %2271 = vmatpush1.msra.mxu0 %v1893
    %2272 = vmatprep.subr.mxu0 %v1898
    %2273 = vmatpush1.msra.mxu0 %v1897
    %2274 = vmatprep.subr.mxu0 %v1902
    %2275 = vmatpush1.msra.mxu0 %v1901
    %2276 = vmatprep.subr.mxu0 %v1906
    %2277 = vmatpush1.msra.mxu0 %v1905
    %2278 = vmatprep.subr.mxu0 %v1910
    %2279 = vmatpush1.msra.mxu0 %v1909
    %2280 = vmatprep.subr.mxu0 %v1914
    %2281 = vmatpush1.msra.mxu0 %v1913
    %2282 = vmatprep.subr.mxu0 %v1918
    %2283 = vmatpush1.msra.mxu0 %v1917
    %2284 = vmatprep.subr.mxu0 %v1922
    %2285 = vmatpush1.msra.mxu0 %v1921
    %2286 = vmatprep.subr.mxu0 %v1926
    %2287 = vmatpush1.msra.mxu0 %v1925
    %2288 = vmatprep.subr.mxu0 %v1930
    %2289 = vmatpush1.msra.mxu0 %v1929
    %2290 = vmatprep.subr.mxu0 0.0
    %2291 = vmatpush1.msra.mxu0 0.0
    %2292 = vmatprep.subr.mxu0 0.0
    %2293 = vmatpush1.msra.mxu0 0.0
    %2294 = vmatprep.subr.mxu0 0.0
    %2295 = vmatpush1.msra.mxu0 0.0
    %2296 = vmatprep.subr.mxu0 0.0
    %2297 = vmatpush1.msra.mxu0 0.0
    %2298 = vmatprep.subr.mxu0 0.0
    %2299 = vmatpush1.msra.mxu0 0.0
    %2300 = vmatprep.subr.mxu0 0.0
    %2301 = vmatpush1.msra.mxu0 0.0
    %2302 = vmatprep.subr.mxu0 0.0
    %2303 = vmatpush1.msra.mxu0 0.0
    %2304 = vmatprep.subr.mxu0 0.0
    %2305 = vmatpush1.msra.mxu0 0.0
    %2306 = vmatprep.subr.mxu0 0.0
    %2307 = vmatpush1.msra.mxu0 0.0
    %2308 = vmatprep.subr.mxu0 0.0
    %2309 = vmatpush1.msra.mxu0 0.0
    %2310 = vmatprep.subr.mxu0 0.0
    %2311 = vmatpush1.msra.mxu0 0.0
    %2312 = vmatprep.subr.mxu0 0.0
    %2313 = vmatpush1.msra.mxu0 0.0
    %2314 = vmatprep.subr.mxu0 0.0
    %2315 = vmatpush1.msra.mxu0 0.0
    %2316 = vmatprep.subr.mxu0 0.0
    %2317 = vmatpush1.msra.mxu0 0.0
    %2318 = vmatprep.subr.mxu0 0.0
    %2319 = vmatpush1.msra.mxu0 0.0
    %2320 = vmatprep.subr.mxu0 0.0
    %2321 = vmatpush1.msra.mxu0 0.0
    %2322 = vmatprep.mubr.f32.mxu0 0.0
    %2323 = vmatmul.mubr.f32.gmra.mrb[0].mxu0 0.0
    %v2324 = vpop.f32.mrb[0].mxu0
    %v2325 = vadd.f32 0.0, %v2324
    %v2326 = vpop.f32.mrb[0].mxu0
    %v2327 = vadd.f32 0.0, %v2326
    %2328 = vdwg.mxu0
    %v2329 = vadd.f32 %v2028, %v2254
    %v2330 = vadd.f32 %v2030, %v2256
    %v2331 = vadd.f32 %v2141, %v2325
    %v2332 = vadd.f32 %v2143, %v2327
    %v2333 = vxor.u32 %v2329, 2147483648
    %v2334 = vxor.u32 %v2330, 2147483648
    %v2335 = vxor.u32 %v2331, 2147483648
    %v2336 = vmul.f32 %v2333, 1.442695
    %v2337 = vpow.pop %v2336
    %v2338 = vmul.f32 %v2334, 1.442695
    %v2339 = vpow.pop %v2338
    %v2340 = vmul.f32 %v2335, 1.442695
    %v2341 = vpow.pop %v2340
    %v2342 = vadd.f32 %v2337, 1.0
    %v2343 = vadd.f32 %v2339, 1.0
    %v2344 = vadd.f32 %v2341, 1.0
    %v2345 = vrcp.pop %v2342
    %v2346 = vmul.f32 1.0, %v2345
    %v2347 = vrcp.pop %v2343
    %v2348 = vmul.f32 1.0, %v2347
    %v2349 = vrcp.pop %v2344
    %v2350 = vmul.f32 1.0, %v2349
    %v2351 = vtanh.pop %v2332
    %v2352 = vmul.f32 %v2348, 0.0
    %v2353 = vmul.f32 %v2346, %v2351
    %v2354 = vadd.f32 %v2352, %v2353
    %v2355 = vtanh.pop %v2354
    %v2356 = vmul.f32 %v2350, %v2355
    %2357 = vmatprep.subr.mxu0 %v1868
    %2358 = vmatpush1.msra.mxu0 %v1867
    %2359 = vmatprep.subr.mxu0 %v1872
    %2360 = vmatpush1.msra.mxu0 %v1871
    %2361 = vmatprep.subr.mxu0 %v1876
    %2362 = vmatpush1.msra.mxu0 %v1875
    %2363 = vmatprep.subr.mxu0 %v1880
    %2364 = vmatpush1.msra.mxu0 %v1879
    %2365 = vmatprep.subr.mxu0 %v1884
    %2366 = vmatpush1.msra.mxu0 %v1883
    %2367 = vmatprep.subr.mxu0 %v1888
    %2368 = vmatpush1.msra.mxu0 %v1887
    %2369 = vmatprep.subr.mxu0 %v1892
    %2370 = vmatpush1.msra.mxu0 %v1891
    %2371 = vmatprep.subr.mxu0 %v1896
    %2372 = vmatpush1.msra.mxu0 %v1895
    %2373 = vmatprep.subr.mxu0 %v1900
    %2374 = vmatpush1.msra.mxu0 %v1899
    %2375 = vmatprep.subr.mxu0 %v1904
    %2376 = vmatpush1.msra.mxu0 %v1903
    %2377 = vmatprep.subr.mxu0 %v1908
    %2378 = vmatpush1.msra.mxu0 %v1907
    %2379 = vmatprep.subr.mxu0 %v1912
    %2380 = vmatpush1.msra.mxu0 %v1911
    %2381 = vmatprep.subr.mxu0 %v1916
    %2382 = vmatpush1.msra.mxu0 %v1915
    %2383 = vmatprep.subr.mxu0 %v1920
    %2384 = vmatpush1.msra.mxu0 %v1919
    %2385 = vmatprep.subr.mxu0 %v1924
    %2386 = vmatpush1.msra.mxu0 %v1923
    %2387 = vmatprep.subr.mxu0 %v1928
    %2388 = vmatpush1.msra.mxu0 %v1927
    %2389 = vmatprep.subr.mxu0 0.0
    %2390 = vmatpush1.msra.mxu0 0.0
    %2391 = vmatprep.subr.mxu0 0.0
    %2392 = vmatpush1.msra.mxu0 0.0
    %2393 = vmatprep.subr.mxu0 0.0
    %2394 = vmatpush1.msra.mxu0 0.0
    %2395 = vmatprep.subr.mxu0 0.0
    %2396 = vmatpush1.msra.mxu0 0.0
    %2397 = vmatprep.subr.mxu0 0.0
    %2398 = vmatpush1.msra.mxu0 0.0
    %2399 = vmatprep.subr.mxu0 0.0
    %2400 = vmatpush1.msra.mxu0 0.0
    %2401 = vmatprep.subr.mxu0 0.0
    %2402 = vmatpush1.msra.mxu0 0.0
    %2403 = vmatprep.subr.mxu0 0.0
    %2404 = vmatpush1.msra.mxu0 0.0
    %2405 = vmatprep.subr.mxu0 0.0
    %2406 = vmatpush1.msra.mxu0 0.0
    %2407 = vmatprep.subr.mxu0 0.0
    %2408 = vmatpush1.msra.mxu0 0.0
    %2409 = vmatprep.subr.mxu0 0.0
    %2410 = vmatpush1.msra.mxu0 0.0
    %2411 = vmatprep.subr.mxu0 0.0
    %2412 = vmatpush1.msra.mxu0 0.0
    %2413 = vmatprep.subr.mxu0 0.0
    %2414 = vmatpush1.msra.mxu0 0.0
    %2415 = vmatprep.subr.mxu0 0.0
    %2416 = vmatpush1.msra.mxu0 0.0
    %2417 = vmatprep.subr.mxu0 0.0
    %2418 = vmatpush1.msra.mxu0 0.0
    %2419 = vmatprep.subr.mxu0 0.0
    %2420 = vmatpush1.msra.mxu0 0.0
    %2421 = vmatprep.mubr.f32.mxu0 0.0
    %2422 = vmatmul.mubr.f32.gmra.mrb[0].mxu0 %v2356
    %v2423 = vpop.f32.mrb[0].mxu0
    %v2424 = vadd.f32 0.0, %v2423
    %v2425 = vpop.f32.mrb[0].mxu0
    %v2426 = vadd.f32 0.0, %v2425
    %2427 = vdwg.mxu0
    %2428 = vmatprep.subr.mxu0 %v1870
    %2429 = vmatpush1.msra.mxu0 %v1869
    %2430 = vmatprep.subr.mxu0 %v1874
    %2431 = vmatpush1.msra.mxu0 %v1873
    %2432 = vmatprep.subr.mxu0 %v1878
    %2433 = vmatpush1.msra.mxu0 %v1877
    %2434 = vmatprep.subr.mxu0 %v1882
    %2435 = vmatpush1.msra.mxu0 %v1881
    %2436 = vmatprep.subr.mxu0 %v1886
    %2437 = vmatpush1.msra.mxu0 %v1885
    %2438 = vmatprep.subr.mxu0 %v1890
    %2439 = vmatpush1.msra.mxu0 %v1889
    %2440 = vmatprep.subr.mxu0 %v1894
    %2441 = vmatpush1.msra.mxu0 %v1893
    %2442 = vmatprep.subr.mxu0 %v1898
    %2443 = vmatpush1.msra.mxu0 %v1897
    %2444 = vmatprep.subr.mxu0 %v1902
    %2445 = vmatpush1.msra.mxu0 %v1901
    %2446 = vmatprep.subr.mxu0 %v1906
    %2447 = vmatpush1.msra.mxu0 %v1905
    %2448 = vmatprep.subr.mxu0 %v1910
    %2449 = vmatpush1.msra.mxu0 %v1909
    %2450 = vmatprep.subr.mxu0 %v1914
    %2451 = vmatpush1.msra.mxu0 %v1913
    %2452 = vmatprep.subr.mxu0 %v1918
    %2453 = vmatpush1.msra.mxu0 %v1917
    %2454 = vmatprep.subr.mxu0 %v1922
    %2455 = vmatpush1.msra.mxu0 %v1921
    %2456 = vmatprep.subr.mxu0 %v1926
    %2457 = vmatpush1.msra.mxu0 %v1925
    %2458 = vmatprep.subr.mxu0 %v1930
    %2459 = vmatpush1.msra.mxu0 %v1929
    %2460 = vmatprep.subr.mxu0 0.0
    %2461 = vmatpush1.msra.mxu0 0.0
    %2462 = vmatprep.subr.mxu0 0.0
    %2463 = vmatpush1.msra.mxu0 0.0
    %2464 = vmatprep.subr.mxu0 0.0
    %2465 = vmatpush1.msra.mxu0 0.0
    %2466 = vmatprep.subr.mxu0 0.0
    %2467 = vmatpush1.msra.mxu0 0.0
    %2468 = vmatprep.subr.mxu0 0.0
    %2469 = vmatpush1.msra.mxu0 0.0
    %2470 = vmatprep.subr.mxu0 0.0
    %2471 = vmatpush1.msra.mxu0 0.0
    %2472 = vmatprep.subr.mxu0 0.0
    %2473 = vmatpush1.msra.mxu0 0.0
    %2474 = vmatprep.subr.mxu0 0.0
    %2475 = vmatpush1.msra.mxu0 0.0
    %2476 = vmatprep.subr.mxu0 0.0
    %2477 = vmatpush1.msra.mxu0 0.0
    %2478 = vmatprep.subr.mxu0 0.0
    %2479 = vmatpush1.msra.mxu0 0.0
    %2480 = vmatprep.subr.mxu0 0.0
    %2481 = vmatpush1.msra.mxu0 0.0
    %2482 = vmatprep.subr.mxu0 0.0
    %2483 = vmatpush1.msra.mxu0 0.0
    %2484 = vmatprep.subr.mxu0 0.0
    %2485 = vmatpush1.msra.mxu0 0.0
    %2486 = vmatprep.subr.mxu0 0.0
    %2487 = vmatpush1.msra.mxu0 0.0
    %2488 = vmatprep.subr.mxu0 0.0
    %2489 = vmatpush1.msra.mxu0 0.0
    %2490 = vmatprep.subr.mxu0 0.0
    %2491 = vmatpush1.msra.mxu0 0.0
    %2492 = vmatprep.mubr.f32.mxu0 0.0
    %2493 = vmatmul.mubr.f32.gmra.mrb[0].mxu0 %v2356
    %v2494 = vpop.f32.mrb[0].mxu0
    %v2495 = vadd.f32 0.0, %v2494
    %v2496 = vpop.f32.mrb[0].mxu0
    %v2497 = vadd.f32 0.0, %v2496
    %2498 = vdwg.mxu0
    %v2499 = vadd.f32 %v2034, %v2424
    %v2500 = vadd.f32 %v2036, %v2426
    %v2501 = vadd.f32 %v2147, %v2495
    %v2502 = vadd.f32 %v2149, %v2497
    %v2503 = vxor.u32 %v2499, 2147483648
    %v2504 = vxor.u32 %v2500, 2147483648
    %v2505 = vxor.u32 %v2501, 2147483648
    %v2506 = vmul.f32 %v2503, 1.442695
    %v2507 = vpow.pop %v2506
    %v2508 = vmul.f32 %v2504, 1.442695
    %v2509 = vpow.pop %v2508
    %v2510 = vmul.f32 %v2505, 1.442695
    %v2511 = vpow.pop %v2510
    %v2512 = vadd.f32 %v2507, 1.0
    %v2513 = vadd.f32 %v2509, 1.0
    %v2514 = vadd.f32 %v2511, 1.0
    %v2515 = vrcp.pop %v2512
    %v2516 = vmul.f32 1.0, %v2515
    %v2517 = vrcp.pop %v2513
    %v2518 = vmul.f32 1.0, %v2517
    %v2519 = vrcp.pop %v2514
    %v2520 = vmul.f32 1.0, %v2519
    %v2521 = vtanh.pop %v2502
    %v2522 = vmul.f32 %v2518, %v2354
    %v2523 = vmul.f32 %v2516, %v2521
    %v2524 = vadd.f32 %v2522, %v2523
    %v2525 = vtanh.pop %v2524
    %v2526 = vmul.f32 %v2520, %v2525
    %2527 = vmatprep.subr.mxu0 %v1868
    %2528 = vmatpush1.msra.mxu0 %v1867
    %2529 = vmatprep.subr.mxu0 %v1872
    %2530 = vmatpush1.msra.mxu0 %v1871
    %2531 = vmatprep.subr.mxu0 %v1876
    %2532 = vmatpush1.msra.mxu0 %v1875
    %2533 = vmatprep.subr.mxu0 %v1880
    %2534 = vmatpush1.msra.mxu0 %v1879
    %2535 = vmatprep.subr.mxu0 %v1884
    %2536 = vmatpush1.msra.mxu0 %v1883
    %2537 = vmatprep.subr.mxu0 %v1888
    %2538 = vmatpush1.msra.mxu0 %v1887
    %2539 = vmatprep.subr.mxu0 %v1892
    %2540 = vmatpush1.msra.mxu0 %v1891
    %2541 = vmatprep.subr.mxu0 %v1896
    %2542 = vmatpush1.msra.mxu0 %v1895
    %2543 = vmatprep.subr.mxu0 %v1900
    %2544 = vmatpush1.msra.mxu0 %v1899
    %2545 = vmatprep.subr.mxu0 %v1904
    %2546 = vmatpush1.msra.mxu0 %v1903
    %2547 = vmatprep.subr.mxu0 %v1908
    %2548 = vmatpush1.msra.mxu0 %v1907
    %2549 = vmatprep.subr.mxu0 %v1912
    %2550 = vmatpush1.msra.mxu0 %v1911
    %2551 = vmatprep.subr.mxu0 %v1916
    %2552 = vmatpush1.msra.mxu0 %v1915
    %2553 = vmatprep.subr.mxu0 %v1920
    %2554 = vmatpush1.msra.mxu0 %v1919
    %2555 = vmatprep.subr.mxu0 %v1924
    %2556 = vmatpush1.msra.mxu0 %v1923
    %2557 = vmatprep.subr.mxu0 %v1928
    %2558 = vmatpush1.msra.mxu0 %v1927
    %2559 = vmatprep.subr.mxu0 0.0
    %2560 = vmatpush1.msra.mxu0 0.0
    %2561 = vmatprep.subr.mxu0 0.0
    %2562 = vmatpush1.msra.mxu0 0.0
    %2563 = vmatprep.subr.mxu0 0.0
    %2564 = vmatpush1.msra.mxu0 0.0
    %2565 = vmatprep.subr.mxu0 0.0
    %2566 = vmatpush1.msra.mxu0 0.0
    %2567 = vmatprep.subr.mxu0 0.0
    %2568 = vmatpush1.msra.mxu0 0.0
    %2569 = vmatprep.subr.mxu0 0.0
    %2570 = vmatpush1.msra.mxu0 0.0
    %2571 = vmatprep.subr.mxu0 0.0
    %2572 = vmatpush1.msra.mxu0 0.0
    %2573 = vmatprep.subr.mxu0 0.0
    %2574 = vmatpush1.msra.mxu0 0.0
    %2575 = vmatprep.subr.mxu0 0.0
    %2576 = vmatpush1.msra.mxu0 0.0
    %2577 = vmatprep.subr.mxu0 0.0
    %2578 = vmatpush1.msra.mxu0 0.0
    %2579 = vmatprep.subr.mxu0 0.0
    %2580 = vmatpush1.msra.mxu0 0.0
    %2581 = vmatprep.subr.mxu0 0.0
    %2582 = vmatpush1.msra.mxu0 0.0
    %2583 = vmatprep.subr.mxu0 0.0
    %2584 = vmatpush1.msra.mxu0 0.0
    %2585 = vmatprep.subr.mxu0 0.0
    %2586 = vmatpush1.msra.mxu0 0.0
    %2587 = vmatprep.subr.mxu0 0.0
    %2588 = vmatpush1.msra.mxu0 0.0
    %2589 = vmatprep.subr.mxu0 0.0
    %2590 = vmatpush1.msra.mxu0 0.0
    %2591 = vmatprep.mubr.f32.mxu0 0.0
    %2592 = vmatmul.mubr.f32.gmra.mrb[0].mxu0 %v2526
    %v2593 = vpop.f32.mrb[0].mxu0
    %v2594 = vadd.f32 0.0, %v2593
    %v2595 = vpop.f32.mrb[0].mxu0
    %v2596 = vadd.f32 0.0, %v2595
    %2597 = vdwg.mxu0
    %2598 = vmatprep.subr.mxu0 %v1870
    %2599 = vmatpush1.msra.mxu0 %v1869
    %2600 = vmatprep.subr.mxu0 %v1874
    %2601 = vmatpush1.msra.mxu0 %v1873
    %2602 = vmatprep.subr.mxu0 %v1878
    %2603 = vmatpush1.msra.mxu0 %v1877
    %2604 = vmatprep.subr.mxu0 %v1882
    %2605 = vmatpush1.msra.mxu0 %v1881
    %2606 = vmatprep.subr.mxu0 %v1886
    %2607 = vmatpush1.msra.mxu0 %v1885
    %2608 = vmatprep.subr.mxu0 %v1890
    %2609 = vmatpush1.msra.mxu0 %v1889
    %2610 = vmatprep.subr.mxu0 %v1894
    %2611 = vmatpush1.msra.mxu0 %v1893
    %2612 = vmatprep.subr.mxu0 %v1898
    %2613 = vmatpush1.msra.mxu0 %v1897
    %2614 = vmatprep.subr.mxu0 %v1902
    %2615 = vmatpush1.msra.mxu0 %v1901
    %2616 = vmatprep.subr.mxu0 %v1906
    %2617 = vmatpush1.msra.mxu0 %v1905
    %2618 = vmatprep.subr.mxu0 %v1910
    %2619 = vmatpush1.msra.mxu0 %v1909
    %2620 = vmatprep.subr.mxu0 %v1914
    %2621 = vmatpush1.msra.mxu0 %v1913
    %2622 = vmatprep.subr.mxu0 %v1918
    %2623 = vmatpush1.msra.mxu0 %v1917
    %2624 = vmatprep.subr.mxu0 %v1922
    %2625 = vmatpush1.msra.mxu0 %v1921
    %2626 = vmatprep.subr.mxu0 %v1926
    %2627 = vmatpush1.msra.mxu0 %v1925
    %2628 = vmatprep.subr.mxu0 %v1930
    %2629 = vmatpush1.msra.mxu0 %v1929
    %2630 = vmatprep.subr.mxu0 0.0
    %2631 = vmatpush1.msra.mxu0 0.0
    %2632 = vmatprep.subr.mxu0 0.0
    %2633 = vmatpush1.msra.mxu0 0.0
    %2634 = vmatprep.subr.mxu0 0.0
    %2635 = vmatpush1.msra.mxu0 0.0
    %2636 = vmatprep.subr.mxu0 0.0
    %2637 = vmatpush1.msra.mxu0 0.0
    %2638 = vmatprep.subr.mxu0 0.0
    %2639 = vmatpush1.msra.mxu0 0.0
    %2640 = vmatprep.subr.mxu0 0.0
    %2641 = vmatpush1.msra.mxu0 0.0
    %2642 = vmatprep.subr.mxu0 0.0
    %2643 = vmatpush1.msra.mxu0 0.0
    %2644 = vmatprep.subr.mxu0 0.0
    %2645 = vmatpush1.msra.mxu0 0.0
    %2646 = vmatprep.subr.mxu0 0.0
    %2647 = vmatpush1.msra.mxu0 0.0
    %2648 = vmatprep.subr.mxu0 0.0
    %2649 = vmatpush1.msra.mxu0 0.0
    %2650 = vmatprep.subr.mxu0 0.0
    %2651 = vmatpush1.msra.mxu0 0.0
    %2652 = vmatprep.subr.mxu0 0.0
    %2653 = vmatpush1.msra.mxu0 0.0
    %2654 = vmatprep.subr.mxu0 0.0
    %2655 = vmatpush1.msra.mxu0 0.0
    %2656 = vmatprep.subr.mxu0 0.0
    %2657 = vmatpush1.msra.mxu0 0.0
    %2658 = vmatprep.subr.mxu0 0.0
    %2659 = vmatpush1.msra.mxu0 0.0
    %2660 = vmatprep.subr.mxu0 0.0
    %2661 = vmatpush1.msra.mxu0 0.0
    %2662 = vmatprep.mubr.f32.mxu0 0.0
    %2663 = vmatmul.mubr.f32.gmra.mrb[0].mxu0 %v2526
    %v2664 = vpop.f32.mrb[0].mxu0
    %v2665 = vadd.f32 0.0, %v2664
    %v2666 = vpop.f32.mrb[0].mxu0
    %v2667 = vadd.f32 0.0, %v2666
    %2668 = vdwg.mxu0
    %v2669 = vadd.f32 %v2040, %v2594
    %v2670 = vadd.f32 %v2042, %v2596
    %v2671 = vadd.f32 %v2153, %v2665
    %v2672 = vadd.f32 %v2155, %v2667
    %v2673 = vxor.u32 %v2669, 2147483648
    %v2674 = vxor.u32 %v2670, 2147483648
    %v2675 = vxor.u32 %v2671, 2147483648
    %v2676 = vmul.f32 %v2673, 1.442695
    %v2677 = vpow.pop %v2676
    %v2678 = vmul.f32 %v2674, 1.442695
    %v2679 = vpow.pop %v2678
    %v2680 = vmul.f32 %v2675, 1.442695
    %v2681 = vpow.pop %v2680
    %v2682 = vadd.f32 %v2677, 1.0
    %v2683 = vadd.f32 %v2679, 1.0
    %v2684 = vadd.f32 %v2681, 1.0
    %v2685 = vrcp.pop %v2682
    %v2686 = vmul.f32 1.0, %v2685
    %v2687 = vrcp.pop %v2683
    %v2688 = vmul.f32 1.0, %v2687
    %v2689 = vrcp.pop %v2684
    %v2690 = vmul.f32 1.0, %v2689
    %v2691 = vtanh.pop %v2672
    %v2692 = vmul.f32 %v2688, %v2524
    %v2693 = vmul.f32 %v2686, %v2691
    %v2694 = vadd.f32 %v2692, %v2693
    %v2695 = vtanh.pop %v2694
    %v2696 = vmul.f32 %v2690, %v2695
    %2697 = vmatprep.subr.mxu0 %v1868
    %2698 = vmatpush1.msra.mxu0 %v1867
    %2699 = vmatprep.subr.mxu0 %v1872
    %2700 = vmatpush1.msra.mxu0 %v1871
    %2701 = vmatprep.subr.mxu0 %v1876
    %2702 = vmatpush1.msra.mxu0 %v1875
    %2703 = vmatprep.subr.mxu0 %v1880
    %2704 = vmatpush1.msra.mxu0 %v1879
    %2705 = vmatprep.subr.mxu0 %v1884
    %2706 = vmatpush1.msra.mxu0 %v1883
    %2707 = vmatprep.subr.mxu0 %v1888
    %2708 = vmatpush1.msra.mxu0 %v1887
    %2709 = vmatprep.subr.mxu0 %v1892
    %2710 = vmatpush1.msra.mxu0 %v1891
    %2711 = vmatprep.subr.mxu0 %v1896
    %2712 = vmatpush1.msra.mxu0 %v1895
    %2713 = vmatprep.subr.mxu0 %v1900
    %2714 = vmatpush1.msra.mxu0 %v1899
    %2715 = vmatprep.subr.mxu0 %v1904
    %2716 = vmatpush1.msra.mxu0 %v1903
    %2717 = vmatprep.subr.mxu0 %v1908
    %2718 = vmatpush1.msra.mxu0 %v1907
    %2719 = vmatprep.subr.mxu0 %v1912
    %2720 = vmatpush1.msra.mxu0 %v1911
    %2721 = vmatprep.subr.mxu0 %v1916
    %2722 = vmatpush1.msra.mxu0 %v1915
    %2723 = vmatprep.subr.mxu0 %v1920
    %2724 = vmatpush1.msra.mxu0 %v1919
    %2725 = vmatprep.subr.mxu0 %v1924
    %2726 = vmatpush1.msra.mxu0 %v1923
    %2727 = vmatprep.subr.mxu0 %v1928
    %2728 = vmatpush1.msra.mxu0 %v1927
    %2729 = vmatprep.subr.mxu0 0.0
    %2730 = vmatpush1.msra.mxu0 0.0
    %2731 = vmatprep.subr.mxu0 0.0
    %2732 = vmatpush1.msra.mxu0 0.0
    %2733 = vmatprep.subr.mxu0 0.0
    %2734 = vmatpush1.msra.mxu0 0.0
    %2735 = vmatprep.subr.mxu0 0.0
    %2736 = vmatpush1.msra.mxu0 0.0
    %2737 = vmatprep.subr.mxu0 0.0
    %2738 = vmatpush1.msra.mxu0 0.0
    %2739 = vmatprep.subr.mxu0 0.0
    %2740 = vmatpush1.msra.mxu0 0.0
    %2741 = vmatprep.subr.mxu0 0.0
    %2742 = vmatpush1.msra.mxu0 0.0
    %2743 = vmatprep.subr.mxu0 0.0
    %2744 = vmatpush1.msra.mxu0 0.0
    %2745 = vmatprep.subr.mxu0 0.0
    %2746 = vmatpush1.msra.mxu0 0.0
    %2747 = vmatprep.subr.mxu0 0.0
    %2748 = vmatpush1.msra.mxu0 0.0
    %2749 = vmatprep.subr.mxu0 0.0
    %2750 = vmatpush1.msra.mxu0 0.0
    %2751 = vmatprep.subr.mxu0 0.0
    %2752 = vmatpush1.msra.mxu0 0.0
    %2753 = vmatprep.subr.mxu0 0.0
    %2754 = vmatpush1.msra.mxu0 0.0
    %2755 = vmatprep.subr.mxu0 0.0
    %2756 = vmatpush1.msra.mxu0 0.0
    %2757 = vmatprep.subr.mxu0 0.0
    %2758 = vmatpush1.msra.mxu0 0.0
    %2759 = vmatprep.subr.mxu0 0.0
    %2760 = vmatpush1.msra.mxu0 0.0
    %2761 = vmatprep.mubr.f32.mxu0 0.0
    %2762 = vmatmul.mubr.f32.gmra.mrb[0].mxu0 %v2696
    %v2763 = vpop.f32.mrb[0].mxu0
    %v2764 = vadd.f32 0.0, %v2763
    %v2765 = vpop.f32.mrb[0].mxu0
    %v2766 = vadd.f32 0.0, %v2765
    %2767 = vdwg.mxu0
    %2768 = vmatprep.subr.mxu0 %v1870
    %2769 = vmatpush1.msra.mxu0 %v1869
    %2770 = vmatprep.subr.mxu0 %v1874
    %2771 = vmatpush1.msra.mxu0 %v1873
    %2772 = vmatprep.subr.mxu0 %v1878
    %2773 = vmatpush1.msra.mxu0 %v1877
    %2774 = vmatprep.subr.mxu0 %v1882
    %2775 = vmatpush1.msra.mxu0 %v1881
    %2776 = vmatprep.subr.mxu0 %v1886
    %2777 = vmatpush1.msra.mxu0 %v1885
    %2778 = vmatprep.subr.mxu0 %v1890
    %2779 = vmatpush1.msra.mxu0 %v1889
    %2780 = vmatprep.subr.mxu0 %v1894
    %2781 = vmatpush1.msra.mxu0 %v1893
    %2782 = vmatprep.subr.mxu0 %v1898
    %2783 = vmatpush1.msra.mxu0 %v1897
    %2784 = vmatprep.subr.mxu0 %v1902
    %2785 = vmatpush1.msra.mxu0 %v1901
    %2786 = vmatprep.subr.mxu0 %v1906
    %2787 = vmatpush1.msra.mxu0 %v1905
    %2788 = vmatprep.subr.mxu0 %v1910
    %2789 = vmatpush1.msra.mxu0 %v1909
    %2790 = vmatprep.subr.mxu0 %v1914
    %2791 = vmatpush1.msra.mxu0 %v1913
    %2792 = vmatprep.subr.mxu0 %v1918
    %2793 = vmatpush1.msra.mxu0 %v1917
    %2794 = vmatprep.subr.mxu0 %v1922
    %2795 = vmatpush1.msra.mxu0 %v1921
    %2796 = vmatprep.subr.mxu0 %v1926
    %2797 = vmatpush1.msra.mxu0 %v1925
    %2798 = vmatprep.subr.mxu0 %v1930
    %2799 = vmatpush1.msra.mxu0 %v1929
    %2800 = vmatprep.subr.mxu0 0.0
    %2801 = vmatpush1.msra.mxu0 0.0
    %2802 = vmatprep.subr.mxu0 0.0
    %2803 = vmatpush1.msra.mxu0 0.0
    %2804 = vmatprep.subr.mxu0 0.0
    %2805 = vmatpush1.msra.mxu0 0.0
    %2806 = vmatprep.subr.mxu0 0.0
    %2807 = vmatpush1.msra.mxu0 0.0
    %2808 = vmatprep.subr.mxu0 0.0
    %2809 = vmatpush1.msra.mxu0 0.0
    %2810 = vmatprep.subr.mxu0 0.0
    %2811 = vmatpush1.msra.mxu0 0.0
    %2812 = vmatprep.subr.mxu0 0.0
    %2813 = vmatpush1.msra.mxu0 0.0
    %2814 = vmatprep.subr.mxu0 0.0
    %2815 = vmatpush1.msra.mxu0 0.0
    %2816 = vmatprep.subr.mxu0 0.0
    %2817 = vmatpush1.msra.mxu0 0.0
    %2818 = vmatprep.subr.mxu0 0.0
    %2819 = vmatpush1.msra.mxu0 0.0
    %2820 = vmatprep.subr.mxu0 0.0
    %2821 = vmatpush1.msra.mxu0 0.0
    %2822 = vmatprep.subr.mxu0 0.0
    %2823 = vmatpush1.msra.mxu0 0.0
    %2824 = vmatprep.subr.mxu0 0.0
    %2825 = vmatpush1.msra.mxu0 0.0
    %2826 = vmatprep.subr.mxu0 0.0
    %2827 = vmatpush1.msra.mxu0 0.0
    %2828 = vmatprep.subr.mxu0 0.0
    %2829 = vmatpush1.msra.mxu0 0.0
    %2830 = vmatprep.subr.mxu0 0.0
    %2831 = vmatpush1.msra.mxu0 0.0
    %2832 = vmatprep.mubr.f32.mxu0 0.0
    %2833 = vmatmul.mubr.f32.gmra.mrb[0].mxu0 %v2696
    %v2834 = vpop.f32.mrb[0].mxu0
    %v2835 = vadd.f32 0.0, %v2834
    %v2836 = vpop.f32.mrb[0].mxu0
    %v2837 = vadd.f32 0.0, %v2836
    %2838 = vdwg.mxu0
    %v2839 = vadd.f32 %v2046, %v2764
    %v2840 = vadd.f32 %v2048, %v2766
    %v2841 = vadd.f32 %v2159, %v2835
    %v2842 = vadd.f32 %v2161, %v2837
    %v2843 = vxor.u32 %v2839, 2147483648
    %v2844 = vxor.u32 %v2840, 2147483648
    %v2845 = vxor.u32 %v2841, 2147483648
    %v2846 = vmul.f32 %v2843, 1.442695
    %v2847 = vpow.pop %v2846
    %v2848 = vmul.f32 %v2844, 1.442695
    %v2849 = vpow.pop %v2848
    %v2850 = vmul.f32 %v2845, 1.442695
    %v2851 = vpow.pop %v2850
    %v2852 = vadd.f32 %v2847, 1.0
    %v2853 = vadd.f32 %v2849, 1.0
    %v2854 = vadd.f32 %v2851, 1.0
    %v2855 = vrcp.pop %v2852
    %v2856 = vmul.f32 1.0, %v2855
    %v2857 = vrcp.pop %v2853
    %v2858 = vmul.f32 1.0, %v2857
    %v2859 = vrcp.pop %v2854
    %v2860 = vmul.f32 1.0, %v2859
    %v2861 = vtanh.pop %v2842
    %v2862 = vmul.f32 %v2858, %v2694
    %v2863 = vmul.f32 %v2856, %v2861
    %v2864 = vadd.f32 %v2862, %v2863
    %v2865 = vtanh.pop %v2864
    %v2866 = vmul.f32 %v2860, %v2865
    %2867 = vmatprep.subr.mxu0 %v1868
    %2868 = vmatpush1.msra.mxu0 %v1867
    %2869 = vmatprep.subr.mxu0 %v1872
    %2870 = vmatpush1.msra.mxu0 %v1871
    %2871 = vmatprep.subr.mxu0 %v1876
    %2872 = vmatpush1.msra.mxu0 %v1875
    %2873 = vmatprep.subr.mxu0 %v1880
    %2874 = vmatpush1.msra.mxu0 %v1879
    %2875 = vmatprep.subr.mxu0 %v1884
    %2876 = vmatpush1.msra.mxu0 %v1883
    %2877 = vmatprep.subr.mxu0 %v1888
    %2878 = vmatpush1.msra.mxu0 %v1887
    %2879 = vmatprep.subr.mxu0 %v1892
    %2880 = vmatpush1.msra.mxu0 %v1891
    %2881 = vmatprep.subr.mxu0 %v1896
    %2882 = vmatpush1.msra.mxu0 %v1895
    %2883 = vmatprep.subr.mxu0 %v1900
    %2884 = vmatpush1.msra.mxu0 %v1899
    %2885 = vmatprep.subr.mxu0 %v1904
    %2886 = vmatpush1.msra.mxu0 %v1903
    %2887 = vmatprep.subr.mxu0 %v1908
    %2888 = vmatpush1.msra.mxu0 %v1907
    %2889 = vmatprep.subr.mxu0 %v1912
    %2890 = vmatpush1.msra.mxu0 %v1911
    %2891 = vmatprep.subr.mxu0 %v1916
    %2892 = vmatpush1.msra.mxu0 %v1915
    %2893 = vmatprep.subr.mxu0 %v1920
    %2894 = vmatpush1.msra.mxu0 %v1919
    %2895 = vmatprep.subr.mxu0 %v1924
    %2896 = vmatpush1.msra.mxu0 %v1923
    %2897 = vmatprep.subr.mxu0 %v1928
    %2898 = vmatpush1.msra.mxu0 %v1927
    %2899 = vmatprep.subr.mxu0 0.0
    %2900 = vmatpush1.msra.mxu0 0.0
    %2901 = vmatprep.subr.mxu0 0.0
    %2902 = vmatpush1.msra.mxu0 0.0
    %2903 = vmatprep.subr.mxu0 0.0
    %2904 = vmatpush1.msra.mxu0 0.0
    %2905 = vmatprep.subr.mxu0 0.0
    %2906 = vmatpush1.msra.mxu0 0.0
    %2907 = vmatprep.subr.mxu0 0.0
    %2908 = vmatpush1.msra.mxu0 0.0
    %2909 = vmatprep.subr.mxu0 0.0
    %2910 = vmatpush1.msra.mxu0 0.0
    %2911 = vmatprep.subr.mxu0 0.0
    %2912 = vmatpush1.msra.mxu0 0.0
    %2913 = vmatprep.subr.mxu0 0.0
    %2914 = vmatpush1.msra.mxu0 0.0
    %2915 = vmatprep.subr.mxu0 0.0
    %2916 = vmatpush1.msra.mxu0 0.0
    %2917 = vmatprep.subr.mxu0 0.0
    %2918 = vmatpush1.msra.mxu0 0.0
    %2919 = vmatprep.subr.mxu0 0.0
    %2920 = vmatpush1.msra.mxu0 0.0
    %2921 = vmatprep.subr.mxu0 0.0
    %2922 = vmatpush1.msra.mxu0 0.0
    %2923 = vmatprep.subr.mxu0 0.0
    %2924 = vmatpush1.msra.mxu0 0.0
    %2925 = vmatprep.subr.mxu0 0.0
    %2926 = vmatpush1.msra.mxu0 0.0
    %2927 = vmatprep.subr.mxu0 0.0
    %2928 = vmatpush1.msra.mxu0 0.0
    %2929 = vmatprep.subr.mxu0 0.0
    %2930 = vmatpush1.msra.mxu0 0.0
    %2931 = vmatprep.mubr.f32.mxu0 0.0
    %2932 = vmatmul.mubr.f32.gmra.mrb[0].mxu0 %v2866
    %v2933 = vpop.f32.mrb[0].mxu0
    %v2934 = vadd.f32 0.0, %v2933
    %v2935 = vpop.f32.mrb[0].mxu0
    %v2936 = vadd.f32 0.0, %v2935
    %2937 = vdwg.mxu0
    %2938 = vmatprep.subr.mxu0 %v1870
    %2939 = vmatpush1.msra.mxu0 %v1869
    %2940 = vmatprep.subr.mxu0 %v1874
    %2941 = vmatpush1.msra.mxu0 %v1873
    %2942 = vmatprep.subr.mxu0 %v1878
    %2943 = vmatpush1.msra.mxu0 %v1877
    %2944 = vmatprep.subr.mxu0 %v1882
    %2945 = vmatpush1.msra.mxu0 %v1881
    %2946 = vmatprep.subr.mxu0 %v1886
    %2947 = vmatpush1.msra.mxu0 %v1885
    %2948 = vmatprep.subr.mxu0 %v1890
    %2949 = vmatpush1.msra.mxu0 %v1889
    %2950 = vmatprep.subr.mxu0 %v1894
    %2951 = vmatpush1.msra.mxu0 %v1893
    %2952 = vmatprep.subr.mxu0 %v1898
    %2953 = vmatpush1.msra.mxu0 %v1897
    %2954 = vmatprep.subr.mxu0 %v1902
    %2955 = vmatpush1.msra.mxu0 %v1901
    %2956 = vmatprep.subr.mxu0 %v1906
    %2957 = vmatpush1.msra.mxu0 %v1905
    %2958 = vmatprep.subr.mxu0 %v1910
    %2959 = vmatpush1.msra.mxu0 %v1909
    %2960 = vmatprep.subr.mxu0 %v1914
    %2961 = vmatpush1.msra.mxu0 %v1913
    %2962 = vmatprep.subr.mxu0 %v1918
    %2963 = vmatpush1.msra.mxu0 %v1917
    %2964 = vmatprep.subr.mxu0 %v1922
    %2965 = vmatpush1.msra.mxu0 %v1921
    %2966 = vmatprep.subr.mxu0 %v1926
    %2967 = vmatpush1.msra.mxu0 %v1925
    %2968 = vmatprep.subr.mxu0 %v1930
    %2969 = vmatpush1.msra.mxu0 %v1929
    %2970 = vmatprep.subr.mxu0 0.0
    %2971 = vmatpush1.msra.mxu0 0.0
    %2972 = vmatprep.subr.mxu0 0.0
    %2973 = vmatpush1.msra.mxu0 0.0
    %2974 = vmatprep.subr.mxu0 0.0
    %2975 = vmatpush1.msra.mxu0 0.0
    %2976 = vmatprep.subr.mxu0 0.0
    %2977 = vmatpush1.msra.mxu0 0.0
    %2978 = vmatprep.subr.mxu0 0.0
    %2979 = vmatpush1.msra.mxu0 0.0
    %2980 = vmatprep.subr.mxu0 0.0
    %2981 = vmatpush1.msra.mxu0 0.0
    %2982 = vmatprep.subr.mxu0 0.0
    %2983 = vmatpush1.msra.mxu0 0.0
    %2984 = vmatprep.subr.mxu0 0.0
    %2985 = vmatpush1.msra.mxu0 0.0
    %2986 = vmatprep.subr.mxu0 0.0
    %2987 = vmatpush1.msra.mxu0 0.0
    %2988 = vmatprep.subr.mxu0 0.0
    %2989 = vmatpush1.msra.mxu0 0.0
    %2990 = vmatprep.subr.mxu0 0.0
    %2991 = vmatpush1.msra.mxu0 0.0
    %2992 = vmatprep.subr.mxu0 0.0
    %2993 = vmatpush1.msra.mxu0 0.0
    %2994 = vmatprep.subr.mxu0 0.0
    %2995 = vmatpush1.msra.mxu0 0.0
    %2996 = vmatprep.subr.mxu0 0.0
    %2997 = vmatpush1.msra.mxu0 0.0
    %2998 = vmatprep.subr.mxu0 0.0
    %2999 = vmatpush1.msra.mxu0 0.0
    %3000 = vmatprep.subr.mxu0 0.0
    %3001 = vmatpush1.msra.mxu0 0.0
    %3002 = vmatprep.mubr.f32.mxu0 0.0
    %3003 = vmatmul.mubr.f32.gmra.mrb[0].mxu0 %v2866
    %v3004 = vpop.f32.mrb[0].mxu0
    %v3005 = vadd.f32 0.0, %v3004
    %v3006 = vpop.f32.mrb[0].mxu0
    %v3007 = vadd.f32 0.0, %v3006
    %3008 = vdwg.mxu0
    %v3009 = vadd.f32 %v2052, %v2934
    %v3010 = vadd.f32 %v2054, %v2936
    %v3011 = vadd.f32 %v2165, %v3005
    %v3012 = vadd.f32 %v2167, %v3007
    %v3013 = vxor.u32 %v3009, 2147483648
    %v3014 = vxor.u32 %v3010, 2147483648
    %v3015 = vxor.u32 %v3011, 2147483648
    %v3016 = vmul.f32 %v3013, 1.442695
    %v3017 = vpow.pop %v3016
    %v3018 = vmul.f32 %v3014, 1.442695
    %v3019 = vpow.pop %v3018
    %v3020 = vmul.f32 %v3015, 1.442695
    %v3021 = vpow.pop %v3020
    %v3022 = vadd.f32 %v3017, 1.0
    %v3023 = vadd.f32 %v3019, 1.0
    %v3024 = vadd.f32 %v3021, 1.0
    %v3025 = vrcp.pop %v3022
    %v3026 = vmul.f32 1.0, %v3025
    %v3027 = vrcp.pop %v3023
    %v3028 = vmul.f32 1.0, %v3027
    %v3029 = vrcp.pop %v3024
    %v3030 = vmul.f32 1.0, %v3029
    %v3031 = vtanh.pop %v3012
    %v3032 = vmul.f32 %v3028, %v2864
    %v3033 = vmul.f32 %v3026, %v3031
    %v3034 = vadd.f32 %v3032, %v3033
    %v3035 = vtanh.pop %v3034
    %v3036 = vmul.f32 %v3030, %v3035
    %3037 = vmatprep.subr.mxu0 %v1868
    %3038 = vmatpush1.msra.mxu0 %v1867
    %3039 = vmatprep.subr.mxu0 %v1872
    %3040 = vmatpush1.msra.mxu0 %v1871
    %3041 = vmatprep.subr.mxu0 %v1876
    %3042 = vmatpush1.msra.mxu0 %v1875
    %3043 = vmatprep.subr.mxu0 %v1880
    %3044 = vmatpush1.msra.mxu0 %v1879
    %3045 = vmatprep.subr.mxu0 %v1884
    %3046 = vmatpush1.msra.mxu0 %v1883
    %3047 = vmatprep.subr.mxu0 %v1888
    %3048 = vmatpush1.msra.mxu0 %v1887
    %3049 = vmatprep.subr.mxu0 %v1892
    %3050 = vmatpush1.msra.mxu0 %v1891
    %3051 = vmatprep.subr.mxu0 %v1896
    %3052 = vmatpush1.msra.mxu0 %v1895
    %3053 = vmatprep.subr.mxu0 %v1900
    %3054 = vmatpush1.msra.mxu0 %v1899
    %3055 = vmatprep.subr.mxu0 %v1904
    %3056 = vmatpush1.msra.mxu0 %v1903
    %3057 = vmatprep.subr.mxu0 %v1908
    %3058 = vmatpush1.msra.mxu0 %v1907
    %3059 = vmatprep.subr.mxu0 %v1912
    %3060 = vmatpush1.msra.mxu0 %v1911
    %3061 = vmatprep.subr.mxu0 %v1916
    %3062 = vmatpush1.msra.mxu0 %v1915
    %3063 = vmatprep.subr.mxu0 %v1920
    %3064 = vmatpush1.msra.mxu0 %v1919
    %3065 = vmatprep.subr.mxu0 %v1924
    %3066 = vmatpush1.msra.mxu0 %v1923
    %3067 = vmatprep.subr.mxu0 %v1928
    %3068 = vmatpush1.msra.mxu0 %v1927
    %3069 = vmatprep.subr.mxu0 0.0
    %3070 = vmatpush1.msra.mxu0 0.0
    %3071 = vmatprep.subr.mxu0 0.0
    %3072 = vmatpush1.msra.mxu0 0.0
    %3073 = vmatprep.subr.mxu0 0.0
    %3074 = vmatpush1.msra.mxu0 0.0
    %3075 = vmatprep.subr.mxu0 0.0
    %3076 = vmatpush1.msra.mxu0 0.0
    %3077 = vmatprep.subr.mxu0 0.0
    %3078 = vmatpush1.msra.mxu0 0.0
    %3079 = vmatprep.subr.mxu0 0.0
    %3080 = vmatpush1.msra.mxu0 0.0
    %3081 = vmatprep.subr.mxu0 0.0
    %3082 = vmatpush1.msra.mxu0 0.0
    %3083 = vmatprep.subr.mxu0 0.0
    %3084 = vmatpush1.msra.mxu0 0.0
    %3085 = vmatprep.subr.mxu0 0.0
    %3086 = vmatpush1.msra.mxu0 0.0
    %3087 = vmatprep.subr.mxu0 0.0
    %3088 = vmatpush1.msra.mxu0 0.0
    %3089 = vmatprep.subr.mxu0 0.0
    %3090 = vmatpush1.msra.mxu0 0.0
    %3091 = vmatprep.subr.mxu0 0.0
    %3092 = vmatpush1.msra.mxu0 0.0
    %3093 = vmatprep.subr.mxu0 0.0
    %3094 = vmatpush1.msra.mxu0 0.0
    %3095 = vmatprep.subr.mxu0 0.0
    %3096 = vmatpush1.msra.mxu0 0.0
    %3097 = vmatprep.subr.mxu0 0.0
    %3098 = vmatpush1.msra.mxu0 0.0
    %3099 = vmatprep.subr.mxu0 0.0
    %3100 = vmatpush1.msra.mxu0 0.0
    %3101 = vmatprep.mubr.f32.mxu0 0.0
    %3102 = vmatmul.mubr.f32.gmra.mrb[0].mxu0 %v3036
    %v3103 = vpop.f32.mrb[0].mxu0
    %v3104 = vadd.f32 0.0, %v3103
    %v3105 = vpop.f32.mrb[0].mxu0
    %v3106 = vadd.f32 0.0, %v3105
    %3107 = vdwg.mxu0
    %3108 = vmatprep.subr.mxu0 %v1870
    %3109 = vmatpush1.msra.mxu0 %v1869
    %3110 = vmatprep.subr.mxu0 %v1874
    %3111 = vmatpush1.msra.mxu0 %v1873
    %3112 = vmatprep.subr.mxu0 %v1878
    %3113 = vmatpush1.msra.mxu0 %v1877
    %3114 = vmatprep.subr.mxu0 %v1882
    %3115 = vmatpush1.msra.mxu0 %v1881
    %3116 = vmatprep.subr.mxu0 %v1886
    %3117 = vmatpush1.msra.mxu0 %v1885
    %3118 = vmatprep.subr.mxu0 %v1890
    %3119 = vmatpush1.msra.mxu0 %v1889
    %3120 = vmatprep.subr.mxu0 %v1894
    %3121 = vmatpush1.msra.mxu0 %v1893
    %3122 = vmatprep.subr.mxu0 %v1898
    %3123 = vmatpush1.msra.mxu0 %v1897
    %3124 = vmatprep.subr.mxu0 %v1902
    %3125 = vmatpush1.msra.mxu0 %v1901
    %3126 = vmatprep.subr.mxu0 %v1906
    %3127 = vmatpush1.msra.mxu0 %v1905
    %3128 = vmatprep.subr.mxu0 %v1910
    %3129 = vmatpush1.msra.mxu0 %v1909
    %3130 = vmatprep.subr.mxu0 %v1914
    %3131 = vmatpush1.msra.mxu0 %v1913
    %3132 = vmatprep.subr.mxu0 %v1918
    %3133 = vmatpush1.msra.mxu0 %v1917
    %3134 = vmatprep.subr.mxu0 %v1922
    %3135 = vmatpush1.msra.mxu0 %v1921
    %3136 = vmatprep.subr.mxu0 %v1926
    %3137 = vmatpush1.msra.mxu0 %v1925
    %3138 = vmatprep.subr.mxu0 %v1930
    %3139 = vmatpush1.msra.mxu0 %v1929
    %3140 = vmatprep.subr.mxu0 0.0
    %3141 = vmatpush1.msra.mxu0 0.0
    %3142 = vmatprep.subr.mxu0 0.0
    %3143 = vmatpush1.msra.mxu0 0.0
    %3144 = vmatprep.subr.mxu0 0.0
    %3145 = vmatpush1.msra.mxu0 0.0
    %3146 = vmatprep.subr.mxu0 0.0
    %3147 = vmatpush1.msra.mxu0 0.0
    %3148 = vmatprep.subr.mxu0 0.0
    %3149 = vmatpush1.msra.mxu0 0.0
    %3150 = vmatprep.subr.mxu0 0.0
    %3151 = vmatpush1.msra.mxu0 0.0
    %3152 = vmatprep.subr.mxu0 0.0
    %3153 = vmatpush1.msra.mxu0 0.0
    %3154 = vmatprep.subr.mxu0 0.0
    %3155 = vmatpush1.msra.mxu0 0.0
    %3156 = vmatprep.subr.mxu0 0.0
    %3157 = vmatpush1.msra.mxu0 0.0
    %3158 = vmatprep.subr.mxu0 0.0
    %3159 = vmatpush1.msra.mxu0 0.0
    %3160 = vmatprep.subr.mxu0 0.0
    %3161 = vmatpush1.msra.mxu0 0.0
    %3162 = vmatprep.subr.mxu0 0.0
    %3163 = vmatpush1.msra.mxu0 0.0
    %3164 = vmatprep.subr.mxu0 0.0
    %3165 = vmatpush1.msra.mxu0 0.0
    %3166 = vmatprep.subr.mxu0 0.0
    %3167 = vmatpush1.msra.mxu0 0.0
    %3168 = vmatprep.subr.mxu0 0.0
    %3169 = vmatpush1.msra.mxu0 0.0
    %3170 = vmatprep.subr.mxu0 0.0
    %3171 = vmatpush1.msra.mxu0 0.0
    %3172 = vmatprep.mubr.f32.mxu0 0.0
    %3173 = vmatmul.mubr.f32.gmra.mrb[0].mxu0 %v3036
    %v3174 = vpop.f32.mrb[0].mxu0
    %v3175 = vadd.f32 0.0, %v3174
    %v3176 = vpop.f32.mrb[0].mxu0
    %v3177 = vadd.f32 0.0, %v3176
    %3178 = vdwg.mxu0
    %v3179 = vadd.f32 %v2058, %v3104
    %v3180 = vadd.f32 %v2060, %v3106
    %v3181 = vadd.f32 %v2171, %v3175
    %v3182 = vadd.f32 %v2173, %v3177
    %v3183 = vxor.u32 %v3179, 2147483648
    %v3184 = vxor.u32 %v3180, 2147483648
    %v3185 = vxor.u32 %v3181, 2147483648
    %v3186 = vmul.f32 %v3183, 1.442695
    %v3187 = vpow.pop %v3186
    %v3188 = vmul.f32 %v3184, 1.442695
    %v3189 = vpow.pop %v3188
    %v3190 = vmul.f32 %v3185, 1.442695
    %v3191 = vpow.pop %v3190
    %v3192 = vadd.f32 %v3187, 1.0
    %v3193 = vadd.f32 %v3189, 1.0
    %v3194 = vadd.f32 %v3191, 1.0
    %v3195 = vrcp.pop %v3192
    %v3196 = vmul.f32 1.0, %v3195
    %v3197 = vrcp.pop %v3193
    %v3198 = vmul.f32 1.0, %v3197
    %v3199 = vrcp.pop %v3194
    %v3200 = vmul.f32 1.0, %v3199
    %v3201 = vtanh.pop %v3182
    %v3202 = vmul.f32 %v3198, %v3034
    %v3203 = vmul.f32 %v3196, %v3201
    %v3204 = vadd.f32 %v3202, %v3203
    %v3205 = vtanh.pop %v3204
    %v3206 = vmul.f32 %v3200, %v3205
    %3207 = vmatprep.subr.mxu0 %v1868
    %3208 = vmatpush1.msra.mxu0 %v1867
    %3209 = vmatprep.subr.mxu0 %v1872
    %3210 = vmatpush1.msra.mxu0 %v1871
    %3211 = vmatprep.subr.mxu0 %v1876
    %3212 = vmatpush1.msra.mxu0 %v1875
    %3213 = vmatprep.subr.mxu0 %v1880
    %3214 = vmatpush1.msra.mxu0 %v1879
    %3215 = vmatprep.subr.mxu0 %v1884
    %3216 = vmatpush1.msra.mxu0 %v1883
    %3217 = vmatprep.subr.mxu0 %v1888
    %3218 = vmatpush1.msra.mxu0 %v1887
    %3219 = vmatprep.subr.mxu0 %v1892
    %3220 = vmatpush1.msra.mxu0 %v1891
    %3221 = vmatprep.subr.mxu0 %v1896
    %3222 = vmatpush1.msra.mxu0 %v1895
    %3223 = vmatprep.subr.mxu0 %v1900
    %3224 = vmatpush1.msra.mxu0 %v1899
    %3225 = vmatprep.subr.mxu0 %v1904
    %3226 = vmatpush1.msra.mxu0 %v1903
    %3227 = vmatprep.subr.mxu0 %v1908
    %3228 = vmatpush1.msra.mxu0 %v1907
    %3229 = vmatprep.subr.mxu0 %v1912
    %3230 = vmatpush1.msra.mxu0 %v1911
    %3231 = vmatprep.subr.mxu0 %v1916
    %3232 = vmatpush1.msra.mxu0 %v1915
    %3233 = vmatprep.subr.mxu0 %v1920
    %3234 = vmatpush1.msra.mxu0 %v1919
    %3235 = vmatprep.subr.mxu0 %v1924
    %3236 = vmatpush1.msra.mxu0 %v1923
    %3237 = vmatprep.subr.mxu0 %v1928
    %3238 = vmatpush1.msra.mxu0 %v1927
    %3239 = vmatprep.subr.mxu0 0.0
    %3240 = vmatpush1.msra.mxu0 0.0
    %3241 = vmatprep.subr.mxu0 0.0
    %3242 = vmatpush1.msra.mxu0 0.0
    %3243 = vmatprep.subr.mxu0 0.0
    %3244 = vmatpush1.msra.mxu0 0.0
    %3245 = vmatprep.subr.mxu0 0.0
    %3246 = vmatpush1.msra.mxu0 0.0
    %3247 = vmatprep.subr.mxu0 0.0
    %3248 = vmatpush1.msra.mxu0 0.0
    %3249 = vmatprep.subr.mxu0 0.0
    %3250 = vmatpush1.msra.mxu0 0.0
    %3251 = vmatprep.subr.mxu0 0.0
    %3252 = vmatpush1.msra.mxu0 0.0
    %3253 = vmatprep.subr.mxu0 0.0
    %3254 = vmatpush1.msra.mxu0 0.0
    %3255 = vmatprep.subr.mxu0 0.0
    %3256 = vmatpush1.msra.mxu0 0.0
    %3257 = vmatprep.subr.mxu0 0.0
    %3258 = vmatpush1.msra.mxu0 0.0
    %3259 = vmatprep.subr.mxu0 0.0
    %3260 = vmatpush1.msra.mxu0 0.0
    %3261 = vmatprep.subr.mxu0 0.0
    %3262 = vmatpush1.msra.mxu0 0.0
    %3263 = vmatprep.subr.mxu0 0.0
    %3264 = vmatpush1.msra.mxu0 0.0
    %3265 = vmatprep.subr.mxu0 0.0
    %3266 = vmatpush1.msra.mxu0 0.0
    %3267 = vmatprep.subr.mxu0 0.0
    %3268 = vmatpush1.msra.mxu0 0.0
    %3269 = vmatprep.subr.mxu0 0.0
    %3270 = vmatpush1.msra.mxu0 0.0
    %3271 = vmatprep.mubr.f32.mxu0 0.0
    %3272 = vmatmul.mubr.f32.gmra.mrb[0].mxu0 %v3206
    %v3273 = vpop.f32.mrb[0].mxu0
    %v3274 = vadd.f32 0.0, %v3273
    %v3275 = vpop.f32.mrb[0].mxu0
    %v3276 = vadd.f32 0.0, %v3275
    %3277 = vdwg.mxu0
    %3278 = vmatprep.subr.mxu0 %v1870
    %3279 = vmatpush1.msra.mxu0 %v1869
    %3280 = vmatprep.subr.mxu0 %v1874
    %3281 = vmatpush1.msra.mxu0 %v1873
    %3282 = vmatprep.subr.mxu0 %v1878
    %3283 = vmatpush1.msra.mxu0 %v1877
    %3284 = vmatprep.subr.mxu0 %v1882
    %3285 = vmatpush1.msra.mxu0 %v1881
    %3286 = vmatprep.subr.mxu0 %v1886
    %3287 = vmatpush1.msra.mxu0 %v1885
    %3288 = vmatprep.subr.mxu0 %v1890
    %3289 = vmatpush1.msra.mxu0 %v1889
    %3290 = vmatprep.subr.mxu0 %v1894
    %3291 = vmatpush1.msra.mxu0 %v1893
    %3292 = vmatprep.subr.mxu0 %v1898
    %3293 = vmatpush1.msra.mxu0 %v1897
    %3294 = vmatprep.subr.mxu0 %v1902
    %3295 = vmatpush1.msra.mxu0 %v1901
    %3296 = vmatprep.subr.mxu0 %v1906
    %3297 = vmatpush1.msra.mxu0 %v1905
    %3298 = vmatprep.subr.mxu0 %v1910
    %3299 = vmatpush1.msra.mxu0 %v1909
    %3300 = vmatprep.subr.mxu0 %v1914
    %3301 = vmatpush1.msra.mxu0 %v1913
    %3302 = vmatprep.subr.mxu0 %v1918
    %3303 = vmatpush1.msra.mxu0 %v1917
    %3304 = vmatprep.subr.mxu0 %v1922
    %3305 = vmatpush1.msra.mxu0 %v1921
    %3306 = vmatprep.subr.mxu0 %v1926
    %3307 = vmatpush1.msra.mxu0 %v1925
    %3308 = vmatprep.subr.mxu0 %v1930
    %3309 = vmatpush1.msra.mxu0 %v1929
    %3310 = vmatprep.subr.mxu0 0.0
    %3311 = vmatpush1.msra.mxu0 0.0
    %3312 = vmatprep.subr.mxu0 0.0
    %3313 = vmatpush1.msra.mxu0 0.0
    %3314 = vmatprep.subr.mxu0 0.0
    %3315 = vmatpush1.msra.mxu0 0.0
    %3316 = vmatprep.subr.mxu0 0.0
    %3317 = vmatpush1.msra.mxu0 0.0
    %3318 = vmatprep.subr.mxu0 0.0
    %3319 = vmatpush1.msra.mxu0 0.0
    %3320 = vmatprep.subr.mxu0 0.0
    %3321 = vmatpush1.msra.mxu0 0.0
    %3322 = vmatprep.subr.mxu0 0.0
    %3323 = vmatpush1.msra.mxu0 0.0
    %3324 = vmatprep.subr.mxu0 0.0
    %3325 = vmatpush1.msra.mxu0 0.0
    %3326 = vmatprep.subr.mxu0 0.0
    %3327 = vmatpush1.msra.mxu0 0.0
    %3328 = vmatprep.subr.mxu0 0.0
    %3329 = vmatpush1.msra.mxu0 0.0
    %3330 = vmatprep.subr.mxu0 0.0
    %3331 = vmatpush1.msra.mxu0 0.0
    %3332 = vmatprep.subr.mxu0 0.0
    %3333 = vmatpush1.msra.mxu0 0.0
    %3334 = vmatprep.subr.mxu0 0.0
    %3335 = vmatpush1.msra.mxu0 0.0
    %3336 = vmatprep.subr.mxu0 0.0
    %3337 = vmatpush1.msra.mxu0 0.0
    %3338 = vmatprep.subr.mxu0 0.0
    %3339 = vmatpush1.msra.mxu0 0.0
    %3340 = vmatprep.subr.mxu0 0.0
    %3341 = vmatpush1.msra.mxu0 0.0
    %3342 = vmatprep.mubr.f32.mxu0 0.0
    %3343 = vmatmul.mubr.f32.gmra.mrb[0].mxu0 %v3206
    %v3344 = vpop.f32.mrb[0].mxu0
    %v3345 = vadd.f32 0.0, %v3344
    %v3346 = vpop.f32.mrb[0].mxu0
    %v3347 = vadd.f32 0.0, %v3346
    %3348 = vdwg.mxu0
    %v3349 = vadd.f32 %v2064, %v3274
    %v3350 = vadd.f32 %v2066, %v3276
    %v3351 = vadd.f32 %v2177, %v3345
    %v3352 = vadd.f32 %v2179, %v3347
    %v3353 = vxor.u32 %v3349, 2147483648
    %v3354 = vxor.u32 %v3350, 2147483648
    %v3355 = vxor.u32 %v3351, 2147483648
    %v3356 = vmul.f32 %v3353, 1.442695
    %v3357 = vpow.pop %v3356
    %v3358 = vmul.f32 %v3354, 1.442695
    %v3359 = vpow.pop %v3358
    %v3360 = vmul.f32 %v3355, 1.442695
    %v3361 = vpow.pop %v3360
    %v3362 = vadd.f32 %v3357, 1.0
    %v3363 = vadd.f32 %v3359, 1.0
    %v3364 = vadd.f32 %v3361, 1.0
    %v3365 = vrcp.pop %v3362
    %v3366 = vmul.f32 1.0, %v3365
    %v3367 = vrcp.pop %v3363
    %v3368 = vmul.f32 1.0, %v3367
    %v3369 = vrcp.pop %v3364
    %v3370 = vmul.f32 1.0, %v3369
    %v3371 = vtanh.pop %v3352
    %v3372 = vmul.f32 %v3368, %v3204
    %v3373 = vmul.f32 %v3366, %v3371
    %v3374 = vadd.f32 %v3372, %v3373
    %v3375 = vtanh.pop %v3374
    %v3376 = vmul.f32 %v3370, %v3375
    %3377 = vmatprep.subr.mxu0 %v1868
    %3378 = vmatpush1.msra.mxu0 %v1867
    %3379 = vmatprep.subr.mxu0 %v1872
    %3380 = vmatpush1.msra.mxu0 %v1871
    %3381 = vmatprep.subr.mxu0 %v1876
    %3382 = vmatpush1.msra.mxu0 %v1875
    %3383 = vmatprep.subr.mxu0 %v1880
    %3384 = vmatpush1.msra.mxu0 %v1879
    %3385 = vmatprep.subr.mxu0 %v1884
    %3386 = vmatpush1.msra.mxu0 %v1883
    %3387 = vmatprep.subr.mxu0 %v1888
    %3388 = vmatpush1.msra.mxu0 %v1887
    %3389 = vmatprep.subr.mxu0 %v1892
    %3390 = vmatpush1.msra.mxu0 %v1891
    %3391 = vmatprep.subr.mxu0 %v1896
    %3392 = vmatpush1.msra.mxu0 %v1895
    %3393 = vmatprep.subr.mxu0 %v1900
    %3394 = vmatpush1.msra.mxu0 %v1899
    %3395 = vmatprep.subr.mxu0 %v1904
    %3396 = vmatpush1.msra.mxu0 %v1903
    %3397 = vmatprep.subr.mxu0 %v1908
    %3398 = vmatpush1.msra.mxu0 %v1907
    %3399 = vmatprep.subr.mxu0 %v1912
    %3400 = vmatpush1.msra.mxu0 %v1911
    %3401 = vmatprep.subr.mxu0 %v1916
    %3402 = vmatpush1.msra.mxu0 %v1915
    %3403 = vmatprep.subr.mxu0 %v1920
    %3404 = vmatpush1.msra.mxu0 %v1919
    %3405 = vmatprep.subr.mxu0 %v1924
    %3406 = vmatpush1.msra.mxu0 %v1923
    %3407 = vmatprep.subr.mxu0 %v1928
    %3408 = vmatpush1.msra.mxu0 %v1927
    %3409 = vmatprep.subr.mxu0 0.0
    %3410 = vmatpush1.msra.mxu0 0.0
    %3411 = vmatprep.subr.mxu0 0.0
    %3412 = vmatpush1.msra.mxu0 0.0
    %3413 = vmatprep.subr.mxu0 0.0
    %3414 = vmatpush1.msra.mxu0 0.0
    %3415 = vmatprep.subr.mxu0 0.0
    %3416 = vmatpush1.msra.mxu0 0.0
    %3417 = vmatprep.subr.mxu0 0.0
    %3418 = vmatpush1.msra.mxu0 0.0
    %3419 = vmatprep.subr.mxu0 0.0
    %3420 = vmatpush1.msra.mxu0 0.0
    %3421 = vmatprep.subr.mxu0 0.0
    %3422 = vmatpush1.msra.mxu0 0.0
    %3423 = vmatprep.subr.mxu0 0.0
    %3424 = vmatpush1.msra.mxu0 0.0
    %3425 = vmatprep.subr.mxu0 0.0
    %3426 = vmatpush1.msra.mxu0 0.0
    %3427 = vmatprep.subr.mxu0 0.0
    %3428 = vmatpush1.msra.mxu0 0.0
    %3429 = vmatprep.subr.mxu0 0.0
    %3430 = vmatpush1.msra.mxu0 0.0
    %3431 = vmatprep.subr.mxu0 0.0
    %3432 = vmatpush1.msra.mxu0 0.0
    %3433 = vmatprep.subr.mxu0 0.0
    %3434 = vmatpush1.msra.mxu0 0.0
    %3435 = vmatprep.subr.mxu0 0.0
    %3436 = vmatpush1.msra.mxu0 0.0
    %3437 = vmatprep.subr.mxu0 0.0
    %3438 = vmatpush1.msra.mxu0 0.0
    %3439 = vmatprep.subr.mxu0 0.0
    %3440 = vmatpush1.msra.mxu0 0.0
    %3441 = vmatprep.mubr.f32.mxu0 0.0
    %3442 = vmatmul.mubr.f32.gmra.mrb[0].mxu0 %v3376
    %v3443 = vpop.f32.mrb[0].mxu0
    %v3444 = vadd.f32 0.0, %v3443
    %v3445 = vpop.f32.mrb[0].mxu0
    %v3446 = vadd.f32 0.0, %v3445
    %3447 = vdwg.mxu0
    %3448 = vmatprep.subr.mxu0 %v1870
    %3449 = vmatpush1.msra.mxu0 %v1869
    %3450 = vmatprep.subr.mxu0 %v1874
    %3451 = vmatpush1.msra.mxu0 %v1873
    %3452 = vmatprep.subr.mxu0 %v1878
    %3453 = vmatpush1.msra.mxu0 %v1877
    %3454 = vmatprep.subr.mxu0 %v1882
    %3455 = vmatpush1.msra.mxu0 %v1881
    %3456 = vmatprep.subr.mxu0 %v1886
    %3457 = vmatpush1.msra.mxu0 %v1885
    %3458 = vmatprep.subr.mxu0 %v1890
    %3459 = vmatpush1.msra.mxu0 %v1889
    %3460 = vmatprep.subr.mxu0 %v1894
    %3461 = vmatpush1.msra.mxu0 %v1893
    %3462 = vmatprep.subr.mxu0 %v1898
    %3463 = vmatpush1.msra.mxu0 %v1897
    %3464 = vmatprep.subr.mxu0 %v1902
    %3465 = vmatpush1.msra.mxu0 %v1901
    %3466 = vmatprep.subr.mxu0 %v1906
    %3467 = vmatpush1.msra.mxu0 %v1905
    %3468 = vmatprep.subr.mxu0 %v1910
    %3469 = vmatpush1.msra.mxu0 %v1909
    %3470 = vmatprep.subr.mxu0 %v1914
    %3471 = vmatpush1.msra.mxu0 %v1913
    %3472 = vmatprep.subr.mxu0 %v1918
    %3473 = vmatpush1.msra.mxu0 %v1917
    %3474 = vmatprep.subr.mxu0 %v1922
    %3475 = vmatpush1.msra.mxu0 %v1921
    %3476 = vmatprep.subr.mxu0 %v1926
    %3477 = vmatpush1.msra.mxu0 %v1925
    %3478 = vmatprep.subr.mxu0 %v1930
    %3479 = vmatpush1.msra.mxu0 %v1929
    %3480 = vmatprep.subr.mxu0 0.0
    %3481 = vmatpush1.msra.mxu0 0.0
    %3482 = vmatprep.subr.mxu0 0.0
    %3483 = vmatpush1.msra.mxu0 0.0
    %3484 = vmatprep.subr.mxu0 0.0
    %3485 = vmatpush1.msra.mxu0 0.0
    %3486 = vmatprep.subr.mxu0 0.0
    %3487 = vmatpush1.msra.mxu0 0.0
    %3488 = vmatprep.subr.mxu0 0.0
    %3489 = vmatpush1.msra.mxu0 0.0
    %3490 = vmatprep.subr.mxu0 0.0
    %3491 = vmatpush1.msra.mxu0 0.0
    %3492 = vmatprep.subr.mxu0 0.0
    %3493 = vmatpush1.msra.mxu0 0.0
    %3494 = vmatprep.subr.mxu0 0.0
    %3495 = vmatpush1.msra.mxu0 0.0
    %3496 = vmatprep.subr.mxu0 0.0
    %3497 = vmatpush1.msra.mxu0 0.0
    %3498 = vmatprep.subr.mxu0 0.0
    %3499 = vmatpush1.msra.mxu0 0.0
    %3500 = vmatprep.subr.mxu0 0.0
    %3501 = vmatpush1.msra.mxu0 0.0
    %3502 = vmatprep.subr.mxu0 0.0
    %3503 = vmatpush1.msra.mxu0 0.0
    %3504 = vmatprep.subr.mxu0 0.0
    %3505 = vmatpush1.msra.mxu0 0.0
    %3506 = vmatprep.subr.mxu0 0.0
    %3507 = vmatpush1.msra.mxu0 0.0
    %3508 = vmatprep.subr.mxu0 0.0
    %3509 = vmatpush1.msra.mxu0 0.0
    %3510 = vmatprep.subr.mxu0 0.0
    %3511 = vmatpush1.msra.mxu0 0.0
    %3512 = vmatprep.mubr.f32.mxu0 0.0
    %3513 = vmatmul.mubr.f32.gmra.mrb[0].mxu0 %v3376
    %v3514 = vpop.f32.mrb[0].mxu0
    %v3515 = vadd.f32 0.0, %v3514
    %v3516 = vpop.f32.mrb[0].mxu0
    %v3517 = vadd.f32 0.0, %v3516
    %3518 = vdwg.mxu0
    %v3519 = vadd.f32 %v2070, %v3444
    %v3520 = vadd.f32 %v2072, %v3446
    %v3521 = vadd.f32 %v2183, %v3515
    %v3522 = vadd.f32 %v2185, %v3517
    %v3523 = vxor.u32 %v3519, 2147483648
    %v3524 = vxor.u32 %v3520, 2147483648
    %v3525 = vxor.u32 %v3521, 2147483648
    %v3526 = vmul.f32 %v3523, 1.442695
    %v3527 = vpow.pop %v3526
    %v3528 = vmul.f32 %v3524, 1.442695
    %v3529 = vpow.pop %v3528
    %v3530 = vmul.f32 %v3525, 1.442695
    %v3531 = vpow.pop %v3530
    %v3532 = vadd.f32 %v3527, 1.0
    %v3533 = vadd.f32 %v3529, 1.0
    %v3534 = vadd.f32 %v3531, 1.0
    %v3535 = vrcp.pop %v3532
    %v3536 = vmul.f32 1.0, %v3535
    %v3537 = vrcp.pop %v3533
    %v3538 = vmul.f32 1.0, %v3537
    %v3539 = vrcp.pop %v3534
    %v3540 = vmul.f32 1.0, %v3539
    %v3541 = vtanh.pop %v3522
    %v3542 = vmul.f32 %v3538, %v3374
    %v3543 = vmul.f32 %v3536, %v3541
    %v3544 = vadd.f32 %v3542, %v3543
    %v3545 = vtanh.pop %v3544
    %v3546 = vmul.f32 %v3540, %v3545
    %v3547 = vld [vmem:[%s7] sm:$0x1]
    %v3549 = vlaneseq
    %v3550 = vshrl.u32 %v3549, 7
    %v3551 = vsub.s32 0, %v3550
    %v3552 = vrot.slane %v3547, %v3551
    %v3554 = vmul.f32 %v3546, %v3552
    %3555 = vadd.xlane.f32.xlu0 %v3554
    %v3556 = vpop.xlane.xlu0 %3555
    %v3557 = vld [vmem:[#allocation3] sm:$0x1]
    %v3559 = vlaneseq
    %v3560 = vshrl.u32 %v3559, 7
    %v3561 = vsub.s32 0, %v3560
    %v3562 = vrot.slane %v3557, %v3561
    %v3564 = vadd.f32 %v3556, %v3562
    %vm3565 = vcmask 7168
    %3566 = vst.msk [vmem:[%s9] sm:$0xff] %vm3565, %v3564
    // Predicated region
    $region50: #{lstm_forward.1} parent=1 // pred_check
      _
    $region51: #{lstm_forward.1} parent=1 // pred_check_branch
      %3568 = sbr.rel (0) target = $region53
    $region52: #{lstm_forward.1} parent=1 // pred_region
      _
    $region53: #{lstm_forward.1} parent=1 // pred_fallthru
      _
    // Predicated region
    $region54: #{lstm_forward.1} parent=1 // pred_check
      _
    $region55: #{lstm_forward.1} parent=1 // pred_check_branch
      %3570 = sbr.rel (0) target = $region57
    $region56: #{lstm_forward.1} parent=1 // pred_region
      _
    $region57: #{lstm_forward.1} parent=1 // pred_fallthru
      _
    %3571 = vsyncpa [#allocation5], 1
    %3572 = vsyncpa [#allocation7], 1

</llo_original>
